<compile_context>
chip_gen: v5e
topology: v5e:2x2
jax: 0.10.0
libtpu: 0.0.40
codegen_flags: <defaults>
</compile_context>

<pallas_src>
import functools
import math

import jax
import jax.numpy as jnp
from jax import lax
from jax.experimental import pallas as pl
from jax.experimental.pallas import tpu as pltpu


_NT = (((1,), (1,)), ((), ()))   # (T, d) x (K, d) -> (T, K)
_GELU_C = math.sqrt(2.0 / math.pi)


# ----------------------------- in-kernel helpers -----------------------------

def _layernorm(h, g, b, eps=1e-5):
    mu = jnp.mean(h, axis=-1, keepdims=True)
    d = h - mu
    var = jnp.mean(d * d, axis=-1, keepdims=True)
    return d * (lax.rsqrt(var + eps) * g) + b


def _softmax(s):
    m = jnp.max(s, axis=-1, keepdims=True)
    e = jnp.exp(s - m)
    return e * pl.reciprocal(jnp.sum(e, axis=-1, keepdims=True), approx=True)


def _gelu(x):
    # tanh-form GELU: tanh runs on the EUP slot (cheap even on v5e's f32-only
    # VPU).  ~1e-3 absolute deviation from PyTorch's exact-erf F.gelu.
    return 0.5 * x * (1.0 + jnp.tanh(_GELU_C * (x + 0.044715 * (x * x * x))))


def _mha(q_all, k_ref, v_ref, n_head, dh, kv_len, kblk):
    """Multi-head attention against packed (kv_len, C) bf16 K/V caches.

    q_all: (TL, C) bf16, already scaled by 1/sqrt(dh).  Per head we lane-slice
    q/K/V, do the score dot, softmax (flash-style online over key blocks when
    kblk < kv_len) and the context dot; per-head contexts are re-packed on the
    lane axis so the caller can do a single dense (TL,C)@(C,C) out-projection.
    """
    bf16 = jnp.bfloat16
    tl = q_all.shape[0]
    nb = kv_len // kblk
    outs = []
    for hh in range(n_head):
        lo = hh * dh
        q_h = q_all[:, lo:lo + dh]                                   # (TL, dh)
        if nb == 1:
            s = lax.dot_general(q_h, k_ref[:, pl.ds(lo, dh)], _NT,
                                preferred_element_type=jnp.float32)
            p = _softmax(s).astype(bf16)
            o_h = jnp.dot(p, v_ref[:, pl.ds(lo, dh)],
                          preferred_element_type=jnp.float32)
        else:
            # flash-style online softmax: score temporaries capped at
            # (TL, kblk) instead of (TL, kv_len).
            def body(b, carry):
                m, l, acc = carry
                ks = pl.multiple_of(b * kblk, kblk)
                k_b = k_ref[pl.ds(ks, kblk), pl.ds(lo, dh)]
                v_b = v_ref[pl.ds(ks, kblk), pl.ds(lo, dh)]
                s = lax.dot_general(q_h, k_b, _NT,
                                    preferred_element_type=jnp.float32)
                m_new = jnp.maximum(m, jnp.max(s, axis=-1, keepdims=True))
                alpha = jnp.exp(m - m_new)
                p = jnp.exp(s - m_new)
                l_new = alpha * l + jnp.sum(p, axis=-1, keepdims=True)
                acc_new = alpha * acc + jnp.dot(
                    p.astype(bf16), v_b, preferred_element_type=jnp.float32)
                return m_new, l_new, acc_new

            m0 = jnp.full((tl, 1), -jnp.inf, jnp.float32)
            l0 = jnp.zeros((tl, 1), jnp.float32)
            a0 = jnp.zeros((tl, dh), jnp.float32)
            _, l, acc = lax.fori_loop(0, nb, body, (m0, l0, a0))
            o_h = acc * pl.reciprocal(l, approx=True)
        outs.append(o_h.astype(bf16))
    return jnp.concatenate(outs, axis=-1)                            # (TL, C)


# --------------------------------- the kernel --------------------------------

def _attn_block_kernel(n_head, dh, tl, kblk_self, kblk_cross, qscale,
                       # inputs
                       x_ref, ctx_ref, gn_ref,
                       cin_w_ref, cin_b_ref,
                       ln1_g_ref, ln1_b_ref,
                       wq1_ref, wk1_ref, wv1_ref, wo1_ref, bo1_ref,
                       ln2_g_ref, ln2_b_ref,
                       wq2_ref, wk2_ref, wv2_ref, wo2_ref, bo2_ref,
                       ln3_g_ref, ln3_b_ref,
                       ga_w_ref, ga_b_ref, gg_w_ref, gg_b_ref,
                       g2_w_ref, g2_b_ref, cout_w_ref, cout_b_ref,
                       # output
                       o_ref,
                       # scratch
                       h_ref, k1_ref, v1_ref, k2_ref, v2_ref):
    t = pl.program_id(1)
    bf16 = jnp.bfloat16
    L = k1_ref.shape[0]
    Lc = k2_ref.shape[0]

    # ---------------- per-batch setup, run once at tile 0 ----------------
    @pl.when(t == 0)
    def _setup():
        x = x_ref[0]                                    # (L, C) fp32
        scale = gn_ref[0, 0:1, :]                       # fused GN scale (wrapper)
        shift = gn_ref[0, 1:2, :]                       # fused GN shift
        # GroupNorm apply + conv_input (1x1 == dense channel matmul), cached.
        h_full = jnp.dot((x * scale + shift).astype(bf16), cin_w_ref[...],
                         preferred_element_type=jnp.float32) + cin_b_ref[...]
        h_ref[...] = h_full
        # Packed (L,C)/(Lc,C) bf16 self-/cross-attention K/V caches via dense
        # full-C matmuls (full MXU width, no per-head dh lane padding).
        hn_full = _layernorm(h_full, ln1_g_ref[...], ln1_b_ref[...]).astype(bf16)
        k1_ref[...] = jnp.dot(hn_full, wk1_ref[...],
                              preferred_element_type=jnp.float32).astype(bf16)
        v1_ref[...] = jnp.dot(hn_full, wv1_ref[...],
                              preferred_element_type=jnp.float32).astype(bf16)
        ctx = ctx_ref[0].astype(bf16)
        k2_ref[...] = jnp.dot(ctx, wk2_ref[...],
                              preferred_element_type=jnp.float32).astype(bf16)
        v2_ref[...] = jnp.dot(ctx, wv2_ref[...],
                              preferred_element_type=jnp.float32).astype(bf16)

    # ---------------- per-tile body ----------------
    start = pl.multiple_of(t * tl, tl)
    h = h_ref[pl.ds(start, tl), :]                      # cached conv_input out (fp32)
    x_t = x_ref[0, pl.ds(start, tl), :]                 # long residual slice

    # LayerNorm1 + self-attention (K/V from packed cache) + residual
    resid = h
    hn = _layernorm(h, ln1_g_ref[...], ln1_b_ref[...]).astype(bf16)
    q = (jnp.dot(hn, wq1_ref[...], preferred_element_type=jnp.float32)
         * qscale).astype(bf16)
    o = _mha(q, k1_ref, v1_ref, n_head, dh, L, kblk_self)
    h = jnp.dot(o, wo1_ref[...], preferred_element_type=jnp.float32) \
        + bo1_ref[...] + resid

    # LayerNorm2 + cross-attention (context K/V from packed cache) + residual
    resid = h
    hn = _layernorm(h, ln2_g_ref[...], ln2_b_ref[...]).astype(bf16)
    q = (jnp.dot(hn, wq2_ref[...], preferred_element_type=jnp.float32)
         * qscale).astype(bf16)
    o = _mha(q, k2_ref, v2_ref, n_head, dh, Lc, kblk_cross)
    h = jnp.dot(o, wo2_ref[...], preferred_element_type=jnp.float32) \
        + bo2_ref[...] + resid

    # LayerNorm3 + GeGLU (split value/gate projections) + residual
    resid = h
    hn = _layernorm(h, ln3_g_ref[...], ln3_b_ref[...]).astype(bf16)
    a = jnp.dot(hn, ga_w_ref[...], preferred_element_type=jnp.float32) + ga_b_ref[...]
    gate = jnp.dot(hn, gg_w_ref[...], preferred_element_type=jnp.float32) + gg_b_ref[...]
    h2 = (a * _gelu(gate)).astype(bf16)
    h = jnp.dot(h2, g2_w_ref[...], preferred_element_type=jnp.float32) \
        + g2_b_ref[...] + resid

    # conv_output (1x1) + long residual
    out = jnp.dot(h.astype(bf16), cout_w_ref[...],
                  preferred_element_type=jnp.float32) + cout_b_ref[...]
    o_ref[0] = out + x_t


# ----------------------- wrapper-side parameter prep -------------------------

def _prepare_params(params, n_head):
    (gn_g, gn_b, cin_w, cin_b, ln1_g, ln1_b, qkv_w, a1o_w, a1o_b,
     ln2_g, ln2_b, a2q_w, a2k_w, a2v_w, a2o_w, a2o_b,
     ln3_g, ln3_b, gg1_w, gg1_b, gg2_w, gg2_b, cout_w, cout_b) = params
    del gn_g, gn_b  # GroupNorm handled in the wrapper
    C = cin_w.shape[0]
    bf = lambda v: v.astype(jnp.bfloat16)
    f32 = lambda v: v.astype(jnp.float32)

    wq1, wk1, wv1 = qkv_w[:, :C], qkv_w[:, C:2 * C], qkv_w[:, 2 * C:]
    ga_w, gg_w = gg1_w[:, :4 * C], gg1_w[:, 4 * C:]
    ga_b, gg_b = gg1_b[:, :4 * C], gg1_b[:, 4 * C:]

    return [
        bf(cin_w), f32(cin_b),
        f32(ln1_g), f32(ln1_b),
        bf(wq1), bf(wk1), bf(wv1), bf(a1o_w), f32(a1o_b),
        f32(ln2_g), f32(ln2_b),
        bf(a2q_w), bf(a2k_w), bf(a2v_w), bf(a2o_w), f32(a2o_b),
        f32(ln3_g), f32(ln3_b),
        bf(ga_w), f32(ga_b), bf(gg_w), f32(gg_b),
        bf(gg2_w), f32(gg2_b), bf(cout_w), f32(cout_b),
    ]


def _groupnorm_scale_shift(x_nchw, gamma, beta, n_groups, eps=1e-6):
    """Per-batch fused GroupNorm scale/shift rows, computed as a plain XLA
    reduction in the wrapper (degenerate M=1 matmul work removed from kernel)."""
    N, C = x_nchw.shape[0], x_nchw.shape[1]
    cg = C // n_groups
    xg = x_nchw.reshape(N, n_groups, -1).astype(jnp.float32)
    mu = xg.mean(axis=-1)                                   # (N, G)
    var = xg.var(axis=-1)                                   # (N, G), biased
    inv = lax.rsqrt(var + eps)
    mu_c = jnp.repeat(mu, cg, axis=-1)                      # (N, C)
    inv_c = jnp.repeat(inv, cg, axis=-1)                    # (N, C)
    scale = inv_c * gamma.reshape(1, C)
    shift = beta.reshape(1, C) - mu_c * scale
    return jnp.stack([scale, shift], axis=1)                # (N, 2, C) fp32


def _vmem_limit_bytes():
    """~96 MiB on 128-MiB chips (v5e/v6e), ~48 MiB on 64-MiB v7x."""
    try:
        cap = int(pltpu.get_tpu_info().vmem_capacity_bytes)
    except Exception:
        cap = 128 * 1024 * 1024
    return int(min(max(cap - 32 * 1024 * 1024, cap * 3 // 4), 100 * 1024 * 1024))


@functools.lru_cache(maxsize=1)
def _single_buffer_supported():
    """Probe once whether pipeline_mode=pl.Buffered(1) compiles on this backend."""
    if not hasattr(pl, "Buffered"):
        return False
    try:
        spec = pl.BlockSpec((8, 128), lambda i: (0, 0), pipeline_mode=pl.Buffered(1))

        def _copy(x_ref, o_ref):
            o_ref[...] = x_ref[...]

        out = pl.pallas_call(
            _copy,
            out_shape=jax.ShapeDtypeStruct((8, 128), jnp.float32),
            grid=(2,),
            in_specs=[spec],
            out_specs=pl.BlockSpec((8, 128), lambda i: (0, 0)),
        )(jnp.zeros((8, 128), jnp.float32))
        jax.block_until_ready(out)
        return True
    except Exception:
        return False


# --------------------------------- wrapper ------------------------------------

def unet_attention_block(x_nchw, context, params, n_head, n_groups=32,
                         tile_l=None, k_block=512):
    N, C, H, W = x_nchw.shape
    L = H * W
    Lc, Dc = context.shape[1], context.shape[2]
    dh = C // n_head
    assert C % n_head == 0 and C % n_groups == 0

    if tile_l is None:
        tile_l = L if L <= 512 else 512
    assert L % tile_l == 0 and tile_l % 8 == 0, (L, tile_l)
    n_tiles = L // tile_l

    def pick_kblk(kv_len):
        if kv_len <= k_block or kv_len % k_block != 0:
            return kv_len
        return k_block

    kblk_self = pick_kblk(L)
    kblk_cross = pick_kblk(Lc)

    # NCHW -> (N, L, C); residual stream stays fp32.
    x_nlc = jnp.transpose(x_nchw.reshape(N, C, L), (0, 2, 1)).astype(jnp.float32)
    ctx = context.astype(jnp.float32)
    gn_ss = _groupnorm_scale_shift(x_nchw, params[0], params[1], n_groups)

    prepped = _prepare_params(params, n_head)

    single_buf = _single_buffer_supported()

    def const_spec(a):
        nd = a.ndim
        idx = lambda b, t, nd=nd: (0,) * nd
        if single_buf:
            # invariant block index -> single buffer, halves weight VMEM.
            return pl.BlockSpec(a.shape, idx, pipeline_mode=pl.Buffered(1))
        return pl.BlockSpec(a.shape, idx)

    in_specs = (
        [pl.BlockSpec((1, L, C), lambda b, t: (b, 0, 0)),     # x: full slab per batch
         pl.BlockSpec((1, Lc, Dc), lambda b, t: (b, 0, 0)),   # context
         pl.BlockSpec((1, 2, C), lambda b, t: (b, 0, 0))]     # fused GN scale/shift
        + [const_spec(w) for w in prepped]
    )

    scratch_shapes = [
        pltpu.VMEM((L, C), jnp.float32),        # cached conv_input output (residual)
        pltpu.VMEM((L, C), jnp.bfloat16),       # packed self-attn K cache
        pltpu.VMEM((L, C), jnp.bfloat16),       # packed self-attn V cache
        pltpu.VMEM((Lc, C), jnp.bfloat16),      # packed cross-attn K cache
        pltpu.VMEM((Lc, C), jnp.bfloat16),      # packed cross-attn V cache
    ]

    flops = int(N * (40 * L * C * C + 4 * L * L * C + 4 * L * Lc * C
                     + 4 * Lc * Dc * C))
    transcendentals = int(N * (L * (L + Lc) + 8 * L * C))
    bytes_accessed = int(4 * N * (2 * L * C + Lc * Dc + 2 * C)
                         + sum(int(p.size) * p.dtype.itemsize for p in prepped))

    kernel = functools.partial(_attn_block_kernel, n_head, dh, tile_l,
                               kblk_self, kblk_cross, 1.0 / math.sqrt(dh))
    out_nlc = pl.pallas_call(
        kernel,
        out_shape=jax.ShapeDtypeStruct((N, L, C), jnp.float32),
        grid=(N, n_tiles),
        in_specs=in_specs,
        out_specs=pl.BlockSpec((1, tile_l, C), lambda b, t: (b, t, 0)),
        scratch_shapes=scratch_shapes,
        compiler_params=pltpu.CompilerParams(
            dimension_semantics=("parallel", "arbitrary"),
            vmem_limit_bytes=_vmem_limit_bytes()),
        cost_estimate=pl.CostEstimate(flops=flops,
                                      transcendentals=transcendentals,
                                      bytes_accessed=bytes_accessed),
    )(x_nlc, ctx, gn_ss, *prepped)

    # (N, L, C) -> NCHW
    return jnp.transpose(out_nlc, (0, 2, 1)).reshape(N, C, H, W)


# --------------------------- deterministic parameters --------------------------

def init_params(key, n_head, n_embd, d_context):
    """Weights stored pre-transposed as (in, out) so the kernel does x @ W."""
    C = n_head * n_embd
    ks = jax.random.split(key, 16)

    def w(k, shape, scale=0.02):
        return jax.random.normal(k, shape, jnp.float32) * scale

    ones = lambda s: jnp.ones(s, jnp.float32)
    zeros = lambda s: jnp.zeros(s, jnp.float32)

    return [
        ones((1, C)), zeros((1, C)),                       # groupnorm
        w(ks[0], (C, C)), w(ks[1], (1, C)),                # conv_input
        ones((1, C)), zeros((1, C)),                       # layernorm_1
        w(ks[2], (C, 3 * C)),                              # attn1 in_proj (no bias)
        w(ks[3], (C, C)), w(ks[4], (1, C)),                # attn1 out_proj
        ones((1, C)), zeros((1, C)),                       # layernorm_2
        w(ks[5], (C, C)),                                  # attn2 q_proj (no bias)
        w(ks[6], (d_context, C)),                          # attn2 k_proj (no bias)
        w(ks[7], (d_context, C)),                          # attn2 v_proj (no bias)
        w(ks[8], (C, C)), w(ks[9], (1, C)),                # attn2 out_proj
        ones((1, C)), zeros((1, C)),                       # layernorm_3
        w(ks[10], (C, 8 * C)), w(ks[11], (1, 8 * C)),      # linear_geglu_1
        w(ks[12], (4 * C, C)), w(ks[13], (1, C)),          # linear_geglu_2
        w(ks[14], (C, C)), w(ks[15], (1, C)),              # conv_output
    ]


# ----------------------------- pure-JAX reference ------------------------------

def _reference(x_nchw, context, params, n_head, n_groups=32):
    (gn_g, gn_b, cin_w, cin_b, ln1_g, ln1_b, qkv_w, a1o_w, a1o_b,
     ln2_g, ln2_b, a2q_w, a2k_w, a2v_w, a2o_w, a2o_b,
     ln3_g, ln3_b, gg1_w, gg1_b, gg2_w, gg2_b, cout_w, cout_b) = params
    N, C, H, W = x_nchw.shape
    L = H * W
    dh = C // n_head

    def ln(x, g, b):
        mu = x.mean(-1, keepdims=True)
        var = ((x - mu) ** 2).mean(-1, keepdims=True)
        return (x - mu) / jnp.sqrt(var + 1e-5) * g + b

    def mha(q, k, v):
        qh = q.reshape(N, -1, n_head, dh).transpose(0, 2, 1, 3)
        kh = k.reshape(N, -1, n_head, dh).transpose(0, 2, 1, 3)
        vh = v.reshape(N, -1, n_head, dh).transpose(0, 2, 1, 3)
        s = jnp.einsum('nhqd,nhkd->nhqk', qh, kh) / math.sqrt(dh)
        p = jax.nn.softmax(s, axis=-1)
        o = jnp.einsum('nhqk,nhkd->nhqd', p, vh)
        return o.transpose(0, 2, 1, 3).reshape(N, -1, C)

    xg = x_nchw.reshape(N, n_groups, (C // n_groups) * L)
    mu = xg.mean(-1, keepdims=True)
    var = ((xg - mu) ** 2).mean(-1, keepdims=True)
    xg = ((xg - mu) / jnp.sqrt(var + 1e-6)).reshape(N, C, L)
    xg = xg * gn_g.reshape(1, C, 1) + gn_b.reshape(1, C, 1)

    h = jnp.transpose(xg, (0, 2, 1)) @ cin_w + cin_b            # (N, L, C)
    r = h
    hn = ln(h, ln1_g, ln1_b)
    qkv = hn @ qkv_w
    h = mha(qkv[..., :C], qkv[..., C:2 * C], qkv[..., 2 * C:]) @ a1o_w + a1o_b + r
    r = h
    hn = ln(h, ln2_g, ln2_b)
    h = mha(hn @ a2q_w, context @ a2k_w, context @ a2v_w) @ a2o_w + a2o_b + r
    r = h
    hn = ln(h, ln3_g, ln3_b)
    g1 = hn @ gg1_w + gg1_b
    h = (g1[..., :4 * C] * jax.nn.gelu(g1[..., 4 * C:], approximate=False)) @ gg2_w + gg2_b + r
    out = h @ cout_w + cout_b
    return jnp.transpose(out, (0, 2, 1)).reshape(N, C, H, W) + x_nchw


if __name__ == "__main__":
    key = jax.random.PRNGKey(0)
    n_head, n_embd, d_context = 4, 16, 64     # channels = 64 (divisible by 32 groups)
    C = n_head * n_embd
    N, H, W, Lc = 2, 8, 8, 16

    kx, kc, kp = jax.random.split(key, 3)
    x = jax.random.normal(kx, (N, C, H, W), jnp.float32)
    context = jax.random.normal(kc, (N, Lc, d_context), jnp.float32)
    params = init_params(kp, n_head, n_embd, d_context)

    # tile_l=32 -> 2 spatial tiles; k_block=32 -> self-attn exercises the
    # flash-style key-blocked path (2 key blocks), cross-attn the single-shot path.
    out = unet_attention_block(x, context, params, n_head, tile_l=32, k_block=32)
    out = jax.block_until_ready(out)

    assert out.shape == (N, C, H, W), out.shape
    assert bool(jnp.isfinite(out).all())

    ref = _reference(x, context, params, n_head)
    err = float(jnp.max(jnp.abs(out - ref)))
    assert err < 5e-2, f"max |kernel - reference| = {err}"
    print("KERNEL_OK")
</pallas_src>

<mosaic_0001>
module attributes {stable_mosaic.version = 11 : i64} {
  func.func @_copy(%arg0: i32, %arg1: memref<8x128xf32, #tpu.memory_space<vmem>>, %arg2: memref<8x128xf32, #tpu.memory_space<vmem>>) attributes {dimension_semantics = [#tpu.dimension_semantics<arbitrary>], iteration_bounds = array<i64: 2>, scalar_prefetch = 0 : i64, scratch_operands = 0 : i64, tpu.core_type = #tpu.core_type<tc>, window_params = [{pipeline_mode = #tpu.pipeline_mode<synchronous>, transform_indices = @transform_0, window_bounds = array<i64: 8, 128>}, {pipeline_mode = #tpu.pipeline_mode<synchronous>, transform_indices = @transform_1, window_bounds = array<i64: 8, 128>}]} {
    %c0 = arith.constant 0 : index
    %c0_0 = arith.constant 0 : index
    %0 = vector.load %arg1[%c0, %c0_0] : memref<8x128xf32, #tpu.memory_space<vmem>>, vector<8x128xf32>
    %c0_1 = arith.constant 0 : index
    %c0_2 = arith.constant 0 : index
    %1 = vector.load %arg2[%c0_1, %c0_2] : memref<8x128xf32, #tpu.memory_space<vmem>>, vector<8x128xf32>
    tpu.vector_store %arg2[%c0_1, %c0_2], %0 {strides = array<i32>} : memref<8x128xf32, #tpu.memory_space<vmem>>, vector<8x128xf32>,
    return
  }
  func.func @transform_0(%arg0: i32) -> (i32, i32) {
    %c0_i32 = arith.constant 0 : i32
    %c0_i32_0 = arith.constant 0 : i32
    %c0_i32_1 = arith.constant 0 : i32
    return %c0_i32, %c0_i32_0 : i32, i32
  }
  func.func @transform_1(%arg0: i32) -> (i32, i32) {
    %c0_i32 = arith.constant 0 : i32
    %c0_i32_0 = arith.constant 0 : i32
    %c0_i32_1 = arith.constant 0 : i32
    return %c0_i32, %c0_i32_0 : i32, i32
  }
}

module attributes {stable_mosaic.version = 11 : i64} {
  func.func @_attn_block_kernel(%arg0: i32, %arg1: i32, %arg2: memref<1x64x64xf32, #tpu.memory_space<vmem>>, %arg3: memref<1x16x64xf32, #tpu.memory_space<vmem>>, %arg4: memref<1x2x64xf32, #tpu.memory_space<vmem>>, %arg5: memref<64x64xbf16, #tpu.memory_space<vmem>>, %arg6: memref<1x64xf32, #tpu.memory_space<vmem>>, %arg7: memref<1x64xf32, #tpu.memory_space<vmem>>, %arg8: memref<1x64xf32, #tpu.memory_space<vmem>>, %arg9: memref<64x64xbf16, #tpu.memory_space<vmem>>, %arg10: memref<64x64xbf16, #tpu.memory_space<vmem>>, %arg11: memref<64x64xbf16, #tpu.memory_space<vmem>>, %arg12: memref<64x64xbf16, #tpu.memory_space<vmem>>, %arg13: memref<1x64xf32, #tpu.memory_space<vmem>>, %arg14: memref<1x64xf32, #tpu.memory_space<vmem>>, %arg15: memref<1x64xf32, #tpu.memory_space<vmem>>, %arg16: memref<64x64xbf16, #tpu.memory_space<vmem>>, %arg17: memref<64x64xbf16, #tpu.memory_space<vmem>>, %arg18: memref<64x64xbf16, #tpu.memory_space<vmem>>, %arg19: memref<64x64xbf16, #tpu.memory_space<vmem>>, %arg20: memref<1x64xf32, #tpu.memory_space<vmem>>, %arg21: memref<1x64xf32, #tpu.memory_space<vmem>>, %arg22: memref<1x64xf32, #tpu.memory_space<vmem>>, %arg23: memref<64x256xbf16, #tpu.memory_space<vmem>>, %arg24: memref<1x256xf32, #tpu.memory_space<vmem>>, %arg25: memref<64x256xbf16, #tpu.memory_space<vmem>>, %arg26: memref<1x256xf32, #tpu.memory_space<vmem>>, %arg27: memref<256x64xbf16, #tpu.memory_space<vmem>>, %arg28: memref<1x64xf32, #tpu.memory_space<vmem>>, %arg29: memref<64x64xbf16, #tpu.memory_space<vmem>>, %arg30: memref<1x64xf32, #tpu.memory_space<vmem>>, %arg31: memref<1x32x64xf32, #tpu.memory_space<vmem>>, %arg32: memref<64x64xf32, #tpu.memory_space<vmem>>, %arg33: memref<64x64xbf16, #tpu.memory_space<vmem>>, %arg34: memref<64x64xbf16, #tpu.memory_space<vmem>>, %arg35: memref<16x64xbf16, #tpu.memory_space<vmem>>, %arg36: memref<16x64xbf16, #tpu.memory_space<vmem>>) attributes {dimension_semantics = [#tpu.dimension_semantics<parallel>, #tpu.dimension_semantics<arbitrary>], iteration_bounds = array<i64: 2, 2>, scalar_prefetch = 0 : i64, scratch_operands = 5 : i64, tpu.core_type = #tpu.core_type<tc>, window_params = [{transform_indices = @transform_0, window_bounds = array<i64: 1, 64, 64>}, {transform_indices = @transform_1, window_bounds = array<i64: 1, 16, 64>}, {transform_indices = @transform_2, window_bounds = array<i64: 1, 2, 64>}, {pipeline_mode = #tpu.pipeline_mode<synchronous>, transform_indices = @transform_3, window_bounds = array<i64: 64, 64>}, {pipeline_mode = #tpu.pipeline_mode<synchronous>, transform_indices = @transform_4, window_bounds = array<i64: 1, 64>}, {pipeline_mode = #tpu.pipeline_mode<synchronous>, transform_indices = @transform_5, window_bounds = array<i64: 1, 64>}, {pipeline_mode = #tpu.pipeline_mode<synchronous>, transform_indices = @transform_6, window_bounds = array<i64: 1, 64>}, {pipeline_mode = #tpu.pipeline_mode<synchronous>, transform_indices = @transform_7, window_bounds = array<i64: 64, 64>}, {pipeline_mode = #tpu.pipeline_mode<synchronous>, transform_indices = @transform_8, window_bounds = array<i64: 64, 64>}, {pipeline_mode = #tpu.pipeline_mode<synchronous>, transform_indices = @transform_9, window_bounds = array<i64: 64, 64>}, {pipeline_mode = #tpu.pipeline_mode<synchronous>, transform_indices = @transform_10, window_bounds = array<i64: 64, 64>}, {pipeline_mode = #tpu.pipeline_mode<synchronous>, transform_indices = @transform_11, window_bounds = array<i64: 1, 64>}, {pipeline_mode = #tpu.pipeline_mode<synchronous>, transform_indices = @transform_12, window_bounds = array<i64: 1, 64>}, {pipeline_mode = #tpu.pipeline_mode<synchronous>, transform_indices = @transform_13, window_bounds = array<i64: 1, 64>}, {pipeline_mode = #tpu.pipeline_mode<synchronous>, transform_indices = @transform_14, window_bounds = array<i64: 64, 64>}, {pipeline_mode = #tpu.pipeline_mode<synchronous>, transform_indices = @transform_15, window_bounds = array<i64: 64, 64>}, {pipeline_mode = #tpu.pipeline_mode<synchronous>, transform_indices = @transform_16, window_bounds = array<i64: 64, 64>}, {pipeline_mode = #tpu.pipeline_mode<synchronous>, transform_indices = @transform_17, window_bounds = array<i64: 64, 64>}, {pipeline_mode = #tpu.pipeline_mode<synchronous>, transform_indices = @transform_18, window_bounds = array<i64: 1, 64>}, {pipeline_mode = #tpu.pipeline_mode<synchronous>, transform_indices = @transform_19, window_bounds = array<i64: 1, 64>}, {pipeline_mode = #tpu.pipeline_mode<synchronous>, transform_indices = @transform_20, window_bounds = array<i64: 1, 64>}, {pipeline_mode = #tpu.pipeline_mode<synchronous>, transform_indices = @transform_21, window_bounds = array<i64: 64, 256>}, {pipeline_mode = #tpu.pipeline_mode<synchronous>, transform_indices = @transform_22, window_bounds = array<i64: 1, 256>}, {pipeline_mode = #tpu.pipeline_mode<synchronous>, transform_indices = @transform_23, window_bounds = array<i64: 64, 256>}, {pipeline_mode = #tpu.pipeline_mode<synchronous>, transform_indices = @transform_24, window_bounds = array<i64: 1, 256>}, {pipeline_mode = #tpu.pipeline_mode<synchronous>, transform_indices = @transform_25, window_bounds = array<i64: 256, 64>}, {pipeline_mode = #tpu.pipeline_mode<synchronous>, transform_indices = @transform_26, window_bounds = array<i64: 1, 64>}, {pipeline_mode = #tpu.pipeline_mode<synchronous>, transform_indices = @transform_27, window_bounds = array<i64: 64, 64>}, {pipeline_mode = #tpu.pipeline_mode<synchronous>, transform_indices = @transform_28, window_bounds = array<i64: 1, 64>}, {transform_indices = @transform_29, window_bounds = array<i64: 1, 32, 64>}]} {
    %c0_i32 = arith.constant 0 : i32
    %0 = arith.cmpi eq, %arg1, %c0_i32 : i32
    %1 = arith.extui %0 : i1 to i32
    %c0_i32_0 = arith.constant 0 : i32
    %2 = arith.cmpi ne, %1, %c0_i32_0 : i32
    scf.if %2 {
      %c0_129 = arith.constant 0 : index
      %c0_130 = arith.constant 0 : index
      %c0_131 = arith.constant 0 : index
      %252 = vector.load %arg2[%c0_129, %c0_130, %c0_131] : memref<1x64x64xf32, #tpu.memory_space<vmem>>, vector<1x64x64xf32>
      %253 = vector.shape_cast %252 : vector<1x64x64xf32> to vector<64x64xf32>
      %c0_132 = arith.constant 0 : index
      %c0_133 = arith.constant 0 : index
      %c0_134 = arith.constant 0 : index
      %254 = vector.load %arg4[%c0_132, %c0_133, %c0_134] : memref<1x2x64xf32, #tpu.memory_space<vmem>>, vector<1x1x64xf32>
      %255 = vector.shape_cast %254 : vector<1x1x64xf32> to vector<1x64xf32>
      %c0_135 = arith.constant 0 : index
      %c1 = arith.constant 1 : index
      %c0_136 = arith.constant 0 : index
      %256 = vector.load %arg4[%c0_135, %c1, %c0_136] : memref<1x2x64xf32, #tpu.memory_space<vmem>>, vector<1x1x64xf32>
      %257 = vector.shape_cast %256 : vector<1x1x64xf32> to vector<1x64xf32>
      %258 = vector.broadcast %255 : vector<1x64xf32> to vector<64x64xf32>
      %259 = arith.mulf %253, %258 : vector<64x64xf32>
      %260 = vector.broadcast %257 : vector<1x64xf32> to vector<64x64xf32>
      %261 = arith.addf %259, %260 : vector<64x64xf32>
      %262 = arith.truncf %261 : vector<64x64xf32> to vector<64x64xbf16>
      %c0_137 = arith.constant 0 : index
      %c0_138 = arith.constant 0 : index
      %263 = vector.load %arg5[%c0_137, %c0_138] : memref<64x64xbf16, #tpu.memory_space<vmem>>, vector<64x64xbf16>
      %cst_139 = arith.constant dense<0.000000e+00> : vector<64x64xf32>
      %264 = tpu.matmul %262, %263, %cst_139 {dimension_numbers = #tpu.dot_dimension_numbers<[1], [0], [0], [1], [0, 0, 1, 1], [], []>} : vector<64x64xbf16>, vector<64x64xbf16>, vector<64x64xf32> -> vector<64x64xf32>
      %c0_140 = arith.constant 0 : index
      %c0_141 = arith.constant 0 : index
      %265 = vector.load %arg6[%c0_140, %c0_141] : memref<1x64xf32, #tpu.memory_space<vmem>>, vector<1x64xf32>
      %266 = vector.broadcast %265 : vector<1x64xf32> to vector<64x64xf32>
      %267 = arith.addf %264, %266 : vector<64x64xf32>
      %c0_142 = arith.constant 0 : index
      %c0_143 = arith.constant 0 : index
      %268 = vector.load %arg32[%c0_142, %c0_143] : memref<64x64xf32, #tpu.memory_space<vmem>>, vector<64x64xf32>
      tpu.vector_store %arg32[%c0_142, %c0_143], %267 {strides = array<i32>} : memref<64x64xf32, #tpu.memory_space<vmem>>, vector<64x64xf32>,
      %c0_144 = arith.constant 0 : index
      %c0_145 = arith.constant 0 : index
      %269 = vector.load %arg7[%c0_144, %c0_145] : memref<1x64xf32, #tpu.memory_space<vmem>>, vector<1x64xf32>
      %c0_146 = arith.constant 0 : index
      %c0_147 = arith.constant 0 : index
      %270 = vector.load %arg8[%c0_146, %c0_147] : memref<1x64xf32, #tpu.memory_space<vmem>>, vector<1x64xf32>
      %cst_148 = arith.constant dense<0.000000e+00> : vector<64xf32>
      %271 = vector.multi_reduction <add>, %267, %cst_148 [1] : vector<64x64xf32> to vector<64xf32>
      %272 = vector.shape_cast %271 : vector<64xf32> to vector<64x1xf32>
      %cst_149 = arith.constant 6.400000e+01 : f32
      %273 = vector.broadcast %cst_149 : f32 to vector<64x1xf32>
      %274 = arith.divf %272, %273 : vector<64x1xf32>
      %275 = vector.broadcast %274 : vector<64x1xf32> to vector<64x64xf32>
      %276 = arith.subf %267, %275 : vector<64x64xf32>
      %277 = arith.mulf %276, %276 : vector<64x64xf32>
      %cst_150 = arith.constant dense<0.000000e+00> : vector<64xf32>
      %278 = vector.multi_reduction <add>, %277, %cst_150 [1] : vector<64x64xf32> to vector<64xf32>
      %279 = vector.shape_cast %278 : vector<64xf32> to vector<64x1xf32>
      %cst_151 = arith.constant 6.400000e+01 : f32
      %280 = vector.broadcast %cst_151 : f32 to vector<64x1xf32>
      %281 = arith.divf %279, %280 : vector<64x1xf32>
      %cst_152 = arith.constant 9.99999974E-6 : f32
      %282 = vector.broadcast %cst_152 : f32 to vector<64x1xf32>
      %283 = arith.addf %281, %282 : vector<64x1xf32>
      %284 = math.rsqrt %283 : vector<64x1xf32>
      %285 = vector.broadcast %284 : vector<64x1xf32> to vector<64x64xf32>
      %286 = vector.broadcast %269 : vector<1x64xf32> to vector<64x64xf32>
      %287 = arith.mulf %285, %286 : vector<64x64xf32>
      %288 = arith.mulf %276, %287 : vector<64x64xf32>
      %289 = vector.broadcast %270 : vector<1x64xf32> to vector<64x64xf32>
      %290 = arith.addf %288, %289 : vector<64x64xf32>
      %291 = arith.truncf %290 : vector<64x64xf32> to vector<64x64xbf16>
      %c0_153 = arith.constant 0 : index
      %c0_154 = arith.constant 0 : index
      %292 = vector.load %arg10[%c0_153, %c0_154] : memref<64x64xbf16, #tpu.memory_space<vmem>>, vector<64x64xbf16>
      %cst_155 = arith.constant dense<0.000000e+00> : vector<64x64xf32>
      %293 = tpu.matmul %291, %292, %cst_155 {dimension_numbers = #tpu.dot_dimension_numbers<[1], [0], [0], [1], [0, 0, 1, 1], [], []>} : vector<64x64xbf16>, vector<64x64xbf16>, vector<64x64xf32> -> vector<64x64xf32>
      %294 = arith.truncf %293 : vector<64x64xf32> to vector<64x64xbf16>
      %c0_156 = arith.constant 0 : index
      %c0_157 = arith.constant 0 : index
      %295 = vector.load %arg33[%c0_156, %c0_157] : memref<64x64xbf16, #tpu.memory_space<vmem>>, vector<64x64xbf16>
      tpu.vector_store %arg33[%c0_156, %c0_157], %294 {strides = array<i32>} : memref<64x64xbf16, #tpu.memory_space<vmem>>, vector<64x64xbf16>,
      %c0_158 = arith.constant 0 : index
      %c0_159 = arith.constant 0 : index
      %296 = vector.load %arg11[%c0_158, %c0_159] : memref<64x64xbf16, #tpu.memory_space<vmem>>, vector<64x64xbf16>
      %cst_160 = arith.constant dense<0.000000e+00> : vector<64x64xf32>
      %297 = tpu.matmul %291, %296, %cst_160 {dimension_numbers = #tpu.dot_dimension_numbers<[1], [0], [0], [1], [0, 0, 1, 1], [], []>} : vector<64x64xbf16>, vector<64x64xbf16>, vector<64x64xf32> -> vector<64x64xf32>
      %298 = arith.truncf %297 : vector<64x64xf32> to vector<64x64xbf16>
      %c0_161 = arith.constant 0 : index
      %c0_162 = arith.constant 0 : index
      %299 = vector.load %arg34[%c0_161, %c0_162] : memref<64x64xbf16, #tpu.memory_space<vmem>>, vector<64x64xbf16>
      tpu.vector_store %arg34[%c0_161, %c0_162], %298 {strides = array<i32>} : memref<64x64xbf16, #tpu.memory_space<vmem>>, vector<64x64xbf16>,
      %c0_163 = arith.constant 0 : index
      %c0_164 = arith.constant 0 : index
      %c0_165 = arith.constant 0 : index
      %300 = vector.load %arg3[%c0_163, %c0_164, %c0_165] : memref<1x16x64xf32, #tpu.memory_space<vmem>>, vector<1x16x64xf32>
      %301 = vector.shape_cast %300 : vector<1x16x64xf32> to vector<16x64xf32>
      %302 = arith.truncf %301 : vector<16x64xf32> to vector<16x64xbf16>
      %c0_166 = arith.constant 0 : index
      %c0_167 = arith.constant 0 : index
      %303 = vector.load %arg17[%c0_166, %c0_167] : memref<64x64xbf16, #tpu.memory_space<vmem>>, vector<64x64xbf16>
      %cst_168 = arith.constant dense<0.000000e+00> : vector<16x64xf32>
      %304 = tpu.matmul %302, %303, %cst_168 {dimension_numbers = #tpu.dot_dimension_numbers<[1], [0], [0], [1], [0, 0, 1, 1], [], []>} : vector<16x64xbf16>, vector<64x64xbf16>, vector<16x64xf32> -> vector<16x64xf32>
      %305 = arith.truncf %304 : vector<16x64xf32> to vector<16x64xbf16>
      %c0_169 = arith.constant 0 : index
      %c0_170 = arith.constant 0 : index
      %306 = vector.load %arg35[%c0_169, %c0_170] : memref<16x64xbf16, #tpu.memory_space<vmem>>, vector<16x64xbf16>
      tpu.vector_store %arg35[%c0_169, %c0_170], %305 {strides = array<i32>} : memref<16x64xbf16, #tpu.memory_space<vmem>>, vector<16x64xbf16>,
      %c0_171 = arith.constant 0 : index
      %c0_172 = arith.constant 0 : index
      %307 = vector.load %arg18[%c0_171, %c0_172] : memref<64x64xbf16, #tpu.memory_space<vmem>>, vector<64x64xbf16>
      %cst_173 = arith.constant dense<0.000000e+00> : vector<16x64xf32>
      %308 = tpu.matmul %302, %307, %cst_173 {dimension_numbers = #tpu.dot_dimension_numbers<[1], [0], [0], [1], [0, 0, 1, 1], [], []>} : vector<16x64xbf16>, vector<64x64xbf16>, vector<16x64xf32> -> vector<16x64xf32>
      %309 = arith.truncf %308 : vector<16x64xf32> to vector<16x64xbf16>
      %c0_174 = arith.constant 0 : index
      %c0_175 = arith.constant 0 : index
      %310 = vector.load %arg36[%c0_174, %c0_175] : memref<16x64xbf16, #tpu.memory_space<vmem>>, vector<16x64xbf16>
      tpu.vector_store %arg36[%c0_174, %c0_175], %309 {strides = array<i32>} : memref<16x64xbf16, #tpu.memory_space<vmem>>, vector<16x64xbf16>,
    } else {
    }
    %c32_i32 = arith.constant 32 : i32
    %3 = arith.muli %arg1, %c32_i32 : i32
    %4 = tpu.assume_multiple %3, 32 : i32
    %5 = arith.index_cast %4 : i32 to index
    %c0 = arith.constant 0 : index
    %6 = vector.load %arg32[%5, %c0] : memref<64x64xf32, #tpu.memory_space<vmem>>, vector<32x64xf32>
    %c0_1 = arith.constant 0 : index
    %7 = arith.index_cast %4 : i32 to index
    %c0_2 = arith.constant 0 : index
    %8 = vector.load %arg2[%c0_1, %7, %c0_2] : memref<1x64x64xf32, #tpu.memory_space<vmem>>, vector<1x32x64xf32>
    %9 = vector.shape_cast %8 : vector<1x32x64xf32> to vector<32x64xf32>
    %c0_3 = arith.constant 0 : index
    %c0_4 = arith.constant 0 : index
    %10 = vector.load %arg7[%c0_3, %c0_4] : memref<1x64xf32, #tpu.memory_space<vmem>>, vector<1x64xf32>
    %c0_5 = arith.constant 0 : index
    %c0_6 = arith.constant 0 : index
    %11 = vector.load %arg8[%c0_5, %c0_6] : memref<1x64xf32, #tpu.memory_space<vmem>>, vector<1x64xf32>
    %cst = arith.constant dense<0.000000e+00> : vector<32xf32>
    %12 = vector.multi_reduction <add>, %6, %cst [1] : vector<32x64xf32> to vector<32xf32>
    %13 = vector.shape_cast %12 : vector<32xf32> to vector<32x1xf32>
    %cst_7 = arith.constant 6.400000e+01 : f32
    %14 = vector.broadcast %cst_7 : f32 to vector<32x1xf32>
    %15 = arith.divf %13, %14 : vector<32x1xf32>
    %16 = vector.broadcast %15 : vector<32x1xf32> to vector<32x64xf32>
    %17 = arith.subf %6, %16 : vector<32x64xf32>
    %18 = arith.mulf %17, %17 : vector<32x64xf32>
    %cst_8 = arith.constant dense<0.000000e+00> : vector<32xf32>
    %19 = vector.multi_reduction <add>, %18, %cst_8 [1] : vector<32x64xf32> to vector<32xf32>
    %20 = vector.shape_cast %19 : vector<32xf32> to vector<32x1xf32>
    %cst_9 = arith.constant 6.400000e+01 : f32
    %21 = vector.broadcast %cst_9 : f32 to vector<32x1xf32>
    %22 = arith.divf %20, %21 : vector<32x1xf32>
    %cst_10 = arith.constant 9.99999974E-6 : f32
    %23 = vector.broadcast %cst_10 : f32 to vector<32x1xf32>
    %24 = arith.addf %22, %23 : vector<32x1xf32>
    %25 = math.rsqrt %24 : vector<32x1xf32>
    %26 = vector.broadcast %25 : vector<32x1xf32> to vector<32x64xf32>
    %27 = vector.broadcast %10 : vector<1x64xf32> to vector<32x64xf32>
    %28 = arith.mulf %26, %27 : vector<32x64xf32>
    %29 = arith.mulf %17, %28 : vector<32x64xf32>
    %30 = vector.broadcast %11 : vector<1x64xf32> to vector<32x64xf32>
    %31 = arith.addf %29, %30 : vector<32x64xf32>
    %32 = arith.truncf %31 : vector<32x64xf32> to vector<32x64xbf16>
    %c0_11 = arith.constant 0 : index
    %c0_12 = arith.constant 0 : index
    %33 = vector.load %arg9[%c0_11, %c0_12] : memref<64x64xbf16, #tpu.memory_space<vmem>>, vector<64x64xbf16>
    %cst_13 = arith.constant dense<0.000000e+00> : vector<32x64xf32>
    %34 = tpu.matmul %32, %33, %cst_13 {dimension_numbers = #tpu.dot_dimension_numbers<[1], [0], [0], [1], [0, 0, 1, 1], [], []>} : vector<32x64xbf16>, vector<64x64xbf16>, vector<32x64xf32> -> vector<32x64xf32>
    %cst_14 = arith.constant 2.500000e-01 : f32
    %35 = vector.broadcast %cst_14 : f32 to vector<32x64xf32>
    %36 = arith.mulf %34, %35 : vector<32x64xf32>
    %37 = arith.truncf %36 : vector<32x64xf32> to vector<32x64xbf16>
    %38 = vector.extract_strided_slice %37 {offsets = [0, 0], sizes = [32, 16], strides = [1, 1]} : vector<32x64xbf16> to vector<32x16xbf16>
    %cst_15 = arith.constant 0xFF800000 : f32
    %39 = vector.broadcast %cst_15 : f32 to vector<32x1xf32>
    %cst_16 = arith.constant 0.000000e+00 : f32
    %40 = vector.broadcast %cst_16 : f32 to vector<32x1xf32>
    %cst_17 = arith.constant 0.000000e+00 : f32
    %41 = vector.broadcast %cst_17 : f32 to vector<32x16xf32>
    %c0_i32_18 = arith.constant 0 : i32
    %c2_i32 = arith.constant 2 : i32
    %42 = arith.addi %c0_i32_18, %c2_i32 : i32
    %c1_i32 = arith.constant 1 : i32
    %43:3 = scf.for %arg37 = %c0_i32_18 to %42 step %c1_i32 iter_args(%arg38 = %39, %arg39 = %40, %arg40 = %41) -> (vector<32x1xf32>, vector<32x1xf32>, vector<32x16xf32>)  : i32 {
      %c32_i32_129 = arith.constant 32 : i32
      %252 = arith.muli %arg37, %c32_i32_129 : i32
      %253 = tpu.assume_multiple %252, 32 : i32
      %254 = arith.index_cast %253 : i32 to index
      %c0_130 = arith.constant 0 : index
      %255 = vector.load %arg33[%254, %c0_130] : memref<64x64xbf16, #tpu.memory_space<vmem>>, vector<32x16xbf16>
      %256 = arith.index_cast %253 : i32 to index
      %c0_131 = arith.constant 0 : index
      %257 = vector.load %arg34[%256, %c0_131] : memref<64x64xbf16, #tpu.memory_space<vmem>>, vector<32x16xbf16>
      %cst_132 = arith.constant dense<0.000000e+00> : vector<32x32xf32>
      %258 = tpu.matmul %38, %255, %cst_132 {dimension_numbers = #tpu.dot_dimension_numbers<[1], [1], [0], [0], [0, 0, 1, 0], [], []>} : vector<32x16xbf16>, vector<32x16xbf16>, vector<32x32xf32> -> vector<32x32xf32>
      %cst_133 = arith.constant dense<0xFF800000> : vector<32xf32>
      %259 = vector.multi_reduction <maximumf>, %258, %cst_133 [1] : vector<32x32xf32> to vector<32xf32>
      %260 = vector.shape_cast %259 : vector<32xf32> to vector<32x1xf32>
      %261 = arith.maximumf %arg38, %260 : vector<32x1xf32>
      %262 = arith.subf %arg38, %261 : vector<32x1xf32>
      %263 = math.exp %262 : vector<32x1xf32>
      %264 = vector.broadcast %261 : vector<32x1xf32> to vector<32x32xf32>
      %265 = arith.subf %258, %264 : vector<32x32xf32>
      %266 = math.exp %265 : vector<32x32xf32>
      %267 = arith.mulf %263, %arg39 : vector<32x1xf32>
      %cst_134 = arith.constant dense<0.000000e+00> : vector<32xf32>
      %268 = vector.multi_reduction <add>, %266, %cst_134 [1] : vector<32x32xf32> to vector<32xf32>
      %269 = vector.shape_cast %268 : vector<32xf32> to vector<32x1xf32>
      %270 = arith.addf %267, %269 : vector<32x1xf32>
      %271 = vector.broadcast %263 : vector<32x1xf32> to vector<32x16xf32>
      %272 = arith.mulf %271, %arg40 : vector<32x16xf32>
      %273 = arith.truncf %266 : vector<32x32xf32> to vector<32x32xbf16>
      %cst_135 = arith.constant dense<0.000000e+00> : vector<32x16xf32>
      %274 = tpu.matmul %273, %257, %cst_135 {dimension_numbers = #tpu.dot_dimension_numbers<[1], [0], [0], [1], [0, 0, 1, 1], [], []>} : vector<32x32xbf16>, vector<32x16xbf16>, vector<32x16xf32> -> vector<32x16xf32>
      %275 = arith.addf %272, %274 : vector<32x16xf32>
      scf.yield %261, %270, %275 : vector<32x1xf32>, vector<32x1xf32>, vector<32x16xf32>
    }
    %c2_i32_19 = arith.constant 2 : i32
    %44 = tpu.reciprocal %43#1 {approx = true} : vector<32x1xf32> -> vector<32x1xf32>
    %45 = vector.broadcast %44 : vector<32x1xf32> to vector<32x16xf32>
    %46 = arith.mulf %43#2, %45 : vector<32x16xf32>
    %47 = arith.truncf %46 : vector<32x16xf32> to vector<32x16xbf16>
    %48 = vector.extract_strided_slice %37 {offsets = [0, 16], sizes = [32, 16], strides = [1, 1]} : vector<32x64xbf16> to vector<32x16xbf16>
    %cst_20 = arith.constant 0xFF800000 : f32
    %49 = vector.broadcast %cst_20 : f32 to vector<32x1xf32>
    %cst_21 = arith.constant 0.000000e+00 : f32
    %50 = vector.broadcast %cst_21 : f32 to vector<32x1xf32>
    %cst_22 = arith.constant 0.000000e+00 : f32
    %51 = vector.broadcast %cst_22 : f32 to vector<32x16xf32>
    %c0_i32_23 = arith.constant 0 : i32
    %c2_i32_24 = arith.constant 2 : i32
    %52 = arith.addi %c0_i32_23, %c2_i32_24 : i32
    %c1_i32_25 = arith.constant 1 : i32
    %53:3 = scf.for %arg37 = %c0_i32_23 to %52 step %c1_i32_25 iter_args(%arg38 = %49, %arg39 = %50, %arg40 = %51) -> (vector<32x1xf32>, vector<32x1xf32>, vector<32x16xf32>)  : i32 {
      %c32_i32_129 = arith.constant 32 : i32
      %252 = arith.muli %arg37, %c32_i32_129 : i32
      %253 = tpu.assume_multiple %252, 32 : i32
      %254 = arith.index_cast %253 : i32 to index
      %c16_130 = arith.constant 16 : index
      %255 = vector.load %arg33[%254, %c16_130] : memref<64x64xbf16, #tpu.memory_space<vmem>>, vector<32x16xbf16>
      %256 = arith.index_cast %253 : i32 to index
      %c16_131 = arith.constant 16 : index
      %257 = vector.load %arg34[%256, %c16_131] : memref<64x64xbf16, #tpu.memory_space<vmem>>, vector<32x16xbf16>
      %cst_132 = arith.constant dense<0.000000e+00> : vector<32x32xf32>
      %258 = tpu.matmul %48, %255, %cst_132 {dimension_numbers = #tpu.dot_dimension_numbers<[1], [1], [0], [0], [0, 0, 1, 0], [], []>} : vector<32x16xbf16>, vector<32x16xbf16>, vector<32x32xf32> -> vector<32x32xf32>
      %cst_133 = arith.constant dense<0xFF800000> : vector<32xf32>
      %259 = vector.multi_reduction <maximumf>, %258, %cst_133 [1] : vector<32x32xf32> to vector<32xf32>
      %260 = vector.shape_cast %259 : vector<32xf32> to vector<32x1xf32>
      %261 = arith.maximumf %arg38, %260 : vector<32x1xf32>
      %262 = arith.subf %arg38, %261 : vector<32x1xf32>
      %263 = math.exp %262 : vector<32x1xf32>
      %264 = vector.broadcast %261 : vector<32x1xf32> to vector<32x32xf32>
      %265 = arith.subf %258, %264 : vector<32x32xf32>
      %266 = math.exp %265 : vector<32x32xf32>
      %267 = arith.mulf %263, %arg39 : vector<32x1xf32>
      %cst_134 = arith.constant dense<0.000000e+00> : vector<32xf32>
      %268 = vector.multi_reduction <add>, %266, %cst_134 [1] : vector<32x32xf32> to vector<32xf32>
      %269 = vector.shape_cast %268 : vector<32xf32> to vector<32x1xf32>
      %270 = arith.addf %267, %269 : vector<32x1xf32>
      %271 = vector.broadcast %263 : vector<32x1xf32> to vector<32x16xf32>
      %272 = arith.mulf %271, %arg40 : vector<32x16xf32>
      %273 = arith.truncf %266 : vector<32x32xf32> to vector<32x32xbf16>
      %cst_135 = arith.constant dense<0.000000e+00> : vector<32x16xf32>
      %274 = tpu.matmul %273, %257, %cst_135 {dimension_numbers = #tpu.dot_dimension_numbers<[1], [0], [0], [1], [0, 0, 1, 1], [], []>} : vector<32x32xbf16>, vector<32x16xbf16>, vector<32x16xf32> -> vector<32x16xf32>
      %275 = arith.addf %272, %274 : vector<32x16xf32>
      scf.yield %261, %270, %275 : vector<32x1xf32>, vector<32x1xf32>, vector<32x16xf32>
    }
    %c2_i32_26 = arith.constant 2 : i32
    %54 = tpu.reciprocal %53#1 {approx = true} : vector<32x1xf32> -> vector<32x1xf32>
    %55 = vector.broadcast %54 : vector<32x1xf32> to vector<32x16xf32>
    %56 = arith.mulf %53#2, %55 : vector<32x16xf32>
    %57 = arith.truncf %56 : vector<32x16xf32> to vector<32x16xbf16>
    %58 = vector.extract_strided_slice %37 {offsets = [0, 32], sizes = [32, 16], strides = [1, 1]} : vector<32x64xbf16> to vector<32x16xbf16>
    %cst_27 = arith.constant 0xFF800000 : f32
    %59 = vector.broadcast %cst_27 : f32 to vector<32x1xf32>
    %cst_28 = arith.constant 0.000000e+00 : f32
    %60 = vector.broadcast %cst_28 : f32 to vector<32x1xf32>
    %cst_29 = arith.constant 0.000000e+00 : f32
    %61 = vector.broadcast %cst_29 : f32 to vector<32x16xf32>
    %c0_i32_30 = arith.constant 0 : i32
    %c2_i32_31 = arith.constant 2 : i32
    %62 = arith.addi %c0_i32_30, %c2_i32_31 : i32
    %c1_i32_32 = arith.constant 1 : i32
    %63:3 = scf.for %arg37 = %c0_i32_30 to %62 step %c1_i32_32 iter_args(%arg38 = %59, %arg39 = %60, %arg40 = %61) -> (vector<32x1xf32>, vector<32x1xf32>, vector<32x16xf32>)  : i32 {
      %c32_i32_129 = arith.constant 32 : i32
      %252 = arith.muli %arg37, %c32_i32_129 : i32
      %253 = tpu.assume_multiple %252, 32 : i32
      %254 = arith.index_cast %253 : i32 to index
      %c32_130 = arith.constant 32 : index
      %255 = vector.load %arg33[%254, %c32_130] : memref<64x64xbf16, #tpu.memory_space<vmem>>, vector<32x16xbf16>
      %256 = arith.index_cast %253 : i32 to index
      %c32_131 = arith.constant 32 : index
      %257 = vector.load %arg34[%256, %c32_131] : memref<64x64xbf16, #tpu.memory_space<vmem>>, vector<32x16xbf16>
      %cst_132 = arith.constant dense<0.000000e+00> : vector<32x32xf32>
      %258 = tpu.matmul %58, %255, %cst_132 {dimension_numbers = #tpu.dot_dimension_numbers<[1], [1], [0], [0], [0, 0, 1, 0], [], []>} : vector<32x16xbf16>, vector<32x16xbf16>, vector<32x32xf32> -> vector<32x32xf32>
      %cst_133 = arith.constant dense<0xFF800000> : vector<32xf32>
      %259 = vector.multi_reduction <maximumf>, %258, %cst_133 [1] : vector<32x32xf32> to vector<32xf32>
      %260 = vector.shape_cast %259 : vector<32xf32> to vector<32x1xf32>
      %261 = arith.maximumf %arg38, %260 : vector<32x1xf32>
      %262 = arith.subf %arg38, %261 : vector<32x1xf32>
      %263 = math.exp %262 : vector<32x1xf32>
      %264 = vector.broadcast %261 : vector<32x1xf32> to vector<32x32xf32>
      %265 = arith.subf %258, %264 : vector<32x32xf32>
      %266 = math.exp %265 : vector<32x32xf32>
      %267 = arith.mulf %263, %arg39 : vector<32x1xf32>
      %cst_134 = arith.constant dense<0.000000e+00> : vector<32xf32>
      %268 = vector.multi_reduction <add>, %266, %cst_134 [1] : vector<32x32xf32> to vector<32xf32>
      %269 = vector.shape_cast %268 : vector<32xf32> to vector<32x1xf32>
      %270 = arith.addf %267, %269 : vector<32x1xf32>
      %271 = vector.broadcast %263 : vector<32x1xf32> to vector<32x16xf32>
      %272 = arith.mulf %271, %arg40 : vector<32x16xf32>
      %273 = arith.truncf %266 : vector<32x32xf32> to vector<32x32xbf16>
      %cst_135 = arith.constant dense<0.000000e+00> : vector<32x16xf32>
      %274 = tpu.matmul %273, %257, %cst_135 {dimension_numbers = #tpu.dot_dimension_numbers<[1], [0], [0], [1], [0, 0, 1, 1], [], []>} : vector<32x32xbf16>, vector<32x16xbf16>, vector<32x16xf32> -> vector<32x16xf32>
      %275 = arith.addf %272, %274 : vector<32x16xf32>
      scf.yield %261, %270, %275 : vector<32x1xf32>, vector<32x1xf32>, vector<32x16xf32>
    }
    %c2_i32_33 = arith.constant 2 : i32
    %64 = tpu.reciprocal %63#1 {approx = true} : vector<32x1xf32> -> vector<32x1xf32>
    %65 = vector.broadcast %64 : vector<32x1xf32> to vector<32x16xf32>
    %66 = arith.mulf %63#2, %65 : vector<32x16xf32>
    %67 = arith.truncf %66 : vector<32x16xf32> to vector<32x16xbf16>
    %68 = vector.extract_strided_slice %37 {offsets = [0, 48], sizes = [32, 16], strides = [1, 1]} : vector<32x64xbf16> to vector<32x16xbf16>
    %cst_34 = arith.constant 0xFF800000 : f32
    %69 = vector.broadcast %cst_34 : f32 to vector<32x1xf32>
    %cst_35 = arith.constant 0.000000e+00 : f32
    %70 = vector.broadcast %cst_35 : f32 to vector<32x1xf32>
    %cst_36 = arith.constant 0.000000e+00 : f32
    %71 = vector.broadcast %cst_36 : f32 to vector<32x16xf32>
    %c0_i32_37 = arith.constant 0 : i32
    %c2_i32_38 = arith.constant 2 : i32
    %72 = arith.addi %c0_i32_37, %c2_i32_38 : i32
    %c1_i32_39 = arith.constant 1 : i32
    %73:3 = scf.for %arg37 = %c0_i32_37 to %72 step %c1_i32_39 iter_args(%arg38 = %69, %arg39 = %70, %arg40 = %71) -> (vector<32x1xf32>, vector<32x1xf32>, vector<32x16xf32>)  : i32 {
      %c32_i32_129 = arith.constant 32 : i32
      %252 = arith.muli %arg37, %c32_i32_129 : i32
      %253 = tpu.assume_multiple %252, 32 : i32
      %254 = arith.index_cast %253 : i32 to index
      %c48_130 = arith.constant 48 : index
      %255 = vector.load %arg33[%254, %c48_130] : memref<64x64xbf16, #tpu.memory_space<vmem>>, vector<32x16xbf16>
      %256 = arith.index_cast %253 : i32 to index
      %c48_131 = arith.constant 48 : index
      %257 = vector.load %arg34[%256, %c48_131] : memref<64x64xbf16, #tpu.memory_space<vmem>>, vector<32x16xbf16>
      %cst_132 = arith.constant dense<0.000000e+00> : vector<32x32xf32>
      %258 = tpu.matmul %68, %255, %cst_132 {dimension_numbers = #tpu.dot_dimension_numbers<[1], [1], [0], [0], [0, 0, 1, 0], [], []>} : vector<32x16xbf16>, vector<32x16xbf16>, vector<32x32xf32> -> vector<32x32xf32>
      %cst_133 = arith.constant dense<0xFF800000> : vector<32xf32>
      %259 = vector.multi_reduction <maximumf>, %258, %cst_133 [1] : vector<32x32xf32> to vector<32xf32>
      %260 = vector.shape_cast %259 : vector<32xf32> to vector<32x1xf32>
      %261 = arith.maximumf %arg38, %260 : vector<32x1xf32>
      %262 = arith.subf %arg38, %261 : vector<32x1xf32>
      %263 = math.exp %262 : vector<32x1xf32>
      %264 = vector.broadcast %261 : vector<32x1xf32> to vector<32x32xf32>
      %265 = arith.subf %258, %264 : vector<32x32xf32>
      %266 = math.exp %265 : vector<32x32xf32>
      %267 = arith.mulf %263, %arg39 : vector<32x1xf32>
      %cst_134 = arith.constant dense<0.000000e+00> : vector<32xf32>
      %268 = vector.multi_reduction <add>, %266, %cst_134 [1] : vector<32x32xf32> to vector<32xf32>
      %269 = vector.shape_cast %268 : vector<32xf32> to vector<32x1xf32>
      %270 = arith.addf %267, %269 : vector<32x1xf32>
      %271 = vector.broadcast %263 : vector<32x1xf32> to vector<32x16xf32>
      %272 = arith.mulf %271, %arg40 : vector<32x16xf32>
      %273 = arith.truncf %266 : vector<32x32xf32> to vector<32x32xbf16>
      %cst_135 = arith.constant dense<0.000000e+00> : vector<32x16xf32>
      %274 = tpu.matmul %273, %257, %cst_135 {dimension_numbers = #tpu.dot_dimension_numbers<[1], [0], [0], [1], [0, 0, 1, 1], [], []>} : vector<32x32xbf16>, vector<32x16xbf16>, vector<32x16xf32> -> vector<32x16xf32>
      %275 = arith.addf %272, %274 : vector<32x16xf32>
      scf.yield %261, %270, %275 : vector<32x1xf32>, vector<32x1xf32>, vector<32x16xf32>
    }
    %c2_i32_40 = arith.constant 2 : i32
    %74 = tpu.reciprocal %73#1 {approx = true} : vector<32x1xf32> -> vector<32x1xf32>
    %75 = vector.broadcast %74 : vector<32x1xf32> to vector<32x16xf32>
    %76 = arith.mulf %73#2, %75 : vector<32x16xf32>
    %77 = arith.truncf %76 : vector<32x16xf32> to vector<32x16xbf16>
    %78 = tpu.concatenate %47, %57, %67, %77 in 1 : vector<32x16xbf16>, vector<32x16xbf16>, vector<32x16xbf16>, vector<32x16xbf16> -> vector<32x64xbf16>
    %c0_41 = arith.constant 0 : index
    %c0_42 = arith.constant 0 : index
    %79 = vector.load %arg12[%c0_41, %c0_42] : memref<64x64xbf16, #tpu.memory_space<vmem>>, vector<64x64xbf16>
    %cst_43 = arith.constant dense<0.000000e+00> : vector<32x64xf32>
    %80 = tpu.matmul %78, %79, %cst_43 {dimension_numbers = #tpu.dot_dimension_numbers<[1], [0], [0], [1], [0, 0, 1, 1], [], []>} : vector<32x64xbf16>, vector<64x64xbf16>, vector<32x64xf32> -> vector<32x64xf32>
    %c0_44 = arith.constant 0 : index
    %c0_45 = arith.constant 0 : index
    %81 = vector.load %arg13[%c0_44, %c0_45] : memref<1x64xf32, #tpu.memory_space<vmem>>, vector<1x64xf32>
    %82 = vector.broadcast %81 : vector<1x64xf32> to vector<32x64xf32>
    %83 = arith.addf %80, %82 : vector<32x64xf32>
    %84 = arith.addf %83, %6 : vector<32x64xf32>
    %c0_46 = arith.constant 0 : index
    %c0_47 = arith.constant 0 : index
    %85 = vector.load %arg14[%c0_46, %c0_47] : memref<1x64xf32, #tpu.memory_space<vmem>>, vector<1x64xf32>
    %c0_48 = arith.constant 0 : index
    %c0_49 = arith.constant 0 : index
    %86 = vector.load %arg15[%c0_48, %c0_49] : memref<1x64xf32, #tpu.memory_space<vmem>>, vector<1x64xf32>
    %cst_50 = arith.constant dense<0.000000e+00> : vector<32xf32>
    %87 = vector.multi_reduction <add>, %84, %cst_50 [1] : vector<32x64xf32> to vector<32xf32>
    %88 = vector.shape_cast %87 : vector<32xf32> to vector<32x1xf32>
    %cst_51 = arith.constant 6.400000e+01 : f32
    %89 = vector.broadcast %cst_51 : f32 to vector<32x1xf32>
    %90 = arith.divf %88, %89 : vector<32x1xf32>
    %91 = vector.broadcast %90 : vector<32x1xf32> to vector<32x64xf32>
    %92 = arith.subf %84, %91 : vector<32x64xf32>
    %93 = arith.mulf %92, %92 : vector<32x64xf32>
    %cst_52 = arith.constant dense<0.000000e+00> : vector<32xf32>
    %94 = vector.multi_reduction <add>, %93, %cst_52 [1] : vector<32x64xf32> to vector<32xf32>
    %95 = vector.shape_cast %94 : vector<32xf32> to vector<32x1xf32>
    %cst_53 = arith.constant 6.400000e+01 : f32
    %96 = vector.broadcast %cst_53 : f32 to vector<32x1xf32>
    %97 = arith.divf %95, %96 : vector<32x1xf32>
    %cst_54 = arith.constant 9.99999974E-6 : f32
    %98 = vector.broadcast %cst_54 : f32 to vector<32x1xf32>
    %99 = arith.addf %97, %98 : vector<32x1xf32>
    %100 = math.rsqrt %99 : vector<32x1xf32>
    %101 = vector.broadcast %100 : vector<32x1xf32> to vector<32x64xf32>
    %102 = vector.broadcast %85 : vector<1x64xf32> to vector<32x64xf32>
    %103 = arith.mulf %101, %102 : vector<32x64xf32>
    %104 = arith.mulf %92, %103 : vector<32x64xf32>
    %105 = vector.broadcast %86 : vector<1x64xf32> to vector<32x64xf32>
    %106 = arith.addf %104, %105 : vector<32x64xf32>
    %107 = arith.truncf %106 : vector<32x64xf32> to vector<32x64xbf16>
    %c0_55 = arith.constant 0 : index
    %c0_56 = arith.constant 0 : index
    %108 = vector.load %arg16[%c0_55, %c0_56] : memref<64x64xbf16, #tpu.memory_space<vmem>>, vector<64x64xbf16>
    %cst_57 = arith.constant dense<0.000000e+00> : vector<32x64xf32>
    %109 = tpu.matmul %107, %108, %cst_57 {dimension_numbers = #tpu.dot_dimension_numbers<[1], [0], [0], [1], [0, 0, 1, 1], [], []>} : vector<32x64xbf16>, vector<64x64xbf16>, vector<32x64xf32> -> vector<32x64xf32>
    %cst_58 = arith.constant 2.500000e-01 : f32
    %110 = vector.broadcast %cst_58 : f32 to vector<32x64xf32>
    %111 = arith.mulf %109, %110 : vector<32x64xf32>
    %112 = arith.truncf %111 : vector<32x64xf32> to vector<32x64xbf16>
    %113 = vector.extract_strided_slice %112 {offsets = [0, 0], sizes = [32, 16], strides = [1, 1]} : vector<32x64xbf16> to vector<32x16xbf16>
    %c0_59 = arith.constant 0 : index
    %c0_60 = arith.constant 0 : index
    %114 = vector.load %arg35[%c0_59, %c0_60] : memref<16x64xbf16, #tpu.memory_space<vmem>>, vector<16x16xbf16>
    %cst_61 = arith.constant dense<0.000000e+00> : vector<32x16xf32>
    %115 = tpu.matmul %113, %114, %cst_61 {dimension_numbers = #tpu.dot_dimension_numbers<[1], [1], [0], [0], [0, 0, 1, 0], [], []>} : vector<32x16xbf16>, vector<16x16xbf16>, vector<32x16xf32> -> vector<32x16xf32>
    %cst_62 = arith.constant dense<0xFF800000> : vector<32xf32>
    %116 = vector.multi_reduction <maximumf>, %115, %cst_62 [1] : vector<32x16xf32> to vector<32xf32>
    %117 = vector.shape_cast %116 : vector<32xf32> to vector<32x1xf32>
    %118 = vector.broadcast %117 : vector<32x1xf32> to vector<32x16xf32>
    %119 = arith.subf %115, %118 : vector<32x16xf32>
    %120 = math.exp %119 : vector<32x16xf32>
    %cst_63 = arith.constant dense<0.000000e+00> : vector<32xf32>
    %121 = vector.multi_reduction <add>, %120, %cst_63 [1] : vector<32x16xf32> to vector<32xf32>
    %122 = vector.shape_cast %121 : vector<32xf32> to vector<32x1xf32>
    %123 = tpu.reciprocal %122 {approx = true} : vector<32x1xf32> -> vector<32x1xf32>
    %124 = vector.broadcast %123 : vector<32x1xf32> to vector<32x16xf32>
    %125 = arith.mulf %120, %124 : vector<32x16xf32>
    %126 = arith.truncf %125 : vector<32x16xf32> to vector<32x16xbf16>
    %c0_64 = arith.constant 0 : index
    %c0_65 = arith.constant 0 : index
    %127 = vector.load %arg36[%c0_64, %c0_65] : memref<16x64xbf16, #tpu.memory_space<vmem>>, vector<16x16xbf16>
    %cst_66 = arith.constant dense<0.000000e+00> : vector<32x16xf32>
    %128 = tpu.matmul %126, %127, %cst_66 {dimension_numbers = #tpu.dot_dimension_numbers<[1], [0], [0], [1], [0, 0, 1, 1], [], []>} : vector<32x16xbf16>, vector<16x16xbf16>, vector<32x16xf32> -> vector<32x16xf32>
    %129 = arith.truncf %128 : vector<32x16xf32> to vector<32x16xbf16>
    %130 = vector.extract_strided_slice %112 {offsets = [0, 16], sizes = [32, 16], strides = [1, 1]} : vector<32x64xbf16> to vector<32x16xbf16>
    %c0_67 = arith.constant 0 : index
    %c16 = arith.constant 16 : index
    %131 = vector.load %arg35[%c0_67, %c16] : memref<16x64xbf16, #tpu.memory_space<vmem>>, vector<16x16xbf16>
    %cst_68 = arith.constant dense<0.000000e+00> : vector<32x16xf32>
    %132 = tpu.matmul %130, %131, %cst_68 {dimension_numbers = #tpu.dot_dimension_numbers<[1], [1], [0], [0], [0, 0, 1, 0], [], []>} : vector<32x16xbf16>, vector<16x16xbf16>, vector<32x16xf32> -> vector<32x16xf32>
    %cst_69 = arith.constant dense<0xFF800000> : vector<32xf32>
    %133 = vector.multi_reduction <maximumf>, %132, %cst_69 [1] : vector<32x16xf32> to vector<32xf32>
    %134 = vector.shape_cast %133 : vector<32xf32> to vector<32x1xf32>
    %135 = vector.broadcast %134 : vector<32x1xf32> to vector<32x16xf32>
    %136 = arith.subf %132, %135 : vector<32x16xf32>
    %137 = math.exp %136 : vector<32x16xf32>
    %cst_70 = arith.constant dense<0.000000e+00> : vector<32xf32>
    %138 = vector.multi_reduction <add>, %137, %cst_70 [1] : vector<32x16xf32> to vector<32xf32>
    %139 = vector.shape_cast %138 : vector<32xf32> to vector<32x1xf32>
    %140 = tpu.reciprocal %139 {approx = true} : vector<32x1xf32> -> vector<32x1xf32>
    %141 = vector.broadcast %140 : vector<32x1xf32> to vector<32x16xf32>
    %142 = arith.mulf %137, %141 : vector<32x16xf32>
    %143 = arith.truncf %142 : vector<32x16xf32> to vector<32x16xbf16>
    %c0_71 = arith.constant 0 : index
    %c16_72 = arith.constant 16 : index
    %144 = vector.load %arg36[%c0_71, %c16_72] : memref<16x64xbf16, #tpu.memory_space<vmem>>, vector<16x16xbf16>
    %cst_73 = arith.constant dense<0.000000e+00> : vector<32x16xf32>
    %145 = tpu.matmul %143, %144, %cst_73 {dimension_numbers = #tpu.dot_dimension_numbers<[1], [0], [0], [1], [0, 0, 1, 1], [], []>} : vector<32x16xbf16>, vector<16x16xbf16>, vector<32x16xf32> -> vector<32x16xf32>
    %146 = arith.truncf %145 : vector<32x16xf32> to vector<32x16xbf16>
    %147 = vector.extract_strided_slice %112 {offsets = [0, 32], sizes = [32, 16], strides = [1, 1]} : vector<32x64xbf16> to vector<32x16xbf16>
    %c0_74 = arith.constant 0 : index
    %c32 = arith.constant 32 : index
    %148 = vector.load %arg35[%c0_74, %c32] : memref<16x64xbf16, #tpu.memory_space<vmem>>, vector<16x16xbf16>
    %cst_75 = arith.constant dense<0.000000e+00> : vector<32x16xf32>
    %149 = tpu.matmul %147, %148, %cst_75 {dimension_numbers = #tpu.dot_dimension_numbers<[1], [1], [0], [0], [0, 0, 1, 0], [], []>} : vector<32x16xbf16>, vector<16x16xbf16>, vector<32x16xf32> -> vector<32x16xf32>
    %cst_76 = arith.constant dense<0xFF800000> : vector<32xf32>
    %150 = vector.multi_reduction <maximumf>, %149, %cst_76 [1] : vector<32x16xf32> to vector<32xf32>
    %151 = vector.shape_cast %150 : vector<32xf32> to vector<32x1xf32>
    %152 = vector.broadcast %151 : vector<32x1xf32> to vector<32x16xf32>
    %153 = arith.subf %149, %152 : vector<32x16xf32>
    %154 = math.exp %153 : vector<32x16xf32>
    %cst_77 = arith.constant dense<0.000000e+00> : vector<32xf32>
    %155 = vector.multi_reduction <add>, %154, %cst_77 [1] : vector<32x16xf32> to vector<32xf32>
    %156 = vector.shape_cast %155 : vector<32xf32> to vector<32x1xf32>
    %157 = tpu.reciprocal %156 {approx = true} : vector<32x1xf32> -> vector<32x1xf32>
    %158 = vector.broadcast %157 : vector<32x1xf32> to vector<32x16xf32>
    %159 = arith.mulf %154, %158 : vector<32x16xf32>
    %160 = arith.truncf %159 : vector<32x16xf32> to vector<32x16xbf16>
    %c0_78 = arith.constant 0 : index
    %c32_79 = arith.constant 32 : index
    %161 = vector.load %arg36[%c0_78, %c32_79] : memref<16x64xbf16, #tpu.memory_space<vmem>>, vector<16x16xbf16>
    %cst_80 = arith.constant dense<0.000000e+00> : vector<32x16xf32>
    %162 = tpu.matmul %160, %161, %cst_80 {dimension_numbers = #tpu.dot_dimension_numbers<[1], [0], [0], [1], [0, 0, 1, 1], [], []>} : vector<32x16xbf16>, vector<16x16xbf16>, vector<32x16xf32> -> vector<32x16xf32>
    %163 = arith.truncf %162 : vector<32x16xf32> to vector<32x16xbf16>
    %164 = vector.extract_strided_slice %112 {offsets = [0, 48], sizes = [32, 16], strides = [1, 1]} : vector<32x64xbf16> to vector<32x16xbf16>
    %c0_81 = arith.constant 0 : index
    %c48 = arith.constant 48 : index
    %165 = vector.load %arg35[%c0_81, %c48] : memref<16x64xbf16, #tpu.memory_space<vmem>>, vector<16x16xbf16>
    %cst_82 = arith.constant dense<0.000000e+00> : vector<32x16xf32>
    %166 = tpu.matmul %164, %165, %cst_82 {dimension_numbers = #tpu.dot_dimension_numbers<[1], [1], [0], [0], [0, 0, 1, 0], [], []>} : vector<32x16xbf16>, vector<16x16xbf16>, vector<32x16xf32> -> vector<32x16xf32>
    %cst_83 = arith.constant dense<0xFF800000> : vector<32xf32>
    %167 = vector.multi_reduction <maximumf>, %166, %cst_83 [1] : vector<32x16xf32> to vector<32xf32>
    %168 = vector.shape_cast %167 : vector<32xf32> to vector<32x1xf32>
    %169 = vector.broadcast %168 : vector<32x1xf32> to vector<32x16xf32>
    %170 = arith.subf %166, %169 : vector<32x16xf32>
    %171 = math.exp %170 : vector<32x16xf32>
    %cst_84 = arith.constant dense<0.000000e+00> : vector<32xf32>
    %172 = vector.multi_reduction <add>, %171, %cst_84 [1] : vector<32x16xf32> to vector<32xf32>
    %173 = vector.shape_cast %172 : vector<32xf32> to vector<32x1xf32>
    %174 = tpu.reciprocal %173 {approx = true} : vector<32x1xf32> -> vector<32x1xf32>
    %175 = vector.broadcast %174 : vector<32x1xf32> to vector<32x16xf32>
    %176 = arith.mulf %171, %175 : vector<32x16xf32>
    %177 = arith.truncf %176 : vector<32x16xf32> to vector<32x16xbf16>
    %c0_85 = arith.constant 0 : index
    %c48_86 = arith.constant 48 : index
    %178 = vector.load %arg36[%c0_85, %c48_86] : memref<16x64xbf16, #tpu.memory_space<vmem>>, vector<16x16xbf16>
    %cst_87 = arith.constant dense<0.000000e+00> : vector<32x16xf32>
    %179 = tpu.matmul %177, %178, %cst_87 {dimension_numbers = #tpu.dot_dimension_numbers<[1], [0], [0], [1], [0, 0, 1, 1], [], []>} : vector<32x16xbf16>, vector<16x16xbf16>, vector<32x16xf32> -> vector<32x16xf32>
    %180 = arith.truncf %179 : vector<32x16xf32> to vector<32x16xbf16>
    %181 = tpu.concatenate %129, %146, %163, %180 in 1 : vector<32x16xbf16>, vector<32x16xbf16>, vector<32x16xbf16>, vector<32x16xbf16> -> vector<32x64xbf16>
    %c0_88 = arith.constant 0 : index
    %c0_89 = arith.constant 0 : index
    %182 = vector.load %arg19[%c0_88, %c0_89] : memref<64x64xbf16, #tpu.memory_space<vmem>>, vector<64x64xbf16>
    %cst_90 = arith.constant dense<0.000000e+00> : vector<32x64xf32>
    %183 = tpu.matmul %181, %182, %cst_90 {dimension_numbers = #tpu.dot_dimension_numbers<[1], [0], [0], [1], [0, 0, 1, 1], [], []>} : vector<32x64xbf16>, vector<64x64xbf16>, vector<32x64xf32> -> vector<32x64xf32>
    %c0_91 = arith.constant 0 : index
    %c0_92 = arith.constant 0 : index
    %184 = vector.load %arg20[%c0_91, %c0_92] : memref<1x64xf32, #tpu.memory_space<vmem>>, vector<1x64xf32>
    %185 = vector.broadcast %184 : vector<1x64xf32> to vector<32x64xf32>
    %186 = arith.addf %183, %185 : vector<32x64xf32>
    %187 = arith.addf %186, %84 : vector<32x64xf32>
    %c0_93 = arith.constant 0 : index
    %c0_94 = arith.constant 0 : index
    %188 = vector.load %arg21[%c0_93, %c0_94] : memref<1x64xf32, #tpu.memory_space<vmem>>, vector<1x64xf32>
    %c0_95 = arith.constant 0 : index
    %c0_96 = arith.constant 0 : index
    %189 = vector.load %arg22[%c0_95, %c0_96] : memref<1x64xf32, #tpu.memory_space<vmem>>, vector<1x64xf32>
    %cst_97 = arith.constant dense<0.000000e+00> : vector<32xf32>
    %190 = vector.multi_reduction <add>, %187, %cst_97 [1] : vector<32x64xf32> to vector<32xf32>
    %191 = vector.shape_cast %190 : vector<32xf32> to vector<32x1xf32>
    %cst_98 = arith.constant 6.400000e+01 : f32
    %192 = vector.broadcast %cst_98 : f32 to vector<32x1xf32>
    %193 = arith.divf %191, %192 : vector<32x1xf32>
    %194 = vector.broadcast %193 : vector<32x1xf32> to vector<32x64xf32>
    %195 = arith.subf %187, %194 : vector<32x64xf32>
    %196 = arith.mulf %195, %195 : vector<32x64xf32>
    %cst_99 = arith.constant dense<0.000000e+00> : vector<32xf32>
    %197 = vector.multi_reduction <add>, %196, %cst_99 [1] : vector<32x64xf32> to vector<32xf32>
    %198 = vector.shape_cast %197 : vector<32xf32> to vector<32x1xf32>
    %cst_100 = arith.constant 6.400000e+01 : f32
    %199 = vector.broadcast %cst_100 : f32 to vector<32x1xf32>
    %200 = arith.divf %198, %199 : vector<32x1xf32>
    %cst_101 = arith.constant 9.99999974E-6 : f32
    %201 = vector.broadcast %cst_101 : f32 to vector<32x1xf32>
    %202 = arith.addf %200, %201 : vector<32x1xf32>
    %203 = math.rsqrt %202 : vector<32x1xf32>
    %204 = vector.broadcast %203 : vector<32x1xf32> to vector<32x64xf32>
    %205 = vector.broadcast %188 : vector<1x64xf32> to vector<32x64xf32>
    %206 = arith.mulf %204, %205 : vector<32x64xf32>
    %207 = arith.mulf %195, %206 : vector<32x64xf32>
    %208 = vector.broadcast %189 : vector<1x64xf32> to vector<32x64xf32>
    %209 = arith.addf %207, %208 : vector<32x64xf32>
    %210 = arith.truncf %209 : vector<32x64xf32> to vector<32x64xbf16>
    %c0_102 = arith.constant 0 : index
    %c0_103 = arith.constant 0 : index
    %211 = vector.load %arg23[%c0_102, %c0_103] : memref<64x256xbf16, #tpu.memory_space<vmem>>, vector<64x256xbf16>
    %cst_104 = arith.constant dense<0.000000e+00> : vector<32x256xf32>
    %212 = tpu.matmul %210, %211, %cst_104 {dimension_numbers = #tpu.dot_dimension_numbers<[1], [0], [0], [1], [0, 0, 1, 1], [], []>} : vector<32x64xbf16>, vector<64x256xbf16>, vector<32x256xf32> -> vector<32x256xf32>
    %c0_105 = arith.constant 0 : index
    %c0_106 = arith.constant 0 : index
    %213 = vector.load %arg24[%c0_105, %c0_106] : memref<1x256xf32, #tpu.memory_space<vmem>>, vector<1x256xf32>
    %214 = vector.broadcast %213 : vector<1x256xf32> to vector<32x256xf32>
    %215 = arith.addf %212, %214 : vector<32x256xf32>
    %c0_107 = arith.constant 0 : index
    %c0_108 = arith.constant 0 : index
    %216 = vector.load %arg25[%c0_107, %c0_108] : memref<64x256xbf16, #tpu.memory_space<vmem>>, vector<64x256xbf16>
    %cst_109 = arith.constant dense<0.000000e+00> : vector<32x256xf32>
    %217 = tpu.matmul %210, %216, %cst_109 {dimension_numbers = #tpu.dot_dimension_numbers<[1], [0], [0], [1], [0, 0, 1, 1], [], []>} : vector<32x64xbf16>, vector<64x256xbf16>, vector<32x256xf32> -> vector<32x256xf32>
    %c0_110 = arith.constant 0 : index
    %c0_111 = arith.constant 0 : index
    %218 = vector.load %arg26[%c0_110, %c0_111] : memref<1x256xf32, #tpu.memory_space<vmem>>, vector<1x256xf32>
    %219 = vector.broadcast %218 : vector<1x256xf32> to vector<32x256xf32>
    %220 = arith.addf %217, %219 : vector<32x256xf32>
    %cst_112 = arith.constant 5.000000e-01 : f32
    %221 = vector.broadcast %cst_112 : f32 to vector<32x256xf32>
    %222 = arith.mulf %221, %220 : vector<32x256xf32>
    %223 = arith.mulf %220, %220 : vector<32x256xf32>
    %224 = arith.mulf %223, %220 : vector<32x256xf32>
    %cst_113 = arith.constant 4.471500e-02 : f32
    %225 = vector.broadcast %cst_113 : f32 to vector<32x256xf32>
    %226 = arith.mulf %225, %224 : vector<32x256xf32>
    %227 = arith.addf %220, %226 : vector<32x256xf32>
    %cst_114 = arith.constant 0.797884583 : f32
    %228 = vector.broadcast %cst_114 : f32 to vector<32x256xf32>
    %229 = arith.mulf %228, %227 : vector<32x256xf32>
    %230 = math.tanh %229 : vector<32x256xf32>
    %cst_115 = arith.constant 1.000000e+00 : f32
    %231 = vector.broadcast %cst_115 : f32 to vector<32x256xf32>
    %232 = arith.addf %231, %230 : vector<32x256xf32>
    %233 = arith.mulf %222, %232 : vector<32x256xf32>
    %234 = arith.mulf %215, %233 : vector<32x256xf32>
    %235 = arith.truncf %234 : vector<32x256xf32> to vector<32x256xbf16>
    %c0_116 = arith.constant 0 : index
    %c0_117 = arith.constant 0 : index
    %236 = vector.load %arg27[%c0_116, %c0_117] : memref<256x64xbf16, #tpu.memory_space<vmem>>, vector<256x64xbf16>
    %cst_118 = arith.constant dense<0.000000e+00> : vector<32x64xf32>
    %237 = tpu.matmul %235, %236, %cst_118 {dimension_numbers = #tpu.dot_dimension_numbers<[1], [0], [0], [1], [0, 0, 1, 1], [], []>} : vector<32x256xbf16>, vector<256x64xbf16>, vector<32x64xf32> -> vector<32x64xf32>
    %c0_119 = arith.constant 0 : index
    %c0_120 = arith.constant 0 : index
    %238 = vector.load %arg28[%c0_119, %c0_120] : memref<1x64xf32, #tpu.memory_space<vmem>>, vector<1x64xf32>
    %239 = vector.broadcast %238 : vector<1x64xf32> to vector<32x64xf32>
    %240 = arith.addf %237, %239 : vector<32x64xf32>
    %241 = arith.addf %240, %187 : vector<32x64xf32>
    %242 = arith.truncf %241 : vector<32x64xf32> to vector<32x64xbf16>
    %c0_121 = arith.constant 0 : index
    %c0_122 = arith.constant 0 : index
    %243 = vector.load %arg29[%c0_121, %c0_122] : memref<64x64xbf16, #tpu.memory_space<vmem>>, vector<64x64xbf16>
    %cst_123 = arith.constant dense<0.000000e+00> : vector<32x64xf32>
    %244 = tpu.matmul %242, %243, %cst_123 {dimension_numbers = #tpu.dot_dimension_numbers<[1], [0], [0], [1], [0, 0, 1, 1], [], []>} : vector<32x64xbf16>, vector<64x64xbf16>, vector<32x64xf32> -> vector<32x64xf32>
    %c0_124 = arith.constant 0 : index
    %c0_125 = arith.constant 0 : index
    %245 = vector.load %arg30[%c0_124, %c0_125] : memref<1x64xf32, #tpu.memory_space<vmem>>, vector<1x64xf32>
    %246 = vector.broadcast %245 : vector<1x64xf32> to vector<32x64xf32>
    %247 = arith.addf %244, %246 : vector<32x64xf32>
    %248 = arith.addf %247, %9 : vector<32x64xf32>
    %c0_126 = arith.constant 0 : index
    %c0_127 = arith.constant 0 : index
    %c0_128 = arith.constant 0 : index
    %249 = vector.load %arg31[%c0_126, %c0_127, %c0_128] : memref<1x32x64xf32, #tpu.memory_space<vmem>>, vector<1x32x64xf32>
    %250 = vector.shape_cast %249 : vector<1x32x64xf32> to vector<32x64xf32>
    %251 = vector.shape_cast %248 : vector<32x64xf32> to vector<1x32x64xf32>
    tpu.vector_store %arg31[%c0_126, %c0_127, %c0_128], %251 {strides = array<i32>} : memref<1x32x64xf32, #tpu.memory_space<vmem>>, vector<1x32x64xf32>,
    return
  }
  func.func @transform_0(%arg0: i32, %arg1: i32) -> (i32, i32, i32) {
    %c0_i32 = arith.constant 0 : i32
    %c0_i32_0 = arith.constant 0 : i32
    %c0_i32_1 = arith.constant 0 : i32
    return %arg0, %c0_i32, %c0_i32_0 : i32, i32, i32
  }
  func.func @transform_1(%arg0: i32, %arg1: i32) -> (i32, i32, i32) {
    %c0_i32 = arith.constant 0 : i32
    %c0_i32_0 = arith.constant 0 : i32
    %c0_i32_1 = arith.constant 0 : i32
    return %arg0, %c0_i32, %c0_i32_0 : i32, i32, i32
  }
  func.func @transform_2(%arg0: i32, %arg1: i32) -> (i32, i32, i32) {
    %c0_i32 = arith.constant 0 : i32
    %c0_i32_0 = arith.constant 0 : i32
    %c0_i32_1 = arith.constant 0 : i32
    return %arg0, %c0_i32, %c0_i32_0 : i32, i32, i32
  }
  func.func @transform_3(%arg0: i32, %arg1: i32) -> (i32, i32) {
    %c0_i32 = arith.constant 0 : i32
    %c0_i32_0 = arith.constant 0 : i32
    %c0_i32_1 = arith.constant 0 : i32
    return %c0_i32, %c0_i32_0 : i32, i32
  }
  func.func @transform_4(%arg0: i32, %arg1: i32) -> (i32, i32) {
    %c0_i32 = arith.constant 0 : i32
    %c0_i32_0 = arith.constant 0 : i32
    %c0_i32_1 = arith.constant 0 : i32
    return %c0_i32, %c0_i32_0 : i32, i32
  }
  func.func @transform_5(%arg0: i32, %arg1: i32) -> (i32, i32) {
    %c0_i32 = arith.constant 0 : i32
    %c0_i32_0 = arith.constant 0 : i32
    %c0_i32_1 = arith.constant 0 : i32
    return %c0_i32, %c0_i32_0 : i32, i32
  }
  func.func @transform_6(%arg0: i32, %arg1: i32) -> (i32, i32) {
    %c0_i32 = arith.constant 0 : i32
    %c0_i32_0 = arith.constant 0 : i32
    %c0_i32_1 = arith.constant 0 : i32
    return %c0_i32, %c0_i32_0 : i32, i32
  }
  func.func @transform_7(%arg0: i32, %arg1: i32) -> (i32, i32) {
    %c0_i32 = arith.constant 0 : i32
    %c0_i32_0 = arith.constant 0 : i32
    %c0_i32_1 = arith.constant 0 : i32
    return %c0_i32, %c0_i32_0 : i32, i32
  }
  func.func @transform_8(%arg0: i32, %arg1: i32) -> (i32, i32) {
    %c0_i32 = arith.constant 0 : i32
    %c0_i32_0 = arith.constant 0 : i32
    %c0_i32_1 = arith.constant 0 : i32
    return %c0_i32, %c0_i32_0 : i32, i32
  }
  func.func @transform_9(%arg0: i32, %arg1: i32) -> (i32, i32) {
    %c0_i32 = arith.constant 0 : i32
    %c0_i32_0 = arith.constant 0 : i32
    %c0_i32_1 = arith.constant 0 : i32
    return %c0_i32, %c0_i32_0 : i32, i32
  }
  func.func @transform_10(%arg0: i32, %arg1: i32) -> (i32, i32) {
    %c0_i32 = arith.constant 0 : i32
    %c0_i32_0 = arith.constant 0 : i32
    %c0_i32_1 = arith.constant 0 : i32
    return %c0_i32, %c0_i32_0 : i32, i32
  }
  func.func @transform_11(%arg0: i32, %arg1: i32) -> (i32, i32) {
    %c0_i32 = arith.constant 0 : i32
    %c0_i32_0 = arith.constant 0 : i32
    %c0_i32_1 = arith.constant 0 : i32
    return %c0_i32, %c0_i32_0 : i32, i32
  }
  func.func @transform_12(%arg0: i32, %arg1: i32) -> (i32, i32) {
    %c0_i32 = arith.constant 0 : i32
    %c0_i32_0 = arith.constant 0 : i32
    %c0_i32_1 = arith.constant 0 : i32
    return %c0_i32, %c0_i32_0 : i32, i32
  }
  func.func @transform_13(%arg0: i32, %arg1: i32) -> (i32, i32) {
    %c0_i32 = arith.constant 0 : i32
    %c0_i32_0 = arith.constant 0 : i32
    %c0_i32_1 = arith.constant 0 : i32
    return %c0_i32, %c0_i32_0 : i32, i32
  }
  func.func @transform_14(%arg0: i32, %arg1: i32) -> (i32, i32) {
    %c0_i32 = arith.constant 0 : i32
    %c0_i32_0 = arith.constant 0 : i32
    %c0_i32_1 = arith.constant 0 : i32
    return %c0_i32, %c0_i32_0 : i32, i32
  }
  func.func @transform_15(%arg0: i32, %arg1: i32) -> (i32, i32) {
    %c0_i32 = arith.constant 0 : i32
    %c0_i32_0 = arith.constant 0 : i32
    %c0_i32_1 = arith.constant 0 : i32
    return %c0_i32, %c0_i32_0 : i32, i32
  }
  func.func @transform_16(%arg0: i32, %arg1: i32) -> (i32, i32) {
    %c0_i32 = arith.constant 0 : i32
    %c0_i32_0 = arith.constant 0 : i32
    %c0_i32_1 = arith.constant 0 : i32
    return %c0_i32, %c0_i32_0 : i32, i32
  }
  func.func @transform_17(%arg0: i32, %arg1: i32) -> (i32, i32) {
    %c0_i32 = arith.constant 0 : i32
    %c0_i32_0 = arith.constant 0 : i32
    %c0_i32_1 = arith.constant 0 : i32
    return %c0_i32, %c0_i32_0 : i32, i32
  }
  func.func @transform_18(%arg0: i32, %arg1: i32) -> (i32, i32) {
    %c0_i32 = arith.constant 0 : i32
    %c0_i32_0 = arith.constant 0 : i32
    %c0_i32_1 = arith.constant 0 : i32
    return %c0_i32, %c0_i32_0 : i32, i32
  }
  func.func @transform_19(%arg0: i32, %arg1: i32) -> (i32, i32) {
    %c0_i32 = arith.constant 0 : i32
    %c0_i32_0 = arith.constant 0 : i32
    %c0_i32_1 = arith.constant 0 : i32
    return %c0_i32, %c0_i32_0 : i32, i32
  }
  func.func @transform_20(%arg0: i32, %arg1: i32) -> (i32, i32) {
    %c0_i32 = arith.constant 0 : i32
    %c0_i32_0 = arith.constant 0 : i32
    %c0_i32_1 = arith.constant 0 : i32
    return %c0_i32, %c0_i32_0 : i32, i32
  }
  func.func @transform_21(%arg0: i32, %arg1: i32) -> (i32, i32) {
    %c0_i32 = arith.constant 0 : i32
    %c0_i32_0 = arith.constant 0 : i32
    %c0_i32_1 = arith.constant 0 : i32
    return %c0_i32, %c0_i32_0 : i32, i32
  }
  func.func @transform_22(%arg0: i32, %arg1: i32) -> (i32, i32) {
    %c0_i32 = arith.constant 0 : i32
    %c0_i32_0 = arith.constant 0 : i32
    %c0_i32_1 = arith.constant 0 : i32
    return %c0_i32, %c0_i32_0 : i32, i32
  }
  func.func @transform_23(%arg0: i32, %arg1: i32) -> (i32, i32) {
    %c0_i32 = arith.constant 0 : i32
    %c0_i32_0 = arith.constant 0 : i32
    %c0_i32_1 = arith.constant 0 : i32
    return %c0_i32, %c0_i32_0 : i32, i32
  }
  func.func @transform_24(%arg0: i32, %arg1: i32) -> (i32, i32) {
    %c0_i32 = arith.constant 0 : i32
    %c0_i32_0 = arith.constant 0 : i32
    %c0_i32_1 = arith.constant 0 : i32
    return %c0_i32, %c0_i32_0 : i32, i32
  }
  func.func @transform_25(%arg0: i32, %arg1: i32) -> (i32, i32) {
    %c0_i32 = arith.constant 0 : i32
    %c0_i32_0 = arith.constant 0 : i32
    %c0_i32_1 = arith.constant 0 : i32
    return %c0_i32, %c0_i32_0 : i32, i32
  }
  func.func @transform_26(%arg0: i32, %arg1: i32) -> (i32, i32) {
    %c0_i32 = arith.constant 0 : i32
    %c0_i32_0 = arith.constant 0 : i32
    %c0_i32_1 = arith.constant 0 : i32
    return %c0_i32, %c0_i32_0 : i32, i32
  }
  func.func @transform_27(%arg0: i32, %arg1: i32) -> (i32, i32) {
    %c0_i32 = arith.constant 0 : i32
    %c0_i32_0 = arith.constant 0 : i32
    %c0_i32_1 = arith.constant 0 : i32
    return %c0_i32, %c0_i32_0 : i32, i32
  }
  func.func @transform_28(%arg0: i32, %arg1: i32) -> (i32, i32) {
    %c0_i32 = arith.constant 0 : i32
    %c0_i32_0 = arith.constant 0 : i32
    %c0_i32_1 = arith.constant 0 : i32
    return %c0_i32, %c0_i32_0 : i32, i32
  }
  func.func @transform_29(%arg0: i32, %arg1: i32) -> (i32, i32, i32) {
    %c0_i32 = arith.constant 0 : i32
    %c0_i32_0 = arith.constant 0 : i32
    return %arg0, %arg1, %c0_i32 : i32, i32, i32
  }
}

</mosaic_0001>

<llo_original>
// kernel: tpu_custom_call.1
$region0: #{tpu_custom_call.1}
  #allocation0 [shape = 'u32[]', space=smem, size = 0x4, offset = 0x4, fixed_abs, tag = 'smem constant byte address 0x4 - core index']
  #allocation1 [shape = 'u32[72,128]{1,0:T(1,128)}', space=vmem, size = 0x9000, scoped, tag = 'internal scratch']
  %s0 = inlined_call_operand.hbm [shape: f32[8,128], index: 0, kind: input, shape index: {}]
  %s1 = inlined_call_operand.hbm [shape: f32[8,128], index: 1, kind: output, shape index: {}]
  %s2 = sld [smem:[#allocation0]]
  $region41: #{tpu_custom_call.1} parent=0
    _
  %s4 = ssub.s32 1, %s2
  %s5 = scalar_select 0, %s4, %s2
  $region1: #{tpu_custom_call.1} parent=0
    #allocation2 [shape = 'u8[4096]{0}', space=vmem, size = 0x1000, scoped, tag = 'input window, operand 0, single buffered']
    #allocation3 [shape = 's32[2]{0}', space=sflag, size = 0x8, scoped, tag = 'scoped memory for tpu_custom_call.1']
    #allocation4 [shape = 's32[2]{0}', space=sflag, size = 0x8, scoped, tag = 'scoped memory for tpu_custom_call.1']
    #allocation5 [shape = 'u8[4096]{0}', space=vmem, size = 0x1000, scoped, tag = 'output window, operand 0, single buffered']
    %6 = vsyncpa [#allocation3], 0
    %7 = vsyncpa [#allocation4], 0
    loop: start=0, step=1, limit=4
    $region2: #{tpu_custom_call.1} parent=1 // loop_pre_header
      _
    $region3: #{tpu_custom_call.1} parent=1 // loop_header
      %s9 = sphi 0, %s13
      %p10 = scmp.ge.s32.totalorder %s9, 4
      %s17 = sphi 0, %s17
      %s19 = sphi 0, %s17
      %s20 = sphi 0, %s19
      %s34 = sphi 0, %s20
      %s38 = sphi 0, %s38
      %s40 = sphi 0, %s38
      %s41 = sphi 0, %s40
      %s55 = sphi 0, %s41
    $region4: #{tpu_custom_call.1} parent=1 // loop_header_branch
      %12 = sbr.rel (%p10) target = $region8
    $region5: #{tpu_custom_call.1} parent=1 // loop_body
      %s14 = ssub.s32 %s9, 1
      %s15 = ssub.s32 %s9, 2
      %s16 = sadd.s32 %s9, 1
      %s18 = sadd.s32 %s17, 1
      %p21 = scmp.eq.s32.totalorder %s9, 1
      %p22 = scmp.ne.s32.totalorder %s17, %s19
      %p23 = scmp.eq.s32.totalorder %s9, 0
      %p24 = por %p22, %p23
      %p25 = scmp.ne.s32.totalorder %s17, %s19
      %p26 = scmp.eq.s32.totalorder %s14, 1
      %p27 = por %p25, %p26
      %p28 = scmp.ne.s32.totalorder %s19, %s20
      %p29 = scmp.eq.s32.totalorder %s14, 0
      %p30 = por %p28, %p29
      %p31 = scmp.ne.s32.totalorder %s19, %s20
      %p32 = scmp.eq.s32.totalorder %s15, 1
      %p33 = por %p31, %p32
      %p35 = scmp.ne.s32.totalorder %s20, %s34
      %p36 = scmp.eq.s32.totalorder %s15, 0
      %p37 = por %p35, %p36
      %s39 = sadd.s32 %s38, 1
      %p42 = scmp.eq.s32.totalorder %s9, 1
      %p43 = scmp.ne.s32.totalorder %s38, %s40
      %p44 = scmp.eq.s32.totalorder %s9, 0
      %p45 = por %p43, %p44
      %p46 = scmp.ne.s32.totalorder %s38, %s40
      %p47 = scmp.eq.s32.totalorder %s14, 1
      %p48 = por %p46, %p47
      %p49 = scmp.ne.s32.totalorder %s40, %s41
      %p50 = scmp.eq.s32.totalorder %s14, 0
      %p51 = por %p49, %p50
      %p52 = scmp.ne.s32.totalorder %s40, %s41
      %p53 = scmp.eq.s32.totalorder %s15, 1
      %p54 = por %p52, %p53
      %p56 = scmp.ne.s32.totalorder %s41, %s55
      %p57 = scmp.eq.s32.totalorder %s15, 0
      %p58 = por %p56, %p57
      %p59 = scmp.le.s32.totalorder 1, %s9
      %p60 = scmp.lt.s32.totalorder %s9, 3
      %p61 = pnand %p59, %p60
      %p62 = pneg %p61
      // Predicated region
      $region9: #{tpu_custom_call.1} parent=5 // pred_check
        _
      $region10: #{tpu_custom_call.1} parent=5 // pred_check_branch
        %64 = sbr.rel (%p61) target = $region12
      $region11: #{tpu_custom_call.1} parent=5 // pred_region
        %s65 = ssub.s32 %s9, 1
        // Predicated region
        $region13: #{tpu_custom_call.1} parent=11 // pred_check
          %p66 = pneg %p30
        $region14: #{tpu_custom_call.1} parent=11 // pred_check_branch
          %68 = sbr.rel (%p66) target = $region16
        $region15: #{tpu_custom_call.1} parent=11 // pred_region
          %70 = vsyncadd [#allocation3], 0
          %s72 = sshll.u32 %s0, 4
          %s73 = int_to_ptr.hbm [resolvable:$true] %s72
          %s74 = sshll.u32 [#allocation2], 4
          %s75 = int_to_ptr.vmem [resolvable:$true] %s74
          %77 = dma.hbm_to_vmem [thread:$0]  %s73, 128, %s75, [#allocation3]
        $region16: #{tpu_custom_call.1} parent=11 // pred_fallthru
          _
      $region12: #{tpu_custom_call.1} parent=5 // pred_fallthru
        _
      %p78 = scmp.lt.s32.totalorder %s9, 2
      // Predicated region
      $region17: #{tpu_custom_call.1} parent=5 // pred_check
        %p79 = pneg %p78
      $region18: #{tpu_custom_call.1} parent=5 // pred_check_branch
        %81 = sbr.rel (%p79) target = $region20
      $region19: #{tpu_custom_call.1} parent=5 // pred_region
        _
      $region20: #{tpu_custom_call.1} parent=5 // pred_fallthru
        _
      %p82 = scmp.le.s32.totalorder 1, %s9
      %p83 = scmp.lt.s32.totalorder %s9, 3
      %p84 = pnand %p82, %p83
      %p85 = pneg %p84
      // Predicated region
      $region21: #{tpu_custom_call.1} parent=5 // pred_check
        _
      $region22: #{tpu_custom_call.1} parent=5 // pred_check_branch
        %87 = sbr.rel (%p84) target = $region24
      $region23: #{tpu_custom_call.1} parent=5 // pred_region
        %s88 = ssub.s32 %s9, 1
        // Predicated region
        $region25: #{tpu_custom_call.1} parent=23 // pred_check
          %p89 = pneg %p30
        $region26: #{tpu_custom_call.1} parent=23 // pred_check_branch
          %91 = sbr.rel (%p89) target = $region28
        $region27: #{tpu_custom_call.1} parent=23 // pred_region
          %93 = dma.done [#allocation3], 128
        $region28: #{tpu_custom_call.1} parent=23 // pred_fallthru
          _
        %p94 = pneg %p30
        %p95 = pneg %p27
        %p96 = pneg %p51
        %p97 = pneg %p48
        %v98 = vld [vmem:[#allocation2] sm:$0xff]
        %99 = vst [vmem:[#allocation5] sm:$0xff] %v98
        // Predicated region
        $region29: #{tpu_custom_call.1} parent=23 // pred_check
          %p100 = pneg %p48
        $region30: #{tpu_custom_call.1} parent=23 // pred_check_branch
          %102 = sbr.rel (%p100) target = $region32
        $region31: #{tpu_custom_call.1} parent=23 // pred_region
          %104 = vsyncadd [#allocation4], 0
          %s106 = sshll.u32 [#allocation5], 4
          %s107 = int_to_ptr.vmem [resolvable:$true] %s106
          %s108 = sshll.u32 %s1, 4
          %s109 = int_to_ptr.hbm [resolvable:$true] %s108
          %111 = dma.vmem_to_hbm [thread:$0]  %s107, 128, %s109, [#allocation4]
        $region32: #{tpu_custom_call.1} parent=23 // pred_fallthru
          _
        // Predicated region
        $region33: #{tpu_custom_call.1} parent=23 // pred_check
          %p112 = pneg %p48
        $region34: #{tpu_custom_call.1} parent=23 // pred_check_branch
          %114 = sbr.rel (%p112) target = $region36
        $region35: #{tpu_custom_call.1} parent=23 // pred_region
          %116 = dma.done [#allocation4], 128
        $region36: #{tpu_custom_call.1} parent=23 // pred_fallthru
          _
      $region24: #{tpu_custom_call.1} parent=5 // pred_fallthru
        _
      %p117 = scmp.le.s32.totalorder 2, %s9
      // Predicated region
      $region37: #{tpu_custom_call.1} parent=5 // pred_check
        %p118 = pneg %p117
      $region38: #{tpu_custom_call.1} parent=5 // pred_check_branch
        %120 = sbr.rel (%p118) target = $region40
      $region39: #{tpu_custom_call.1} parent=5 // pred_region
        %s121 = ssub.s32 %s9, 2
      $region40: #{tpu_custom_call.1} parent=5 // pred_fallthru
        _
    $region6: #{tpu_custom_call.1} parent=1 // loop_footer
      %s13 = sadd.s32 1, %s9
    $region7: #{tpu_custom_call.1} parent=1 // loop_footer_branch
      %8 = sbr.rel target = $region3
    $region8: #{tpu_custom_call.1} parent=1 // loop_exit
      _
    %122 = vsyncpa [#allocation3], 1
    %s123 = scalar_lea.sflag [#allocation3], 1
    %124 = vsyncpa %s123, 1
    %125 = vsyncpa [#allocation4], 1
    %s126 = scalar_lea.sflag [#allocation4], 1
    %127 = vsyncpa %s126, 1

// kernel: tpu_custom_call.1
$region0: #{tpu_custom_call.1}
  #allocation0 [shape = 'u32[]', space=smem, size = 0x4, offset = 0x4, fixed_abs, tag = 'smem constant byte address 0x4 - core index']
  #allocation1 [shape = 'u32[72,128]{1,0:T(1,128)}', space=vmem, size = 0x9000, scoped, tag = 'internal scratch']
  #allocation2 [shape = 'f32[64,64]{1,0:T(8,128)}', space=vmem, size = 0x8000, scoped, tag = 'scratch operand']
  #allocation3 [shape = 'bf16[64,64]{1,0:T(8,128)(2,1)}', space=vmem, size = 0x4000, scoped, tag = 'scratch operand']
  #allocation4 [shape = 'bf16[64,64]{1,0:T(8,128)(2,1)}', space=vmem, size = 0x4000, scoped, tag = 'scratch operand']
  #allocation5 [shape = 'bf16[16,64]{1,0:T(8,128)(2,1)}', space=vmem, size = 0x1000, scoped, tag = 'scratch operand']
  #allocation6 [shape = 'bf16[16,64]{1,0:T(8,128)(2,1)}', space=vmem, size = 0x1000, scoped, tag = 'scratch operand']
  %s0 = inlined_call_operand.smem [shape: u32[30], index: -1, kind: input, shape index: {}]
  %s1 = sld [smem:[%s0]]
  %s2 = scalar_lea.smem %s0, 1
  %s3 = sld [smem:[%s2]]
  %s4 = scalar_lea.smem %s0, 2
  %s5 = sld [smem:[%s4]]
  %s6 = scalar_lea.smem %s0, 3
  %s7 = sld [smem:[%s6]]
  %s8 = scalar_lea.smem %s0, 4
  %s9 = sld [smem:[%s8]]
  %s10 = scalar_lea.smem %s0, 5
  %s11 = sld [smem:[%s10]]
  %s12 = scalar_lea.smem %s0, 6
  %s13 = sld [smem:[%s12]]
  %s14 = scalar_lea.smem %s0, 7
  %s15 = sld [smem:[%s14]]
  %s16 = scalar_lea.smem %s0, 8
  %s17 = sld [smem:[%s16]]
  %s18 = scalar_lea.smem %s0, 9
  %s19 = sld [smem:[%s18]]
  %s20 = scalar_lea.smem %s0, 10
  %s21 = sld [smem:[%s20]]
  %s22 = scalar_lea.smem %s0, 11
  %s23 = sld [smem:[%s22]]
  %s24 = scalar_lea.smem %s0, 12
  %s25 = sld [smem:[%s24]]
  %s26 = scalar_lea.smem %s0, 13
  %s27 = sld [smem:[%s26]]
  %s28 = scalar_lea.smem %s0, 14
  %s29 = sld [smem:[%s28]]
  %s30 = scalar_lea.smem %s0, 15
  %s31 = sld [smem:[%s30]]
  %s32 = scalar_lea.smem %s0, 16
  %s33 = sld [smem:[%s32]]
  %s34 = scalar_lea.smem %s0, 17
  %s35 = sld [smem:[%s34]]
  %s36 = scalar_lea.smem %s0, 18
  %s37 = sld [smem:[%s36]]
  %s38 = scalar_lea.smem %s0, 19
  %s39 = sld [smem:[%s38]]
  %s40 = scalar_lea.smem %s0, 20
  %s41 = sld [smem:[%s40]]
  %s42 = scalar_lea.smem %s0, 21
  %s43 = sld [smem:[%s42]]
  %s44 = scalar_lea.smem %s0, 22
  %s45 = sld [smem:[%s44]]
  %s46 = scalar_lea.smem %s0, 23
  %s47 = sld [smem:[%s46]]
  %s48 = scalar_lea.smem %s0, 24
  %s49 = sld [smem:[%s48]]
  %s50 = scalar_lea.smem %s0, 25
  %s51 = sld [smem:[%s50]]
  %s52 = scalar_lea.smem %s0, 26
  %s53 = sld [smem:[%s52]]
  %s54 = scalar_lea.smem %s0, 27
  %s55 = sld [smem:[%s54]]
  %s56 = scalar_lea.smem %s0, 28
  %s57 = sld [smem:[%s56]]
  %s58 = scalar_lea.smem %s0, 29
  %s59 = sld [smem:[%s58]]
  %s60 = sld [smem:[#allocation0]]
  $region241: #{tpu_custom_call.1} parent=0
    _
  %s62 = ssub.s32 1, %s60
  %s63 = scalar_select 0, %s62, %s60
  $region1: #{tpu_custom_call.1} parent=0
    #allocation7 [shape = 'u8[16384]{0}', space=vmem, size = 0x4000, scoped, tag = 'input window, operand 1']
    #allocation8 [shape = 's32[2]{0}', space=sflag, size = 0x8, scoped, tag = 'scoped memory for tpu_custom_call.1']
    #allocation9 [shape = 's32[2]{0}', space=sflag, size = 0x8, scoped, tag = 'scoped memory for tpu_custom_call.1']
    #allocation10 [shape = 'u8[2048]{0}', space=vmem, size = 0x800, scoped, tag = 'input window, operand 2']
    #allocation11 [shape = 's32[2]{0}', space=sflag, size = 0x8, scoped, tag = 'scoped memory for tpu_custom_call.1']
    #allocation12 [shape = 'u8[16384]{0}', space=vmem, size = 0x4000, scoped, tag = 'input window, operand 3, single buffered']
    #allocation13 [shape = 'u8[512]{0}', space=vmem, size = 0x400, scoped, tag = 'input window, operand 4, single buffered']
    #allocation14 [shape = 's32[1]{0}', space=sflag, size = 0x4, scoped, tag = 'scoped memory for tpu_custom_call.1']
    #allocation15 [shape = 'u8[512]{0}', space=vmem, size = 0x400, scoped, tag = 'input window, operand 5, single buffered']
    #allocation16 [shape = 'u8[16384]{0}', space=vmem, size = 0x4000, scoped, tag = 'input window, operand 7, single buffered']
    #allocation17 [shape = 's32[1]{0}', space=sflag, size = 0x4, scoped, tag = 'scoped memory for tpu_custom_call.1']
    #allocation18 [shape = 'u8[16384]{0}', space=vmem, size = 0x4000, scoped, tag = 'input window, operand 8, single buffered']
    #allocation19 [shape = 'u8[16384]{0}', space=vmem, size = 0x4000, scoped, tag = 'input window, operand 9, single buffered']
    #allocation20 [shape = 's32[1]{0}', space=sflag, size = 0x4, scoped, tag = 'scoped memory for tpu_custom_call.1']
    #allocation21 [shape = 'u8[16384]{0}', space=vmem, size = 0x4000, scoped, tag = 'input window, operand 10, single buffered']
    #allocation22 [shape = 'u8[16384]{0}', space=vmem, size = 0x4000, scoped, tag = 'input window, operand 14, single buffered']
    #allocation23 [shape = 's32[1]{0}', space=sflag, size = 0x4, scoped, tag = 'scoped memory for tpu_custom_call.1']
    #allocation24 [shape = 'u8[16384]{0}', space=vmem, size = 0x4000, scoped, tag = 'input window, operand 15, single buffered']
    #allocation25 [shape = 'u8[16384]{0}', space=vmem, size = 0x4000, scoped, tag = 'input window, operand 16, single buffered']
    #allocation26 [shape = 's32[1]{0}', space=sflag, size = 0x4, scoped, tag = 'scoped memory for tpu_custom_call.1']
    #allocation27 [shape = 'u8[16384]{0}', space=vmem, size = 0x4000, scoped, tag = 'input window, operand 17, single buffered']
    #allocation28 [shape = 'u8[32768]{0}', space=vmem, size = 0x8000, scoped, tag = 'input window, operand 23, single buffered']
    #allocation29 [shape = 's32[1]{0}', space=sflag, size = 0x4, scoped, tag = 'scoped memory for tpu_custom_call.1']
    #allocation30 [shape = 'u8[16384]{0}', space=vmem, size = 0x4000, scoped, tag = 'input window, operand 27, single buffered']
    #allocation31 [shape = 'u8[32768]{0}', space=vmem, size = 0x8000, scoped, tag = 'output window, operand 0']
    %64 = vsyncpa [#allocation8], 0
    %s65 = scalar_lea.sflag [#allocation8], 1
    %66 = vsyncpa %s65, 0
    %67 = vsyncpa [#allocation11], 0
    %s68 = scalar_lea.sflag [#allocation11], 1
    %69 = vsyncpa %s68, 0
    %70 = vsyncpa [#allocation14], 0
    %71 = vsyncpa [#allocation17], 0
    %72 = vsyncpa [#allocation20], 0
    %73 = vsyncpa [#allocation23], 0
    %74 = vsyncpa [#allocation26], 0
    %75 = vsyncpa [#allocation29], 0
    %76 = vsyncpa [#allocation9], 0
    %s77 = scalar_lea.sflag [#allocation9], 1
    %78 = vsyncpa %s77, 0
    loop: start=0, step=1, limit=6
    $region2: #{tpu_custom_call.1} parent=1 // loop_pre_header
      _
    $region3: #{tpu_custom_call.1} parent=1 // loop_header
      %s80 = sphi 0, %s84
      %p81 = scmp.ge.s32.totalorder %s80, 6
      %s87 = sphi 0, %s99
      %s88 = sphi 0, %s95
      %s89 = sphi 0, %s87
      %s90 = sphi 0, %s88
      %s91 = sphi 0, %s89
      %s92 = sphi 0, %s90
      %s102 = sphi 0, %s104
      %s105 = sphi 0, %s102
      %s106 = sphi 0, %s105
      %s122 = sphi 0, %s106
      %s128 = sphi 0, %s130
      %s131 = sphi 0, %s128
      %s132 = sphi 0, %s131
      %s148 = sphi 0, %s132
      %s154 = sphi 0, %s156
      %s157 = sphi 0, %s154
      %s158 = sphi 0, %s157
      %s174 = sphi 0, %s158
      %s178 = sphi 0, %s178
      %s180 = sphi 0, %s178
      %s181 = sphi 0, %s180
      %s195 = sphi 0, %s181
      %s199 = sphi 0, %s199
      %s201 = sphi 0, %s199
      %s202 = sphi 0, %s201
      %s216 = sphi 0, %s202
      %s220 = sphi 0, %s220
      %s222 = sphi 0, %s220
      %s223 = sphi 0, %s222
      %s237 = sphi 0, %s223
      %s241 = sphi 0, %s241
      %s243 = sphi 0, %s241
      %s244 = sphi 0, %s243
      %s258 = sphi 0, %s244
      %s262 = sphi 0, %s262
      %s264 = sphi 0, %s262
      %s265 = sphi 0, %s264
      %s279 = sphi 0, %s265
      %s283 = sphi 0, %s283
      %s285 = sphi 0, %s283
      %s286 = sphi 0, %s285
      %s300 = sphi 0, %s286
      %s304 = sphi 0, %s304
      %s306 = sphi 0, %s304
      %s307 = sphi 0, %s306
      %s321 = sphi 0, %s307
      %s325 = sphi 0, %s325
      %s327 = sphi 0, %s325
      %s328 = sphi 0, %s327
      %s342 = sphi 0, %s328
      %s346 = sphi 0, %s346
      %s348 = sphi 0, %s346
      %s349 = sphi 0, %s348
      %s363 = sphi 0, %s349
      %s367 = sphi 0, %s367
      %s369 = sphi 0, %s367
      %s370 = sphi 0, %s369
      %s384 = sphi 0, %s370
      %s388 = sphi 0, %s388
      %s390 = sphi 0, %s388
      %s391 = sphi 0, %s390
      %s405 = sphi 0, %s391
      %s409 = sphi 0, %s409
      %s411 = sphi 0, %s409
      %s412 = sphi 0, %s411
      %s426 = sphi 0, %s412
      %s430 = sphi 0, %s430
      %s432 = sphi 0, %s430
      %s433 = sphi 0, %s432
      %s447 = sphi 0, %s433
      %s451 = sphi 0, %s451
      %s453 = sphi 0, %s451
      %s454 = sphi 0, %s453
      %s468 = sphi 0, %s454
      %s472 = sphi 0, %s472
      %s474 = sphi 0, %s472
      %s475 = sphi 0, %s474
      %s489 = sphi 0, %s475
      %s493 = sphi 0, %s493
      %s495 = sphi 0, %s493
      %s496 = sphi 0, %s495
      %s510 = sphi 0, %s496
      %s514 = sphi 0, %s514
      %s516 = sphi 0, %s514
      %s517 = sphi 0, %s516
      %s531 = sphi 0, %s517
      %s535 = sphi 0, %s535
      %s537 = sphi 0, %s535
      %s538 = sphi 0, %s537
      %s552 = sphi 0, %s538
      %s556 = sphi 0, %s556
      %s558 = sphi 0, %s556
      %s559 = sphi 0, %s558
      %s573 = sphi 0, %s559
      %s577 = sphi 0, %s577
      %s579 = sphi 0, %s577
      %s580 = sphi 0, %s579
      %s594 = sphi 0, %s580
      %s598 = sphi 0, %s598
      %s600 = sphi 0, %s598
      %s601 = sphi 0, %s600
      %s615 = sphi 0, %s601
      %s619 = sphi 0, %s619
      %s621 = sphi 0, %s619
      %s622 = sphi 0, %s621
      %s636 = sphi 0, %s622
      %s640 = sphi 0, %s640
      %s642 = sphi 0, %s640
      %s643 = sphi 0, %s642
      %s657 = sphi 0, %s643
      %s661 = sphi 0, %s661
      %s663 = sphi 0, %s661
      %s664 = sphi 0, %s663
      %s678 = sphi 0, %s664
      %s682 = sphi 0, %s682
      %s684 = sphi 0, %s682
      %s685 = sphi 0, %s684
      %s699 = sphi 0, %s685
      %s703 = sphi 0, %s703
      %s705 = sphi 0, %s703
      %s706 = sphi 0, %s705
      %s720 = sphi 0, %s706
      %s728 = sphi 0, %s730
      %s731 = sphi 0, %s728
      %s732 = sphi 0, %s731
      %s748 = sphi 0, %s732
    $region4: #{tpu_custom_call.1} parent=1 // loop_header_branch
      %83 = sbr.rel (%p81) target = $region8
    $region5: #{tpu_custom_call.1} parent=1 // loop_body
      %s85 = ssub.s32 %s80, 1
      %s86 = ssub.s32 %s80, 2
      %s93 = sadd.s32 1, %s88
      %p94 = scmp.ge.s32.totalorder %s93, 2
      %s95 = scalar_select %p94, 0, %s93
      %s96 = sadd.s32 1, %s87
      %s97 = scalar_select %p94, %s96, %s87
      %p98 = scmp.ge.s32.totalorder %s97, 2
      %s99 = scalar_select %p98, 0, %s97
      %s100 = ssub.s32 %s87, %s99
      %p101 = scmp.eq.s32.totalorder %s100, 0
      %s103 = sadd.s32 %s102, 1
      %s104 = scalar_select %p101, %s102, %s103
      %p107 = pneg %p101
      %p108 = scmp.eq.s32.totalorder %s80, 3
      %p109 = por %p107, %p108
      %p110 = scmp.ne.s32.totalorder %s102, %s105
      %p111 = scmp.eq.s32.totalorder %s80, 0
      %p112 = por %p110, %p111
      %p113 = scmp.ne.s32.totalorder %s102, %s105
      %p114 = scmp.eq.s32.totalorder %s85, 3
      %p115 = por %p113, %p114
      %p116 = scmp.ne.s32.totalorder %s105, %s106
      %p117 = scmp.eq.s32.totalorder %s85, 0
      %p118 = por %p116, %p117
      %p119 = scmp.ne.s32.totalorder %s105, %s106
      %p120 = scmp.eq.s32.totalorder %s86, 3
      %p121 = por %p119, %p120
      %p123 = scmp.ne.s32.totalorder %s106, %s122
      %p124 = scmp.eq.s32.totalorder %s86, 0
      %p125 = por %p123, %p124
      %s126 = ssub.s32 %s87, %s99
      %p127 = scmp.eq.s32.totalorder %s126, 0
      %s129 = sadd.s32 %s128, 1
      %s130 = scalar_select %p127, %s128, %s129
      %p133 = pneg %p127
      %p134 = scmp.eq.s32.totalorder %s80, 3
      %p135 = por %p133, %p134
      %p136 = scmp.ne.s32.totalorder %s128, %s131
      %p137 = scmp.eq.s32.totalorder %s80, 0
      %p138 = por %p136, %p137
      %p139 = scmp.ne.s32.totalorder %s128, %s131
      %p140 = scmp.eq.s32.totalorder %s85, 3
      %p141 = por %p139, %p140
      %p142 = scmp.ne.s32.totalorder %s131, %s132
      %p143 = scmp.eq.s32.totalorder %s85, 0
      %p144 = por %p142, %p143
      %p145 = scmp.ne.s32.totalorder %s131, %s132
      %p146 = scmp.eq.s32.totalorder %s86, 3
      %p147 = por %p145, %p146
      %p149 = scmp.ne.s32.totalorder %s132, %s148
      %p150 = scmp.eq.s32.totalorder %s86, 0
      %p151 = por %p149, %p150
      %s152 = ssub.s32 %s87, %s99
      %p153 = scmp.eq.s32.totalorder %s152, 0
      %s155 = sadd.s32 %s154, 1
      %s156 = scalar_select %p153, %s154, %s155
      %p159 = pneg %p153
      %p160 = scmp.eq.s32.totalorder %s80, 3
      %p161 = por %p159, %p160
      %p162 = scmp.ne.s32.totalorder %s154, %s157
      %p163 = scmp.eq.s32.totalorder %s80, 0
      %p164 = por %p162, %p163
      %p165 = scmp.ne.s32.totalorder %s154, %s157
      %p166 = scmp.eq.s32.totalorder %s85, 3
      %p167 = por %p165, %p166
      %p168 = scmp.ne.s32.totalorder %s157, %s158
      %p169 = scmp.eq.s32.totalorder %s85, 0
      %p170 = por %p168, %p169
      %p171 = scmp.ne.s32.totalorder %s157, %s158
      %p172 = scmp.eq.s32.totalorder %s86, 3
      %p173 = por %p171, %p172
      %p175 = scmp.ne.s32.totalorder %s158, %s174
      %p176 = scmp.eq.s32.totalorder %s86, 0
      %p177 = por %p175, %p176
      %s179 = sadd.s32 %s178, 1
      %p182 = scmp.eq.s32.totalorder %s80, 3
      %p183 = scmp.ne.s32.totalorder %s178, %s180
      %p184 = scmp.eq.s32.totalorder %s80, 0
      %p185 = por %p183, %p184
      %p186 = scmp.ne.s32.totalorder %s178, %s180
      %p187 = scmp.eq.s32.totalorder %s85, 3
      %p188 = por %p186, %p187
      %p189 = scmp.ne.s32.totalorder %s180, %s181
      %p190 = scmp.eq.s32.totalorder %s85, 0
      %p191 = por %p189, %p190
      %p192 = scmp.ne.s32.totalorder %s180, %s181
      %p193 = scmp.eq.s32.totalorder %s86, 3
      %p194 = por %p192, %p193
      %p196 = scmp.ne.s32.totalorder %s181, %s195
      %p197 = scmp.eq.s32.totalorder %s86, 0
      %p198 = por %p196, %p197
      %s200 = sadd.s32 %s199, 1
      %p203 = scmp.eq.s32.totalorder %s80, 3
      %p204 = scmp.ne.s32.totalorder %s199, %s201
      %p205 = scmp.eq.s32.totalorder %s80, 0
      %p206 = por %p204, %p205
      %p207 = scmp.ne.s32.totalorder %s199, %s201
      %p208 = scmp.eq.s32.totalorder %s85, 3
      %p209 = por %p207, %p208
      %p210 = scmp.ne.s32.totalorder %s201, %s202
      %p211 = scmp.eq.s32.totalorder %s85, 0
      %p212 = por %p210, %p211
      %p213 = scmp.ne.s32.totalorder %s201, %s202
      %p214 = scmp.eq.s32.totalorder %s86, 3
      %p215 = por %p213, %p214
      %p217 = scmp.ne.s32.totalorder %s202, %s216
      %p218 = scmp.eq.s32.totalorder %s86, 0
      %p219 = por %p217, %p218
      %s221 = sadd.s32 %s220, 1
      %p224 = scmp.eq.s32.totalorder %s80, 3
      %p225 = scmp.ne.s32.totalorder %s220, %s222
      %p226 = scmp.eq.s32.totalorder %s80, 0
      %p227 = por %p225, %p226
      %p228 = scmp.ne.s32.totalorder %s220, %s222
      %p229 = scmp.eq.s32.totalorder %s85, 3
      %p230 = por %p228, %p229
      %p231 = scmp.ne.s32.totalorder %s222, %s223
      %p232 = scmp.eq.s32.totalorder %s85, 0
      %p233 = por %p231, %p232
      %p234 = scmp.ne.s32.totalorder %s222, %s223
      %p235 = scmp.eq.s32.totalorder %s86, 3
      %p236 = por %p234, %p235
      %p238 = scmp.ne.s32.totalorder %s223, %s237
      %p239 = scmp.eq.s32.totalorder %s86, 0
      %p240 = por %p238, %p239
      %s242 = sadd.s32 %s241, 1
      %p245 = scmp.eq.s32.totalorder %s80, 3
      %p246 = scmp.ne.s32.totalorder %s241, %s243
      %p247 = scmp.eq.s32.totalorder %s80, 0
      %p248 = por %p246, %p247
      %p249 = scmp.ne.s32.totalorder %s241, %s243
      %p250 = scmp.eq.s32.totalorder %s85, 3
      %p251 = por %p249, %p250
      %p252 = scmp.ne.s32.totalorder %s243, %s244
      %p253 = scmp.eq.s32.totalorder %s85, 0
      %p254 = por %p252, %p253
      %p255 = scmp.ne.s32.totalorder %s243, %s244
      %p256 = scmp.eq.s32.totalorder %s86, 3
      %p257 = por %p255, %p256
      %p259 = scmp.ne.s32.totalorder %s244, %s258
      %p260 = scmp.eq.s32.totalorder %s86, 0
      %p261 = por %p259, %p260
      %s263 = sadd.s32 %s262, 1
      %p266 = scmp.eq.s32.totalorder %s80, 3
      %p267 = scmp.ne.s32.totalorder %s262, %s264
      %p268 = scmp.eq.s32.totalorder %s80, 0
      %p269 = por %p267, %p268
      %p270 = scmp.ne.s32.totalorder %s262, %s264
      %p271 = scmp.eq.s32.totalorder %s85, 3
      %p272 = por %p270, %p271
      %p273 = scmp.ne.s32.totalorder %s264, %s265
      %p274 = scmp.eq.s32.totalorder %s85, 0
      %p275 = por %p273, %p274
      %p276 = scmp.ne.s32.totalorder %s264, %s265
      %p277 = scmp.eq.s32.totalorder %s86, 3
      %p278 = por %p276, %p277
      %p280 = scmp.ne.s32.totalorder %s265, %s279
      %p281 = scmp.eq.s32.totalorder %s86, 0
      %p282 = por %p280, %p281
      %s284 = sadd.s32 %s283, 1
      %p287 = scmp.eq.s32.totalorder %s80, 3
      %p288 = scmp.ne.s32.totalorder %s283, %s285
      %p289 = scmp.eq.s32.totalorder %s80, 0
      %p290 = por %p288, %p289
      %p291 = scmp.ne.s32.totalorder %s283, %s285
      %p292 = scmp.eq.s32.totalorder %s85, 3
      %p293 = por %p291, %p292
      %p294 = scmp.ne.s32.totalorder %s285, %s286
      %p295 = scmp.eq.s32.totalorder %s85, 0
      %p296 = por %p294, %p295
      %p297 = scmp.ne.s32.totalorder %s285, %s286
      %p298 = scmp.eq.s32.totalorder %s86, 3
      %p299 = por %p297, %p298
      %p301 = scmp.ne.s32.totalorder %s286, %s300
      %p302 = scmp.eq.s32.totalorder %s86, 0
      %p303 = por %p301, %p302
      %s305 = sadd.s32 %s304, 1
      %p308 = scmp.eq.s32.totalorder %s80, 3
      %p309 = scmp.ne.s32.totalorder %s304, %s306
      %p310 = scmp.eq.s32.totalorder %s80, 0
      %p311 = por %p309, %p310
      %p312 = scmp.ne.s32.totalorder %s304, %s306
      %p313 = scmp.eq.s32.totalorder %s85, 3
      %p314 = por %p312, %p313
      %p315 = scmp.ne.s32.totalorder %s306, %s307
      %p316 = scmp.eq.s32.totalorder %s85, 0
      %p317 = por %p315, %p316
      %p318 = scmp.ne.s32.totalorder %s306, %s307
      %p319 = scmp.eq.s32.totalorder %s86, 3
      %p320 = por %p318, %p319
      %p322 = scmp.ne.s32.totalorder %s307, %s321
      %p323 = scmp.eq.s32.totalorder %s86, 0
      %p324 = por %p322, %p323
      %s326 = sadd.s32 %s325, 1
      %p329 = scmp.eq.s32.totalorder %s80, 3
      %p330 = scmp.ne.s32.totalorder %s325, %s327
      %p331 = scmp.eq.s32.totalorder %s80, 0
      %p332 = por %p330, %p331
      %p333 = scmp.ne.s32.totalorder %s325, %s327
      %p334 = scmp.eq.s32.totalorder %s85, 3
      %p335 = por %p333, %p334
      %p336 = scmp.ne.s32.totalorder %s327, %s328
      %p337 = scmp.eq.s32.totalorder %s85, 0
      %p338 = por %p336, %p337
      %p339 = scmp.ne.s32.totalorder %s327, %s328
      %p340 = scmp.eq.s32.totalorder %s86, 3
      %p341 = por %p339, %p340
      %p343 = scmp.ne.s32.totalorder %s328, %s342
      %p344 = scmp.eq.s32.totalorder %s86, 0
      %p345 = por %p343, %p344
      %s347 = sadd.s32 %s346, 1
      %p350 = scmp.eq.s32.totalorder %s80, 3
      %p351 = scmp.ne.s32.totalorder %s346, %s348
      %p352 = scmp.eq.s32.totalorder %s80, 0
      %p353 = por %p351, %p352
      %p354 = scmp.ne.s32.totalorder %s346, %s348
      %p355 = scmp.eq.s32.totalorder %s85, 3
      %p356 = por %p354, %p355
      %p357 = scmp.ne.s32.totalorder %s348, %s349
      %p358 = scmp.eq.s32.totalorder %s85, 0
      %p359 = por %p357, %p358
      %p360 = scmp.ne.s32.totalorder %s348, %s349
      %p361 = scmp.eq.s32.totalorder %s86, 3
      %p362 = por %p360, %p361
      %p364 = scmp.ne.s32.totalorder %s349, %s363
      %p365 = scmp.eq.s32.totalorder %s86, 0
      %p366 = por %p364, %p365
      %s368 = sadd.s32 %s367, 1
      %p371 = scmp.eq.s32.totalorder %s80, 3
      %p372 = scmp.ne.s32.totalorder %s367, %s369
      %p373 = scmp.eq.s32.totalorder %s80, 0
      %p374 = por %p372, %p373
      %p375 = scmp.ne.s32.totalorder %s367, %s369
      %p376 = scmp.eq.s32.totalorder %s85, 3
      %p377 = por %p375, %p376
      %p378 = scmp.ne.s32.totalorder %s369, %s370
      %p379 = scmp.eq.s32.totalorder %s85, 0
      %p380 = por %p378, %p379
      %p381 = scmp.ne.s32.totalorder %s369, %s370
      %p382 = scmp.eq.s32.totalorder %s86, 3
      %p383 = por %p381, %p382
      %p385 = scmp.ne.s32.totalorder %s370, %s384
      %p386 = scmp.eq.s32.totalorder %s86, 0
      %p387 = por %p385, %p386
      %s389 = sadd.s32 %s388, 1
      %p392 = scmp.eq.s32.totalorder %s80, 3
      %p393 = scmp.ne.s32.totalorder %s388, %s390
      %p394 = scmp.eq.s32.totalorder %s80, 0
      %p395 = por %p393, %p394
      %p396 = scmp.ne.s32.totalorder %s388, %s390
      %p397 = scmp.eq.s32.totalorder %s85, 3
      %p398 = por %p396, %p397
      %p399 = scmp.ne.s32.totalorder %s390, %s391
      %p400 = scmp.eq.s32.totalorder %s85, 0
      %p401 = por %p399, %p400
      %p402 = scmp.ne.s32.totalorder %s390, %s391
      %p403 = scmp.eq.s32.totalorder %s86, 3
      %p404 = por %p402, %p403
      %p406 = scmp.ne.s32.totalorder %s391, %s405
      %p407 = scmp.eq.s32.totalorder %s86, 0
      %p408 = por %p406, %p407
      %s410 = sadd.s32 %s409, 1
      %p413 = scmp.eq.s32.totalorder %s80, 3
      %p414 = scmp.ne.s32.totalorder %s409, %s411
      %p415 = scmp.eq.s32.totalorder %s80, 0
      %p416 = por %p414, %p415
      %p417 = scmp.ne.s32.totalorder %s409, %s411
      %p418 = scmp.eq.s32.totalorder %s85, 3
      %p419 = por %p417, %p418
      %p420 = scmp.ne.s32.totalorder %s411, %s412
      %p421 = scmp.eq.s32.totalorder %s85, 0
      %p422 = por %p420, %p421
      %p423 = scmp.ne.s32.totalorder %s411, %s412
      %p424 = scmp.eq.s32.totalorder %s86, 3
      %p425 = por %p423, %p424
      %p427 = scmp.ne.s32.totalorder %s412, %s426
      %p428 = scmp.eq.s32.totalorder %s86, 0
      %p429 = por %p427, %p428
      %s431 = sadd.s32 %s430, 1
      %p434 = scmp.eq.s32.totalorder %s80, 3
      %p435 = scmp.ne.s32.totalorder %s430, %s432
      %p436 = scmp.eq.s32.totalorder %s80, 0
      %p437 = por %p435, %p436
      %p438 = scmp.ne.s32.totalorder %s430, %s432
      %p439 = scmp.eq.s32.totalorder %s85, 3
      %p440 = por %p438, %p439
      %p441 = scmp.ne.s32.totalorder %s432, %s433
      %p442 = scmp.eq.s32.totalorder %s85, 0
      %p443 = por %p441, %p442
      %p444 = scmp.ne.s32.totalorder %s432, %s433
      %p445 = scmp.eq.s32.totalorder %s86, 3
      %p446 = por %p444, %p445
      %p448 = scmp.ne.s32.totalorder %s433, %s447
      %p449 = scmp.eq.s32.totalorder %s86, 0
      %p450 = por %p448, %p449
      %s452 = sadd.s32 %s451, 1
      %p455 = scmp.eq.s32.totalorder %s80, 3
      %p456 = scmp.ne.s32.totalorder %s451, %s453
      %p457 = scmp.eq.s32.totalorder %s80, 0
      %p458 = por %p456, %p457
      %p459 = scmp.ne.s32.totalorder %s451, %s453
      %p460 = scmp.eq.s32.totalorder %s85, 3
      %p461 = por %p459, %p460
      %p462 = scmp.ne.s32.totalorder %s453, %s454
      %p463 = scmp.eq.s32.totalorder %s85, 0
      %p464 = por %p462, %p463
      %p465 = scmp.ne.s32.totalorder %s453, %s454
      %p466 = scmp.eq.s32.totalorder %s86, 3
      %p467 = por %p465, %p466
      %p469 = scmp.ne.s32.totalorder %s454, %s468
      %p470 = scmp.eq.s32.totalorder %s86, 0
      %p471 = por %p469, %p470
      %s473 = sadd.s32 %s472, 1
      %p476 = scmp.eq.s32.totalorder %s80, 3
      %p477 = scmp.ne.s32.totalorder %s472, %s474
      %p478 = scmp.eq.s32.totalorder %s80, 0
      %p479 = por %p477, %p478
      %p480 = scmp.ne.s32.totalorder %s472, %s474
      %p481 = scmp.eq.s32.totalorder %s85, 3
      %p482 = por %p480, %p481
      %p483 = scmp.ne.s32.totalorder %s474, %s475
      %p484 = scmp.eq.s32.totalorder %s85, 0
      %p485 = por %p483, %p484
      %p486 = scmp.ne.s32.totalorder %s474, %s475
      %p487 = scmp.eq.s32.totalorder %s86, 3
      %p488 = por %p486, %p487
      %p490 = scmp.ne.s32.totalorder %s475, %s489
      %p491 = scmp.eq.s32.totalorder %s86, 0
      %p492 = por %p490, %p491
      %s494 = sadd.s32 %s493, 1
      %p497 = scmp.eq.s32.totalorder %s80, 3
      %p498 = scmp.ne.s32.totalorder %s493, %s495
      %p499 = scmp.eq.s32.totalorder %s80, 0
      %p500 = por %p498, %p499
      %p501 = scmp.ne.s32.totalorder %s493, %s495
      %p502 = scmp.eq.s32.totalorder %s85, 3
      %p503 = por %p501, %p502
      %p504 = scmp.ne.s32.totalorder %s495, %s496
      %p505 = scmp.eq.s32.totalorder %s85, 0
      %p506 = por %p504, %p505
      %p507 = scmp.ne.s32.totalorder %s495, %s496
      %p508 = scmp.eq.s32.totalorder %s86, 3
      %p509 = por %p507, %p508
      %p511 = scmp.ne.s32.totalorder %s496, %s510
      %p512 = scmp.eq.s32.totalorder %s86, 0
      %p513 = por %p511, %p512
      %s515 = sadd.s32 %s514, 1
      %p518 = scmp.eq.s32.totalorder %s80, 3
      %p519 = scmp.ne.s32.totalorder %s514, %s516
      %p520 = scmp.eq.s32.totalorder %s80, 0
      %p521 = por %p519, %p520
      %p522 = scmp.ne.s32.totalorder %s514, %s516
      %p523 = scmp.eq.s32.totalorder %s85, 3
      %p524 = por %p522, %p523
      %p525 = scmp.ne.s32.totalorder %s516, %s517
      %p526 = scmp.eq.s32.totalorder %s85, 0
      %p527 = por %p525, %p526
      %p528 = scmp.ne.s32.totalorder %s516, %s517
      %p529 = scmp.eq.s32.totalorder %s86, 3
      %p530 = por %p528, %p529
      %p532 = scmp.ne.s32.totalorder %s517, %s531
      %p533 = scmp.eq.s32.totalorder %s86, 0
      %p534 = por %p532, %p533
      %s536 = sadd.s32 %s535, 1
      %p539 = scmp.eq.s32.totalorder %s80, 3
      %p540 = scmp.ne.s32.totalorder %s535, %s537
      %p541 = scmp.eq.s32.totalorder %s80, 0
      %p542 = por %p540, %p541
      %p543 = scmp.ne.s32.totalorder %s535, %s537
      %p544 = scmp.eq.s32.totalorder %s85, 3
      %p545 = por %p543, %p544
      %p546 = scmp.ne.s32.totalorder %s537, %s538
      %p547 = scmp.eq.s32.totalorder %s85, 0
      %p548 = por %p546, %p547
      %p549 = scmp.ne.s32.totalorder %s537, %s538
      %p550 = scmp.eq.s32.totalorder %s86, 3
      %p551 = por %p549, %p550
      %p553 = scmp.ne.s32.totalorder %s538, %s552
      %p554 = scmp.eq.s32.totalorder %s86, 0
      %p555 = por %p553, %p554
      %s557 = sadd.s32 %s556, 1
      %p560 = scmp.eq.s32.totalorder %s80, 3
      %p561 = scmp.ne.s32.totalorder %s556, %s558
      %p562 = scmp.eq.s32.totalorder %s80, 0
      %p563 = por %p561, %p562
      %p564 = scmp.ne.s32.totalorder %s556, %s558
      %p565 = scmp.eq.s32.totalorder %s85, 3
      %p566 = por %p564, %p565
      %p567 = scmp.ne.s32.totalorder %s558, %s559
      %p568 = scmp.eq.s32.totalorder %s85, 0
      %p569 = por %p567, %p568
      %p570 = scmp.ne.s32.totalorder %s558, %s559
      %p571 = scmp.eq.s32.totalorder %s86, 3
      %p572 = por %p570, %p571
      %p574 = scmp.ne.s32.totalorder %s559, %s573
      %p575 = scmp.eq.s32.totalorder %s86, 0
      %p576 = por %p574, %p575
      %s578 = sadd.s32 %s577, 1
      %p581 = scmp.eq.s32.totalorder %s80, 3
      %p582 = scmp.ne.s32.totalorder %s577, %s579
      %p583 = scmp.eq.s32.totalorder %s80, 0
      %p584 = por %p582, %p583
      %p585 = scmp.ne.s32.totalorder %s577, %s579
      %p586 = scmp.eq.s32.totalorder %s85, 3
      %p587 = por %p585, %p586
      %p588 = scmp.ne.s32.totalorder %s579, %s580
      %p589 = scmp.eq.s32.totalorder %s85, 0
      %p590 = por %p588, %p589
      %p591 = scmp.ne.s32.totalorder %s579, %s580
      %p592 = scmp.eq.s32.totalorder %s86, 3
      %p593 = por %p591, %p592
      %p595 = scmp.ne.s32.totalorder %s580, %s594
      %p596 = scmp.eq.s32.totalorder %s86, 0
      %p597 = por %p595, %p596
      %s599 = sadd.s32 %s598, 1
      %p602 = scmp.eq.s32.totalorder %s80, 3
      %p603 = scmp.ne.s32.totalorder %s598, %s600
      %p604 = scmp.eq.s32.totalorder %s80, 0
      %p605 = por %p603, %p604
      %p606 = scmp.ne.s32.totalorder %s598, %s600
      %p607 = scmp.eq.s32.totalorder %s85, 3
      %p608 = por %p606, %p607
      %p609 = scmp.ne.s32.totalorder %s600, %s601
      %p610 = scmp.eq.s32.totalorder %s85, 0
      %p611 = por %p609, %p610
      %p612 = scmp.ne.s32.totalorder %s600, %s601
      %p613 = scmp.eq.s32.totalorder %s86, 3
      %p614 = por %p612, %p613
      %p616 = scmp.ne.s32.totalorder %s601, %s615
      %p617 = scmp.eq.s32.totalorder %s86, 0
      %p618 = por %p616, %p617
      %s620 = sadd.s32 %s619, 1
      %p623 = scmp.eq.s32.totalorder %s80, 3
      %p624 = scmp.ne.s32.totalorder %s619, %s621
      %p625 = scmp.eq.s32.totalorder %s80, 0
      %p626 = por %p624, %p625
      %p627 = scmp.ne.s32.totalorder %s619, %s621
      %p628 = scmp.eq.s32.totalorder %s85, 3
      %p629 = por %p627, %p628
      %p630 = scmp.ne.s32.totalorder %s621, %s622
      %p631 = scmp.eq.s32.totalorder %s85, 0
      %p632 = por %p630, %p631
      %p633 = scmp.ne.s32.totalorder %s621, %s622
      %p634 = scmp.eq.s32.totalorder %s86, 3
      %p635 = por %p633, %p634
      %p637 = scmp.ne.s32.totalorder %s622, %s636
      %p638 = scmp.eq.s32.totalorder %s86, 0
      %p639 = por %p637, %p638
      %s641 = sadd.s32 %s640, 1
      %p644 = scmp.eq.s32.totalorder %s80, 3
      %p645 = scmp.ne.s32.totalorder %s640, %s642
      %p646 = scmp.eq.s32.totalorder %s80, 0
      %p647 = por %p645, %p646
      %p648 = scmp.ne.s32.totalorder %s640, %s642
      %p649 = scmp.eq.s32.totalorder %s85, 3
      %p650 = por %p648, %p649
      %p651 = scmp.ne.s32.totalorder %s642, %s643
      %p652 = scmp.eq.s32.totalorder %s85, 0
      %p653 = por %p651, %p652
      %p654 = scmp.ne.s32.totalorder %s642, %s643
      %p655 = scmp.eq.s32.totalorder %s86, 3
      %p656 = por %p654, %p655
      %p658 = scmp.ne.s32.totalorder %s643, %s657
      %p659 = scmp.eq.s32.totalorder %s86, 0
      %p660 = por %p658, %p659
      %s662 = sadd.s32 %s661, 1
      %p665 = scmp.eq.s32.totalorder %s80, 3
      %p666 = scmp.ne.s32.totalorder %s661, %s663
      %p667 = scmp.eq.s32.totalorder %s80, 0
      %p668 = por %p666, %p667
      %p669 = scmp.ne.s32.totalorder %s661, %s663
      %p670 = scmp.eq.s32.totalorder %s85, 3
      %p671 = por %p669, %p670
      %p672 = scmp.ne.s32.totalorder %s663, %s664
      %p673 = scmp.eq.s32.totalorder %s85, 0
      %p674 = por %p672, %p673
      %p675 = scmp.ne.s32.totalorder %s663, %s664
      %p676 = scmp.eq.s32.totalorder %s86, 3
      %p677 = por %p675, %p676
      %p679 = scmp.ne.s32.totalorder %s664, %s678
      %p680 = scmp.eq.s32.totalorder %s86, 0
      %p681 = por %p679, %p680
      %s683 = sadd.s32 %s682, 1
      %p686 = scmp.eq.s32.totalorder %s80, 3
      %p687 = scmp.ne.s32.totalorder %s682, %s684
      %p688 = scmp.eq.s32.totalorder %s80, 0
      %p689 = por %p687, %p688
      %p690 = scmp.ne.s32.totalorder %s682, %s684
      %p691 = scmp.eq.s32.totalorder %s85, 3
      %p692 = por %p690, %p691
      %p693 = scmp.ne.s32.totalorder %s684, %s685
      %p694 = scmp.eq.s32.totalorder %s85, 0
      %p695 = por %p693, %p694
      %p696 = scmp.ne.s32.totalorder %s684, %s685
      %p697 = scmp.eq.s32.totalorder %s86, 3
      %p698 = por %p696, %p697
      %p700 = scmp.ne.s32.totalorder %s685, %s699
      %p701 = scmp.eq.s32.totalorder %s86, 0
      %p702 = por %p700, %p701
      %s704 = sadd.s32 %s703, 1
      %p707 = scmp.eq.s32.totalorder %s80, 3
      %p708 = scmp.ne.s32.totalorder %s703, %s705
      %p709 = scmp.eq.s32.totalorder %s80, 0
      %p710 = por %p708, %p709
      %p711 = scmp.ne.s32.totalorder %s703, %s705
      %p712 = scmp.eq.s32.totalorder %s85, 3
      %p713 = por %p711, %p712
      %p714 = scmp.ne.s32.totalorder %s705, %s706
      %p715 = scmp.eq.s32.totalorder %s85, 0
      %p716 = por %p714, %p715
      %p717 = scmp.ne.s32.totalorder %s705, %s706
      %p718 = scmp.eq.s32.totalorder %s86, 3
      %p719 = por %p717, %p718
      %p721 = scmp.ne.s32.totalorder %s706, %s720
      %p722 = scmp.eq.s32.totalorder %s86, 0
      %p723 = por %p721, %p722
      %s724 = ssub.s32 %s87, %s99
      %s725 = ssub.s32 %s88, %s95
      %s726 = sor.u32 %s724, %s725
      %p727 = scmp.eq.s32.totalorder %s726, 0
      %s729 = sadd.s32 %s728, 1
      %s730 = scalar_select %p727, %s728, %s729
      %p733 = pneg %p727
      %p734 = scmp.eq.s32.totalorder %s80, 3
      %p735 = por %p733, %p734
      %p736 = scmp.ne.s32.totalorder %s728, %s731
      %p737 = scmp.eq.s32.totalorder %s80, 0
      %p738 = por %p736, %p737
      %p739 = scmp.ne.s32.totalorder %s728, %s731
      %p740 = scmp.eq.s32.totalorder %s85, 3
      %p741 = por %p739, %p740
      %p742 = scmp.ne.s32.totalorder %s731, %s732
      %p743 = scmp.eq.s32.totalorder %s85, 0
      %p744 = por %p742, %p743
      %p745 = scmp.ne.s32.totalorder %s731, %s732
      %p746 = scmp.eq.s32.totalorder %s86, 3
      %p747 = por %p745, %p746
      %p749 = scmp.ne.s32.totalorder %s732, %s748
      %p750 = scmp.eq.s32.totalorder %s86, 0
      %p751 = por %p749, %p750
      %p752 = scmp.le.s32.totalorder 1, %s80
      %p753 = scmp.lt.s32.totalorder %s80, 5
      %p754 = pnand %p752, %p753
      %p755 = pneg %p754
      // Predicated region
      $region9: #{tpu_custom_call.1} parent=5 // pred_check
        _
      $region10: #{tpu_custom_call.1} parent=5 // pred_check_branch
        %757 = sbr.rel (%p754) target = $region12
      $region11: #{tpu_custom_call.1} parent=5 // pred_region
        %s758 = ssub.s32 %s80, 1
        // Predicated region
        $region13: #{tpu_custom_call.1} parent=11 // pred_check
          %p759 = pneg %p191
        $region14: #{tpu_custom_call.1} parent=11 // pred_check_branch
          %761 = sbr.rel (%p759) target = $region16
        $region15: #{tpu_custom_call.1} parent=11 // pred_region
          %763 = vsyncadd [#allocation11], 0
          %s764 = sshll.u32 %s7, 4
          %s765 = int_to_ptr.hbm [resolvable:$true] %s764
          %s766 = sshll.u32 [#allocation12], 4
          %s767 = int_to_ptr.vmem [resolvable:$true] %s766
          %772 = dma.hbm_to_vmem [thread:$0]  %s765, 512, %s767, [#allocation11], 64, 64, 4
        $region16: #{tpu_custom_call.1} parent=11 // pred_fallthru
          _
        // Predicated region
        $region17: #{tpu_custom_call.1} parent=11 // pred_check
          %p773 = pneg %p212
        $region18: #{tpu_custom_call.1} parent=11 // pred_check_branch
          %775 = sbr.rel (%p773) target = $region20
        $region19: #{tpu_custom_call.1} parent=11 // pred_region
          %777 = vsyncadd [#allocation14], 0
          %s779 = sshll.u32 %s9, 4
          %s780 = int_to_ptr.hbm [resolvable:$true] %s779
          %s781 = sshll.u32 [#allocation13], 4
          %s782 = int_to_ptr.vmem [resolvable:$true] %s781
          %784 = dma.hbm_to_vmem [thread:$0]  %s780, 16, %s782, [#allocation14]
        $region20: #{tpu_custom_call.1} parent=11 // pred_fallthru
          _
        // Predicated region
        $region21: #{tpu_custom_call.1} parent=11 // pred_check
          %p785 = pneg %p233
        $region22: #{tpu_custom_call.1} parent=11 // pred_check_branch
          %787 = sbr.rel (%p785) target = $region24
        $region23: #{tpu_custom_call.1} parent=11 // pred_region
          %789 = vsyncadd [#allocation14], 0
          %s791 = sshll.u32 %s11, 4
          %s792 = int_to_ptr.hbm [resolvable:$true] %s791
          %s793 = sshll.u32 [#allocation15], 4
          %s794 = int_to_ptr.vmem [resolvable:$true] %s793
          %796 = dma.hbm_to_vmem [thread:$0]  %s792, 16, %s794, [#allocation14]
        $region24: #{tpu_custom_call.1} parent=11 // pred_fallthru
          _
        // Predicated region
        $region25: #{tpu_custom_call.1} parent=11 // pred_check
          %p797 = pneg %p254
        $region26: #{tpu_custom_call.1} parent=11 // pred_check_branch
          %799 = sbr.rel (%p797) target = $region28
        $region27: #{tpu_custom_call.1} parent=11 // pred_region
          _
        $region28: #{tpu_custom_call.1} parent=11 // pred_fallthru
          _
        // Predicated region
        $region29: #{tpu_custom_call.1} parent=11 // pred_check
          %p800 = pneg %p275
        $region30: #{tpu_custom_call.1} parent=11 // pred_check_branch
          %802 = sbr.rel (%p800) target = $region32
        $region31: #{tpu_custom_call.1} parent=11 // pred_region
          %804 = vsyncadd [#allocation17], 0
          %s805 = sshll.u32 %s15, 4
          %s806 = int_to_ptr.hbm [resolvable:$true] %s805
          %s807 = sshll.u32 [#allocation16], 4
          %s808 = int_to_ptr.vmem [resolvable:$true] %s807
          %813 = dma.hbm_to_vmem [thread:$0]  %s806, 512, %s808, [#allocation17], 64, 64, 4
        $region32: #{tpu_custom_call.1} parent=11 // pred_fallthru
          _
        // Predicated region
        $region33: #{tpu_custom_call.1} parent=11 // pred_check
          %p814 = pneg %p296
        $region34: #{tpu_custom_call.1} parent=11 // pred_check_branch
          %816 = sbr.rel (%p814) target = $region36
        $region35: #{tpu_custom_call.1} parent=11 // pred_region
          %818 = vsyncadd [#allocation17], 0
          %s819 = sshll.u32 %s17, 4
          %s820 = int_to_ptr.hbm [resolvable:$true] %s819
          %s821 = sshll.u32 [#allocation18], 4
          %s822 = int_to_ptr.vmem [resolvable:$true] %s821
          %827 = dma.hbm_to_vmem [thread:$0]  %s820, 512, %s822, [#allocation17], 64, 64, 4
        $region36: #{tpu_custom_call.1} parent=11 // pred_fallthru
          _
        // Predicated region
        $region37: #{tpu_custom_call.1} parent=11 // pred_check
          %p828 = pneg %p317
        $region38: #{tpu_custom_call.1} parent=11 // pred_check_branch
          %830 = sbr.rel (%p828) target = $region40
        $region39: #{tpu_custom_call.1} parent=11 // pred_region
          %832 = vsyncadd [#allocation20], 0
          %s833 = sshll.u32 %s19, 4
          %s834 = int_to_ptr.hbm [resolvable:$true] %s833
          %s835 = sshll.u32 [#allocation19], 4
          %s836 = int_to_ptr.vmem [resolvable:$true] %s835
          %841 = dma.hbm_to_vmem [thread:$0]  %s834, 512, %s836, [#allocation20], 64, 64, 4
        $region40: #{tpu_custom_call.1} parent=11 // pred_fallthru
          _
        // Predicated region
        $region41: #{tpu_custom_call.1} parent=11 // pred_check
          %p842 = pneg %p338
        $region42: #{tpu_custom_call.1} parent=11 // pred_check_branch
          %844 = sbr.rel (%p842) target = $region44
        $region43: #{tpu_custom_call.1} parent=11 // pred_region
          %846 = vsyncadd [#allocation20], 0
          %s847 = sshll.u32 %s21, 4
          %s848 = int_to_ptr.hbm [resolvable:$true] %s847
          %s849 = sshll.u32 [#allocation21], 4
          %s850 = int_to_ptr.vmem [resolvable:$true] %s849
          %855 = dma.hbm_to_vmem [thread:$0]  %s848, 512, %s850, [#allocation20], 64, 64, 4
        $region44: #{tpu_custom_call.1} parent=11 // pred_fallthru
          _
        // Predicated region
        $region45: #{tpu_custom_call.1} parent=11 // pred_check
          %p856 = pneg %p359
        $region46: #{tpu_custom_call.1} parent=11 // pred_check_branch
          %858 = sbr.rel (%p856) target = $region48
        $region47: #{tpu_custom_call.1} parent=11 // pred_region
          _
        $region48: #{tpu_custom_call.1} parent=11 // pred_fallthru
          _
        // Predicated region
        $region49: #{tpu_custom_call.1} parent=11 // pred_check
          %p859 = pneg %p380
        $region50: #{tpu_custom_call.1} parent=11 // pred_check_branch
          %861 = sbr.rel (%p859) target = $region52
        $region51: #{tpu_custom_call.1} parent=11 // pred_region
          _
        $region52: #{tpu_custom_call.1} parent=11 // pred_fallthru
          _
        // Predicated region
        $region53: #{tpu_custom_call.1} parent=11 // pred_check
          %p862 = pneg %p401
        $region54: #{tpu_custom_call.1} parent=11 // pred_check_branch
          %864 = sbr.rel (%p862) target = $region56
        $region55: #{tpu_custom_call.1} parent=11 // pred_region
          _
        $region56: #{tpu_custom_call.1} parent=11 // pred_fallthru
          _
        // Predicated region
        $region57: #{tpu_custom_call.1} parent=11 // pred_check
          %p865 = pneg %p422
        $region58: #{tpu_custom_call.1} parent=11 // pred_check_branch
          %867 = sbr.rel (%p865) target = $region60
        $region59: #{tpu_custom_call.1} parent=11 // pred_region
          %869 = vsyncadd [#allocation23], 0
          %s870 = sshll.u32 %s29, 4
          %s871 = int_to_ptr.hbm [resolvable:$true] %s870
          %s872 = sshll.u32 [#allocation22], 4
          %s873 = int_to_ptr.vmem [resolvable:$true] %s872
          %878 = dma.hbm_to_vmem [thread:$0]  %s871, 512, %s873, [#allocation23], 64, 64, 4
        $region60: #{tpu_custom_call.1} parent=11 // pred_fallthru
          _
        // Predicated region
        $region61: #{tpu_custom_call.1} parent=11 // pred_check
          %p879 = pneg %p443
        $region62: #{tpu_custom_call.1} parent=11 // pred_check_branch
          %881 = sbr.rel (%p879) target = $region64
        $region63: #{tpu_custom_call.1} parent=11 // pred_region
          %883 = vsyncadd [#allocation23], 0
          %s884 = sshll.u32 %s31, 4
          %s885 = int_to_ptr.hbm [resolvable:$true] %s884
          %s886 = sshll.u32 [#allocation24], 4
          %s887 = int_to_ptr.vmem [resolvable:$true] %s886
          %892 = dma.hbm_to_vmem [thread:$0]  %s885, 512, %s887, [#allocation23], 64, 64, 4
        $region64: #{tpu_custom_call.1} parent=11 // pred_fallthru
          _
        // Predicated region
        $region65: #{tpu_custom_call.1} parent=11 // pred_check
          %p893 = pneg %p464
        $region66: #{tpu_custom_call.1} parent=11 // pred_check_branch
          %895 = sbr.rel (%p893) target = $region68
        $region67: #{tpu_custom_call.1} parent=11 // pred_region
          %897 = vsyncadd [#allocation26], 0
          %s898 = sshll.u32 %s33, 4
          %s899 = int_to_ptr.hbm [resolvable:$true] %s898
          %s900 = sshll.u32 [#allocation25], 4
          %s901 = int_to_ptr.vmem [resolvable:$true] %s900
          %906 = dma.hbm_to_vmem [thread:$0]  %s899, 512, %s901, [#allocation26], 64, 64, 4
        $region68: #{tpu_custom_call.1} parent=11 // pred_fallthru
          _
        // Predicated region
        $region69: #{tpu_custom_call.1} parent=11 // pred_check
          %p907 = pneg %p485
        $region70: #{tpu_custom_call.1} parent=11 // pred_check_branch
          %909 = sbr.rel (%p907) target = $region72
        $region71: #{tpu_custom_call.1} parent=11 // pred_region
          %911 = vsyncadd [#allocation26], 0
          %s912 = sshll.u32 %s35, 4
          %s913 = int_to_ptr.hbm [resolvable:$true] %s912
          %s914 = sshll.u32 [#allocation27], 4
          %s915 = int_to_ptr.vmem [resolvable:$true] %s914
          %920 = dma.hbm_to_vmem [thread:$0]  %s913, 512, %s915, [#allocation26], 64, 64, 4
        $region72: #{tpu_custom_call.1} parent=11 // pred_fallthru
          _
        // Predicated region
        $region73: #{tpu_custom_call.1} parent=11 // pred_check
          %p921 = pneg %p506
        $region74: #{tpu_custom_call.1} parent=11 // pred_check_branch
          %923 = sbr.rel (%p921) target = $region76
        $region75: #{tpu_custom_call.1} parent=11 // pred_region
          _
        $region76: #{tpu_custom_call.1} parent=11 // pred_fallthru
          _
        // Predicated region
        $region77: #{tpu_custom_call.1} parent=11 // pred_check
          %p924 = pneg %p527
        $region78: #{tpu_custom_call.1} parent=11 // pred_check_branch
          %926 = sbr.rel (%p924) target = $region80
        $region79: #{tpu_custom_call.1} parent=11 // pred_region
          _
        $region80: #{tpu_custom_call.1} parent=11 // pred_fallthru
          _
        // Predicated region
        $region81: #{tpu_custom_call.1} parent=11 // pred_check
          %p927 = pneg %p548
        $region82: #{tpu_custom_call.1} parent=11 // pred_check_branch
          %929 = sbr.rel (%p927) target = $region84
        $region83: #{tpu_custom_call.1} parent=11 // pred_region
          _
        $region84: #{tpu_custom_call.1} parent=11 // pred_fallthru
          _
        // Predicated region
        $region85: #{tpu_custom_call.1} parent=11 // pred_check
          %p930 = pneg %p569
        $region86: #{tpu_custom_call.1} parent=11 // pred_check_branch
          %932 = sbr.rel (%p930) target = $region88
        $region87: #{tpu_custom_call.1} parent=11 // pred_region
          _
        $region88: #{tpu_custom_call.1} parent=11 // pred_fallthru
          _
        // Predicated region
        $region89: #{tpu_custom_call.1} parent=11 // pred_check
          %p933 = pneg %p590
        $region90: #{tpu_custom_call.1} parent=11 // pred_check_branch
          %935 = sbr.rel (%p933) target = $region92
        $region91: #{tpu_custom_call.1} parent=11 // pred_region
          _
        $region92: #{tpu_custom_call.1} parent=11 // pred_fallthru
          _
        // Predicated region
        $region93: #{tpu_custom_call.1} parent=11 // pred_check
          %p936 = pneg %p611
        $region94: #{tpu_custom_call.1} parent=11 // pred_check_branch
          %938 = sbr.rel (%p936) target = $region96
        $region95: #{tpu_custom_call.1} parent=11 // pred_region
          %940 = vsyncadd [#allocation29], 0
          %s941 = sshll.u32 %s47, 4
          %s942 = int_to_ptr.hbm [resolvable:$true] %s941
          %s943 = sshll.u32 [#allocation28], 4
          %s944 = int_to_ptr.vmem [resolvable:$true] %s943
          %949 = dma.hbm_to_vmem [thread:$0]  %s942, 1024, %s944, [#allocation29], 128, 128, 8
        $region96: #{tpu_custom_call.1} parent=11 // pred_fallthru
          _
        // Predicated region
        $region97: #{tpu_custom_call.1} parent=11 // pred_check
          %p950 = pneg %p632
        $region98: #{tpu_custom_call.1} parent=11 // pred_check_branch
          %952 = sbr.rel (%p950) target = $region100
        $region99: #{tpu_custom_call.1} parent=11 // pred_region
          _
        $region100: #{tpu_custom_call.1} parent=11 // pred_fallthru
          _
        // Predicated region
        $region101: #{tpu_custom_call.1} parent=11 // pred_check
          %p953 = pneg %p653
        $region102: #{tpu_custom_call.1} parent=11 // pred_check_branch
          %955 = sbr.rel (%p953) target = $region104
        $region103: #{tpu_custom_call.1} parent=11 // pred_region
          _
        $region104: #{tpu_custom_call.1} parent=11 // pred_fallthru
          _
        // Predicated region
        $region105: #{tpu_custom_call.1} parent=11 // pred_check
          %p956 = pneg %p674
        $region106: #{tpu_custom_call.1} parent=11 // pred_check_branch
          %958 = sbr.rel (%p956) target = $region108
        $region107: #{tpu_custom_call.1} parent=11 // pred_region
          _
        $region108: #{tpu_custom_call.1} parent=11 // pred_fallthru
          _
        // Predicated region
        $region109: #{tpu_custom_call.1} parent=11 // pred_check
          %p959 = pneg %p695
        $region110: #{tpu_custom_call.1} parent=11 // pred_check_branch
          %961 = sbr.rel (%p959) target = $region112
        $region111: #{tpu_custom_call.1} parent=11 // pred_region
          %963 = vsyncadd [#allocation29], 0
          %s964 = sshll.u32 %s55, 4
          %s965 = int_to_ptr.hbm [resolvable:$true] %s964
          %s966 = sshll.u32 [#allocation30], 4
          %s967 = int_to_ptr.vmem [resolvable:$true] %s966
          %972 = dma.hbm_to_vmem [thread:$0]  %s965, 512, %s967, [#allocation29], 64, 64, 4
        $region112: #{tpu_custom_call.1} parent=11 // pred_fallthru
          _
        // Predicated region
        $region113: #{tpu_custom_call.1} parent=11 // pred_check
          %p973 = pneg %p716
        $region114: #{tpu_custom_call.1} parent=11 // pred_check_branch
          %975 = sbr.rel (%p973) target = $region116
        $region115: #{tpu_custom_call.1} parent=11 // pred_region
          _
        $region116: #{tpu_custom_call.1} parent=11 // pred_fallthru
          _
      $region12: #{tpu_custom_call.1} parent=5 // pred_fallthru
        _
      %p976 = scmp.lt.s32.totalorder %s80, 4
      // Predicated region
      $region117: #{tpu_custom_call.1} parent=5 // pred_check
        %p977 = pneg %p976
      $region118: #{tpu_custom_call.1} parent=5 // pred_check_branch
        %979 = sbr.rel (%p977) target = $region120
      $region119: #{tpu_custom_call.1} parent=5 // pred_region
        // Predicated region
        $region121: #{tpu_custom_call.1} parent=119 // pred_check
          %p980 = pneg %p112
        $region122: #{tpu_custom_call.1} parent=119 // pred_check_branch
          %982 = sbr.rel (%p980) target = $region124
        $region123: #{tpu_custom_call.1} parent=119 // pred_region
          %p983 = scmp.lt.s32.totalorder %s87, 1
          %s984 = scalar_select %p983, %s87, 1
          %s985 = smul.addr %s984, 8
          %s986 = smul.addr %s985, 8
          %s987 = scalar_lea.vmem %s1, %s986
        $region124: #{tpu_custom_call.1} parent=119 // pred_fallthru
          _
        // Predicated region
        $region125: #{tpu_custom_call.1} parent=119 // pred_check
          %p988 = pneg %p138
        $region126: #{tpu_custom_call.1} parent=119 // pred_check_branch
          %990 = sbr.rel (%p988) target = $region128
        $region127: #{tpu_custom_call.1} parent=119 // pred_region
          %s991 = sand.u32 %s128, 1
          %s992 = scalar_lea.sflag [#allocation8], %s991
          %s993 = sand.u32 %s128, 1
          %s994 = smul.addr %s993, 16
          %s995 = scalar_lea.vmem [#allocation7], %s994
          %997 = vsyncadd %s992, 0
          %s998 = smul.addr %s87, 2
          %s999 = smul.addr %s998, 8
          %s1000 = scalar_lea.hbm %s3, %s999
          %s1001 = sshll.u32 %s1000, 4
          %s1002 = int_to_ptr.hbm [resolvable:$true] %s1001
          %s1003 = sshll.u32 %s995, 4
          %s1004 = int_to_ptr.vmem [resolvable:$true] %s1003
          %1009 = dma.hbm_to_vmem [thread:$0]  %s1002, 256, %s1004, %s992, 128, 128, 8
        $region128: #{tpu_custom_call.1} parent=119 // pred_fallthru
          _
        // Predicated region
        $region129: #{tpu_custom_call.1} parent=119 // pred_check
          %p1010 = pneg %p164
        $region130: #{tpu_custom_call.1} parent=119 // pred_check_branch
          %1012 = sbr.rel (%p1010) target = $region132
        $region131: #{tpu_custom_call.1} parent=119 // pred_region
          %s1013 = sand.u32 %s80, 1
          %s1014 = scalar_lea.sflag [#allocation11], %s1013
          %s1015 = sand.u32 %s154, 1
          %s1016 = smul.addr %s1015, 2
          %s1017 = scalar_lea.vmem [#allocation10], %s1016
          %1019 = vsyncadd %s1014, 0
          %s1020 = smul.addr %s87, 2
          %s1021 = scalar_lea.hbm %s5, %s1020
          %s1023 = sshll.u32 %s1021, 4
          %s1024 = int_to_ptr.hbm [resolvable:$true] %s1023
          %s1025 = sshll.u32 %s1017, 4
          %s1026 = int_to_ptr.vmem [resolvable:$true] %s1025
          %1028 = dma.hbm_to_vmem [thread:$0]  %s1024, 32, %s1026, %s1014
        $region132: #{tpu_custom_call.1} parent=119 // pred_fallthru
          _
      $region120: #{tpu_custom_call.1} parent=5 // pred_fallthru
        _
      %p1029 = scmp.le.s32.totalorder 1, %s80
      %p1030 = scmp.lt.s32.totalorder %s80, 5
      %p1031 = pnand %p1029, %p1030
      %p1032 = pneg %p1031
      // Predicated region
      $region133: #{tpu_custom_call.1} parent=5 // pred_check
        _
      $region134: #{tpu_custom_call.1} parent=5 // pred_check_branch
        %1034 = sbr.rel (%p1031) target = $region136
      $region135: #{tpu_custom_call.1} parent=5 // pred_region
        %s1035 = ssub.s32 %s80, 1
        %s1036 = sand.u32 %s131, 1
        %s1037 = scalar_lea.sflag [#allocation8], %s1036
        %s1038 = sand.u32 %s131, 1
        %s1039 = smul.addr %s1038, 16
        %s1040 = scalar_lea.vmem [#allocation7], %s1039
        // Predicated region
        $region137: #{tpu_custom_call.1} parent=135 // pred_check
          %p1041 = pneg %p144
        $region138: #{tpu_custom_call.1} parent=135 // pred_check_branch
          %1043 = sbr.rel (%p1041) target = $region140
        $region139: #{tpu_custom_call.1} parent=135 // pred_region
          %1045 = dma.done %s1037, 256
        $region140: #{tpu_custom_call.1} parent=135 // pred_fallthru
          _
        %s1046 = sand.u32 %s85, 1
        %s1047 = scalar_lea.sflag [#allocation11], %s1046
        %s1048 = sand.u32 %s157, 1
        %s1049 = smul.addr %s1048, 2
        %s1050 = scalar_lea.vmem [#allocation10], %s1049
        // Predicated region
        $region141: #{tpu_custom_call.1} parent=135 // pred_check
          %p1051 = pneg %p170
        $region142: #{tpu_custom_call.1} parent=135 // pred_check_branch
          %1053 = sbr.rel (%p1051) target = $region144
        $region143: #{tpu_custom_call.1} parent=135 // pred_region
          %1055 = dma.done %s1047, 32
        $region144: #{tpu_custom_call.1} parent=135 // pred_fallthru
          _
        // Predicated region
        $region145: #{tpu_custom_call.1} parent=135 // pred_check
          %p1056 = pneg %p191
        $region146: #{tpu_custom_call.1} parent=135 // pred_check_branch
          %1058 = sbr.rel (%p1056) target = $region148
        $region147: #{tpu_custom_call.1} parent=135 // pred_region
          %1060 = dma.done [#allocation11], 512
        $region148: #{tpu_custom_call.1} parent=135 // pred_fallthru
          _
        // Predicated region
        $region149: #{tpu_custom_call.1} parent=135 // pred_check
          %p1061 = pneg %p212
        $region150: #{tpu_custom_call.1} parent=135 // pred_check_branch
          %1063 = sbr.rel (%p1061) target = $region152
        $region151: #{tpu_custom_call.1} parent=135 // pred_region
          %1065 = dma.done [#allocation14], 16
        $region152: #{tpu_custom_call.1} parent=135 // pred_fallthru
          _
        // Predicated region
        $region153: #{tpu_custom_call.1} parent=135 // pred_check
          %p1066 = pneg %p233
        $region154: #{tpu_custom_call.1} parent=135 // pred_check_branch
          %1068 = sbr.rel (%p1066) target = $region156
        $region155: #{tpu_custom_call.1} parent=135 // pred_region
          %1070 = dma.done [#allocation14], 16
        $region156: #{tpu_custom_call.1} parent=135 // pred_fallthru
          _
        // Predicated region
        $region157: #{tpu_custom_call.1} parent=135 // pred_check
          %p1071 = pneg %p275
        $region158: #{tpu_custom_call.1} parent=135 // pred_check_branch
          %1073 = sbr.rel (%p1071) target = $region160
        $region159: #{tpu_custom_call.1} parent=135 // pred_region
          %1075 = dma.done [#allocation17], 512
        $region160: #{tpu_custom_call.1} parent=135 // pred_fallthru
          _
        // Predicated region
        $region161: #{tpu_custom_call.1} parent=135 // pred_check
          %p1076 = pneg %p296
        $region162: #{tpu_custom_call.1} parent=135 // pred_check_branch
          %1078 = sbr.rel (%p1076) target = $region164
        $region163: #{tpu_custom_call.1} parent=135 // pred_region
          %1080 = dma.done [#allocation17], 512
        $region164: #{tpu_custom_call.1} parent=135 // pred_fallthru
          _
        // Predicated region
        $region165: #{tpu_custom_call.1} parent=135 // pred_check
          %p1081 = pneg %p317
        $region166: #{tpu_custom_call.1} parent=135 // pred_check_branch
          %1083 = sbr.rel (%p1081) target = $region168
        $region167: #{tpu_custom_call.1} parent=135 // pred_region
          %1085 = dma.done [#allocation20], 512
        $region168: #{tpu_custom_call.1} parent=135 // pred_fallthru
          _
        // Predicated region
        $region169: #{tpu_custom_call.1} parent=135 // pred_check
          %p1086 = pneg %p338
        $region170: #{tpu_custom_call.1} parent=135 // pred_check_branch
          %1088 = sbr.rel (%p1086) target = $region172
        $region171: #{tpu_custom_call.1} parent=135 // pred_region
          %1090 = dma.done [#allocation20], 512
        $region172: #{tpu_custom_call.1} parent=135 // pred_fallthru
          _
        // Predicated region
        $region173: #{tpu_custom_call.1} parent=135 // pred_check
          %p1091 = pneg %p422
        $region174: #{tpu_custom_call.1} parent=135 // pred_check_branch
          %1093 = sbr.rel (%p1091) target = $region176
        $region175: #{tpu_custom_call.1} parent=135 // pred_region
          %1095 = dma.done [#allocation23], 512
        $region176: #{tpu_custom_call.1} parent=135 // pred_fallthru
          _
        // Predicated region
        $region177: #{tpu_custom_call.1} parent=135 // pred_check
          %p1096 = pneg %p443
        $region178: #{tpu_custom_call.1} parent=135 // pred_check_branch
          %1098 = sbr.rel (%p1096) target = $region180
        $region179: #{tpu_custom_call.1} parent=135 // pred_region
          %1100 = dma.done [#allocation23], 512
        $region180: #{tpu_custom_call.1} parent=135 // pred_fallthru
          _
        // Predicated region
        $region181: #{tpu_custom_call.1} parent=135 // pred_check
          %p1101 = pneg %p464
        $region182: #{tpu_custom_call.1} parent=135 // pred_check_branch
          %1103 = sbr.rel (%p1101) target = $region184
        $region183: #{tpu_custom_call.1} parent=135 // pred_region
          %1105 = dma.done [#allocation26], 512
        $region184: #{tpu_custom_call.1} parent=135 // pred_fallthru
          _
        // Predicated region
        $region185: #{tpu_custom_call.1} parent=135 // pred_check
          %p1106 = pneg %p485
        $region186: #{tpu_custom_call.1} parent=135 // pred_check_branch
          %1108 = sbr.rel (%p1106) target = $region188
        $region187: #{tpu_custom_call.1} parent=135 // pred_region
          %1110 = dma.done [#allocation26], 512
        $region188: #{tpu_custom_call.1} parent=135 // pred_fallthru
          _
        // Predicated region
        $region189: #{tpu_custom_call.1} parent=135 // pred_check
          %p1111 = pneg %p611
        $region190: #{tpu_custom_call.1} parent=135 // pred_check_branch
          %1113 = sbr.rel (%p1111) target = $region192
        $region191: #{tpu_custom_call.1} parent=135 // pred_region
          %1115 = dma.done [#allocation29], 1024
        $region192: #{tpu_custom_call.1} parent=135 // pred_fallthru
          _
        // Predicated region
        $region193: #{tpu_custom_call.1} parent=135 // pred_check
          %p1116 = pneg %p695
        $region194: #{tpu_custom_call.1} parent=135 // pred_check_branch
          %1118 = sbr.rel (%p1116) target = $region196
        $region195: #{tpu_custom_call.1} parent=135 // pred_region
          %1120 = dma.done [#allocation29], 512
        $region196: #{tpu_custom_call.1} parent=135 // pred_fallthru
          _
        %p1121 = scmp.lt.s32.totalorder %s89, 1
        %s1122 = scalar_select %p1121, %s89, 1
        %s1123 = smul.addr %s1122, 8
        %s1124 = smul.addr %s1123, 8
        %s1125 = scalar_lea.vmem %s1, %s1124
        %p1126 = pneg %p118
        %p1127 = pneg %p115
        %s1128 = sand.u32 %s131, 1
        %s1129 = scalar_lea.sflag [#allocation8], %s1128
        %s1130 = sand.u32 %s131, 1
        %s1131 = smul.addr %s1130, 16
        %s1132 = scalar_lea.vmem [#allocation7], %s1131
        %p1133 = pneg %p144
        %p1134 = pneg %p141
        %s1135 = sand.u32 %s85, 1
        %s1136 = scalar_lea.sflag [#allocation11], %s1135
        %s1137 = sand.u32 %s157, 1
        %s1138 = smul.addr %s1137, 2
        %s1139 = scalar_lea.vmem [#allocation10], %s1138
        %p1140 = pneg %p170
        %p1141 = pneg %p167
        %p1142 = pneg %p191
        %p1143 = pneg %p188
        %p1144 = pneg %p212
        %p1145 = pneg %p209
        %p1146 = pneg %p233
        %p1147 = pneg %p230
        %p1148 = pneg %p254
        %p1149 = pneg %p251
        %p1150 = pneg %p275
        %p1151 = pneg %p272
        %p1152 = pneg %p296
        %p1153 = pneg %p293
        %p1154 = pneg %p317
        %p1155 = pneg %p314
        %p1156 = pneg %p338
        %p1157 = pneg %p335
        %p1158 = pneg %p359
        %p1159 = pneg %p356
        %p1160 = pneg %p380
        %p1161 = pneg %p377
        %p1162 = pneg %p401
        %p1163 = pneg %p398
        %p1164 = pneg %p422
        %p1165 = pneg %p419
        %p1166 = pneg %p443
        %p1167 = pneg %p440
        %p1168 = pneg %p464
        %p1169 = pneg %p461
        %p1170 = pneg %p485
        %p1171 = pneg %p482
        %p1172 = pneg %p506
        %p1173 = pneg %p503
        %p1174 = pneg %p527
        %p1175 = pneg %p524
        %p1176 = pneg %p548
        %p1177 = pneg %p545
        %p1178 = pneg %p569
        %p1179 = pneg %p566
        %p1180 = pneg %p590
        %p1181 = pneg %p587
        %p1182 = pneg %p611
        %p1183 = pneg %p608
        %p1184 = pneg %p632
        %p1185 = pneg %p629
        %p1186 = pneg %p653
        %p1187 = pneg %p650
        %p1188 = pneg %p674
        %p1189 = pneg %p671
        %p1190 = pneg %p695
        %p1191 = pneg %p692
        %p1192 = pneg %p716
        %p1193 = pneg %p713
        %p1194 = pneg %p744
        %p1195 = pneg %p741
        %s1196 = sand.u32 %s731, 1
        %s1197 = scalar_lea.sflag [#allocation9], %s1196
        %s1198 = sand.u32 %s731, 1
        %s1199 = smul.addr %s1198, 32
        %s1200 = scalar_lea.vmem [#allocation31], %s1199
        %p1201 = scmp.lt.s32.totalorder %s89, 1
        %s1202 = scalar_select %p1201, %s89, 1
        %s1203 = smul.addr %s1202, 8
        %s1204 = smul.addr %s1203, 8
        %s1205 = scalar_lea.vmem %s1, %s1204
        %s1206 = smul.u32 4, %s90
        %p1208 = scmp.eq.s32.totalorder %s90, 0
        // Predicated region
        $region197: #{tpu_custom_call.1} parent=135 // pred_check
          %p1209 = pneg %p1208
        $region198: #{tpu_custom_call.1} parent=135 // pred_check_branch
          %1211 = sbr.rel (%p1209) target = $region200
        $region199: #{tpu_custom_call.1} parent=135 // pred_region
          %v1212 = vld [vmem:[%s1205] sm:$0xff]
          %v1213 = vld [vmem:[%s1205 + $0x8] sm:$0xff]
          %v1214 = vld [vmem:[%s1205 + $0x10] sm:$0xff]
          %v1215 = vld [vmem:[%s1205 + $0x18] sm:$0xff]
          %v1216 = vld [vmem:[%s1205 + $0x20] sm:$0xff]
          %v1217 = vld [vmem:[%s1205 + $0x28] sm:$0xff]
          %v1218 = vld [vmem:[%s1205 + $0x30] sm:$0xff]
          %v1219 = vld [vmem:[%s1205 + $0x38] sm:$0xff]
          %v1220 = vld [vmem:[%s1050] sm:$0x1]
          %v1221 = vld [vmem:[%s1050 + $0x1] sm:$0x1]
          %v1222 = vperm.slane %v1220, 0
          %v1223 = vmul.f32 %v1212, %v1222
          %v1224 = vmul.f32 %v1213, %v1222
          %v1225 = vmul.f32 %v1214, %v1222
          %v1226 = vmul.f32 %v1215, %v1222
          %v1227 = vmul.f32 %v1216, %v1222
          %v1228 = vmul.f32 %v1217, %v1222
          %v1229 = vmul.f32 %v1218, %v1222
          %v1230 = vmul.f32 %v1219, %v1222
          %v1231 = vperm.slane %v1221, 0
          %v1232 = vadd.f32 %v1223, %v1231
          %v1233 = vadd.f32 %v1224, %v1231
          %v1234 = vadd.f32 %v1225, %v1231
          %v1235 = vadd.f32 %v1226, %v1231
          %v1236 = vadd.f32 %v1227, %v1231
          %v1237 = vadd.f32 %v1228, %v1231
          %v1238 = vadd.f32 %v1229, %v1231
          %v1239 = vadd.f32 %v1230, %v1231
          %v1240 = vpack.c.bf16 %v1233, %v1232
          %v1241 = vpack.c.bf16 %v1235, %v1234
          %v1242 = vpack.c.bf16 %v1237, %v1236
          %v1243 = vpack.c.bf16 %v1239, %v1238
          %v1244 = vld [vmem:[#allocation12] sm:$0xf]
          %v1245 = vld [vmem:[#allocation12 + $0x4] sm:$0xf]
          %v1246 = vld [vmem:[#allocation12 + $0x8] sm:$0xf]
          %v1247 = vld [vmem:[#allocation12 + $0xc] sm:$0xf]
          %v1248 = vld [vmem:[#allocation12 + $0x10] sm:$0xf]
          %v1249 = vld [vmem:[#allocation12 + $0x14] sm:$0xf]
          %v1250 = vld [vmem:[#allocation12 + $0x18] sm:$0xf]
          %v1251 = vld [vmem:[#allocation12 + $0x1c] sm:$0xf]
          %v1252 = vld [vmem:[#allocation13] sm:$0x1]
          %v1254 = vperm.slane %v1252, 0
          %v1264 = vunpack.c.l.b16 %v1244
          %v1265 = vunpack.c.l.b16 %v1245
          %v1266 = vunpack.c.l.b16 %v1246
          %v1267 = vunpack.c.l.b16 %v1247
          %v1268 = vunpack.c.l.b16 %v1248
          %v1269 = vunpack.c.l.b16 %v1249
          %v1270 = vunpack.c.l.b16 %v1250
          %v1271 = vunpack.c.l.b16 %v1251
          %v1272 = vpack.c.b16 %v1265, %v1264
          %v1273 = vpack.c.b16 %v1267, %v1266
          %v1274 = vpack.c.b16 %v1269, %v1268
          %v1275 = vpack.c.b16 %v1271, %v1270
          %vm1280 = vcmask 523264
          %v1282 = vsel %vm1280, %v1240, 0
          %v1285 = vsel %vm1280, %v1241, 0
          %v1288 = vsel %vm1280, %v1242, 0
          %v1291 = vsel %vm1280, %v1243, 0
          %1293 = vmatpush.bf16.msra.mxu0 0
          %1294 = vmatpush.bf16.msra.mxu0 0
          %1295 = vmatpush.bf16.msra.mxu0 0
          %1296 = vmatpush.bf16.msra.mxu0 0
          %1297 = vmatpush.bf16.msra.mxu0 %v1275
          %1298 = vmatpush.bf16.msra.mxu0 %v1274
          %1299 = vmatpush.bf16.msra.mxu0 %v1273
          %1300 = vmatpush.bf16.msra.mxu0 %v1272
          %1301 = vmatmul.bf16.gmra.mxu0 %v1282
          %v1302 = vpop.f32.mrf.mxu0
          %v1303 = vadd.f32 %v1254, %v1302
          %v1304 = vpop.f32.mrf.mxu0
          %v1305 = vadd.f32 %v1254, %v1304
          %1306 = vmatmul.bf16.gmra.mxu0 %v1285
          %v1307 = vpop.f32.mrf.mxu0
          %v1308 = vadd.f32 %v1254, %v1307
          %v1309 = vpop.f32.mrf.mxu0
          %v1310 = vadd.f32 %v1254, %v1309
          %1311 = vmatmul.bf16.gmra.mxu0 %v1288
          %v1312 = vpop.f32.mrf.mxu0
          %v1313 = vadd.f32 %v1254, %v1312
          %v1314 = vpop.f32.mrf.mxu0
          %v1315 = vadd.f32 %v1254, %v1314
          %1316 = vmatmul.bf16.gmra.mxu0 %v1291
          %v1317 = vpop.f32.mrf.mxu0
          %v1318 = vadd.f32 %v1254, %v1317
          %v1319 = vpop.f32.mrf.mxu0
          %v1320 = vadd.f32 %v1254, %v1319
          %1321 = vdwg.mxu0
          %1322 = vst.msk [vmem:[#allocation2] sm:$0xff] %vm1280, %v1303
          %1323 = vst.msk [vmem:[#allocation2 + $0x8] sm:$0xff] %vm1280, %v1305
          %1324 = vst.msk [vmem:[#allocation2 + $0x10] sm:$0xff] %vm1280, %v1308
          %1325 = vst.msk [vmem:[#allocation2 + $0x18] sm:$0xff] %vm1280, %v1310
          %1326 = vst.msk [vmem:[#allocation2 + $0x20] sm:$0xff] %vm1280, %v1313
          %1327 = vst.msk [vmem:[#allocation2 + $0x28] sm:$0xff] %vm1280, %v1315
          %1328 = vst.msk [vmem:[#allocation2 + $0x30] sm:$0xff] %vm1280, %v1318
          %1329 = vst.msk [vmem:[#allocation2 + $0x38] sm:$0xff] %vm1280, %v1320
          %v1330 = vld [vmem:[#allocation15] sm:$0x1]
          %v1331 = vld [vmem:[%s13] sm:$0x1]
          %v1332 = vsel %vm1280, %v1303, 0.0
          %1333 = vadd.xlane.f32.xlu0 %v1332
          %v1334 = vpop.xlane.xlu0 %1333
          %v1335 = vsel %vm1280, %v1305, 0.0
          %1336 = vadd.xlane.f32.xlu0 %v1335
          %v1337 = vpop.xlane.xlu0 %1336
          %v1338 = vsel %vm1280, %v1308, 0.0
          %1339 = vadd.xlane.f32.xlu0 %v1338
          %v1340 = vpop.xlane.xlu0 %1339
          %v1341 = vsel %vm1280, %v1310, 0.0
          %1342 = vadd.xlane.f32.xlu0 %v1341
          %v1343 = vpop.xlane.xlu0 %1342
          %v1344 = vsel %vm1280, %v1313, 0.0
          %1345 = vadd.xlane.f32.xlu0 %v1344
          %v1346 = vpop.xlane.xlu0 %1345
          %v1347 = vsel %vm1280, %v1315, 0.0
          %1348 = vadd.xlane.f32.xlu0 %v1347
          %v1349 = vpop.xlane.xlu0 %1348
          %v1350 = vsel %vm1280, %v1318, 0.0
          %1351 = vadd.xlane.f32.xlu0 %v1350
          %v1352 = vpop.xlane.xlu0 %1351
          %v1353 = vsel %vm1280, %v1320, 0.0
          %1354 = vadd.xlane.f32.xlu0 %v1353
          %v1355 = vpop.xlane.xlu0 %1354
          %v1356 = vrcp.pop 64.0
          %v1357 = vmul.f32 64.0, %v1356
          %v1358 = vsub.f32 1.0, %v1357
          %v1359 = vmul.f32 %v1356, %v1358
          %v1360 = vadd.f32 %v1356, %v1359
          %vm1361 = vweird.f32 %v1356
          %v1362 = vsel %vm1361, %v1356, %v1360
          %v1363 = vmul.f32 %v1334, %v1362
          %v1364 = vmul.f32 %v1337, %v1362
          %v1365 = vmul.f32 %v1340, %v1362
          %v1366 = vmul.f32 %v1343, %v1362
          %v1367 = vmul.f32 %v1346, %v1362
          %v1368 = vmul.f32 %v1349, %v1362
          %v1369 = vmul.f32 %v1352, %v1362
          %v1370 = vmul.f32 %v1355, %v1362
          %v1371 = vsub.f32 %v1303, %v1363
          %v1372 = vsub.f32 %v1305, %v1364
          %v1373 = vsub.f32 %v1308, %v1365
          %v1374 = vsub.f32 %v1310, %v1366
          %v1375 = vsub.f32 %v1313, %v1367
          %v1376 = vsub.f32 %v1315, %v1368
          %v1377 = vsub.f32 %v1318, %v1369
          %v1378 = vsub.f32 %v1320, %v1370
          %v1379 = vmul.f32 %v1371, %v1371
          %v1380 = vmul.f32 %v1372, %v1372
          %v1381 = vmul.f32 %v1373, %v1373
          %v1382 = vmul.f32 %v1374, %v1374
          %v1383 = vmul.f32 %v1375, %v1375
          %v1384 = vmul.f32 %v1376, %v1376
          %v1385 = vmul.f32 %v1377, %v1377
          %v1386 = vmul.f32 %v1378, %v1378
          %v1387 = vsel %vm1280, %v1379, 0.0
          %1388 = vadd.xlane.f32.xlu0 %v1387
          %v1389 = vpop.xlane.xlu0 %1388
          %v1390 = vsel %vm1280, %v1380, 0.0
          %1391 = vadd.xlane.f32.xlu0 %v1390
          %v1392 = vpop.xlane.xlu0 %1391
          %v1393 = vsel %vm1280, %v1381, 0.0
          %1394 = vadd.xlane.f32.xlu0 %v1393
          %v1395 = vpop.xlane.xlu0 %1394
          %v1396 = vsel %vm1280, %v1382, 0.0
          %1397 = vadd.xlane.f32.xlu0 %v1396
          %v1398 = vpop.xlane.xlu0 %1397
          %v1399 = vsel %vm1280, %v1383, 0.0
          %1400 = vadd.xlane.f32.xlu0 %v1399
          %v1401 = vpop.xlane.xlu0 %1400
          %v1402 = vsel %vm1280, %v1384, 0.0
          %1403 = vadd.xlane.f32.xlu0 %v1402
          %v1404 = vpop.xlane.xlu0 %1403
          %v1405 = vsel %vm1280, %v1385, 0.0
          %1406 = vadd.xlane.f32.xlu0 %v1405
          %v1407 = vpop.xlane.xlu0 %1406
          %v1408 = vsel %vm1280, %v1386, 0.0
          %1409 = vadd.xlane.f32.xlu0 %v1408
          %v1410 = vpop.xlane.xlu0 %1409
          %v1411 = vmul.f32 %v1389, %v1362
          %v1412 = vmul.f32 %v1392, %v1362
          %v1413 = vmul.f32 %v1395, %v1362
          %v1414 = vmul.f32 %v1398, %v1362
          %v1415 = vmul.f32 %v1401, %v1362
          %v1416 = vmul.f32 %v1404, %v1362
          %v1417 = vmul.f32 %v1407, %v1362
          %v1418 = vmul.f32 %v1410, %v1362
          %v1419 = vadd.f32 %v1411, 1e-05
          %v1420 = vadd.f32 %v1412, 1e-05
          %v1421 = vadd.f32 %v1413, 1e-05
          %v1422 = vadd.f32 %v1414, 1e-05
          %v1423 = vadd.f32 %v1415, 1e-05
          %v1424 = vadd.f32 %v1416, 1e-05
          %v1425 = vadd.f32 %v1417, 1e-05
          %v1426 = vadd.f32 %v1418, 1e-05
          %v1427 = vrsqrt.pop %v1419
          %v1428 = vmul.f32 %v1427, %v1419
          %v1429 = vmul.f32 %v1428, %v1427
          %v1430 = vmul.f32 0.5, %v1429
          %v1431 = vsub.f32 1.5, %v1430
          %v1432 = vmul.f32 %v1427, %v1431
          %vm1433 = vweird.f32 %v1419
          %vm1434 = vweird.f32 %v1427
          %vm1435 = vmor %vm1433, %vm1434
          %v1436 = vsel %vm1435, %v1427, %v1432
          %v1437 = vrsqrt.pop %v1420
          %v1438 = vmul.f32 %v1437, %v1420
          %v1439 = vmul.f32 %v1438, %v1437
          %v1440 = vmul.f32 0.5, %v1439
          %v1441 = vsub.f32 1.5, %v1440
          %v1442 = vmul.f32 %v1437, %v1441
          %vm1443 = vweird.f32 %v1420
          %vm1444 = vweird.f32 %v1437
          %vm1445 = vmor %vm1443, %vm1444
          %v1446 = vsel %vm1445, %v1437, %v1442
          %v1447 = vrsqrt.pop %v1421
          %v1448 = vmul.f32 %v1447, %v1421
          %v1449 = vmul.f32 %v1448, %v1447
          %v1450 = vmul.f32 0.5, %v1449
          %v1451 = vsub.f32 1.5, %v1450
          %v1452 = vmul.f32 %v1447, %v1451
          %vm1453 = vweird.f32 %v1421
          %vm1454 = vweird.f32 %v1447
          %vm1455 = vmor %vm1453, %vm1454
          %v1456 = vsel %vm1455, %v1447, %v1452
          %v1457 = vrsqrt.pop %v1422
          %v1458 = vmul.f32 %v1457, %v1422
          %v1459 = vmul.f32 %v1458, %v1457
          %v1460 = vmul.f32 0.5, %v1459
          %v1461 = vsub.f32 1.5, %v1460
          %v1462 = vmul.f32 %v1457, %v1461
          %vm1463 = vweird.f32 %v1422
          %vm1464 = vweird.f32 %v1457
          %vm1465 = vmor %vm1463, %vm1464
          %v1466 = vsel %vm1465, %v1457, %v1462
          %v1467 = vrsqrt.pop %v1423
          %v1468 = vmul.f32 %v1467, %v1423
          %v1469 = vmul.f32 %v1468, %v1467
          %v1470 = vmul.f32 0.5, %v1469
          %v1471 = vsub.f32 1.5, %v1470
          %v1472 = vmul.f32 %v1467, %v1471
          %vm1473 = vweird.f32 %v1423
          %vm1474 = vweird.f32 %v1467
          %vm1475 = vmor %vm1473, %vm1474
          %v1476 = vsel %vm1475, %v1467, %v1472
          %v1477 = vrsqrt.pop %v1424
          %v1478 = vmul.f32 %v1477, %v1424
          %v1479 = vmul.f32 %v1478, %v1477
          %v1480 = vmul.f32 0.5, %v1479
          %v1481 = vsub.f32 1.5, %v1480
          %v1482 = vmul.f32 %v1477, %v1481
          %vm1483 = vweird.f32 %v1424
          %vm1484 = vweird.f32 %v1477
          %vm1485 = vmor %vm1483, %vm1484
          %v1486 = vsel %vm1485, %v1477, %v1482
          %v1487 = vrsqrt.pop %v1425
          %v1488 = vmul.f32 %v1487, %v1425
          %v1489 = vmul.f32 %v1488, %v1487
          %v1490 = vmul.f32 0.5, %v1489
          %v1491 = vsub.f32 1.5, %v1490
          %v1492 = vmul.f32 %v1487, %v1491
          %vm1493 = vweird.f32 %v1425
          %vm1494 = vweird.f32 %v1487
          %vm1495 = vmor %vm1493, %vm1494
          %v1496 = vsel %vm1495, %v1487, %v1492
          %v1497 = vrsqrt.pop %v1426
          %v1498 = vmul.f32 %v1497, %v1426
          %v1499 = vmul.f32 %v1498, %v1497
          %v1500 = vmul.f32 0.5, %v1499
          %v1501 = vsub.f32 1.5, %v1500
          %v1502 = vmul.f32 %v1497, %v1501
          %vm1503 = vweird.f32 %v1426
          %vm1504 = vweird.f32 %v1497
          %vm1505 = vmor %vm1503, %vm1504
          %v1506 = vsel %vm1505, %v1497, %v1502
          %v1508 = vperm.slane %v1330, 0
          %v1510 = vmul.f32 %v1436, %v1508
          %v1511 = vmul.f32 %v1446, %v1508
          %v1512 = vmul.f32 %v1456, %v1508
          %v1513 = vmul.f32 %v1466, %v1508
          %v1514 = vmul.f32 %v1476, %v1508
          %v1515 = vmul.f32 %v1486, %v1508
          %v1516 = vmul.f32 %v1496, %v1508
          %v1517 = vmul.f32 %v1506, %v1508
          %v1518 = vmul.f32 %v1371, %v1510
          %v1519 = vmul.f32 %v1372, %v1511
          %v1520 = vmul.f32 %v1373, %v1512
          %v1521 = vmul.f32 %v1374, %v1513
          %v1522 = vmul.f32 %v1375, %v1514
          %v1523 = vmul.f32 %v1376, %v1515
          %v1524 = vmul.f32 %v1377, %v1516
          %v1525 = vmul.f32 %v1378, %v1517
          %v1527 = vperm.slane %v1331, 0
          %v1529 = vadd.f32 %v1518, %v1527
          %v1530 = vadd.f32 %v1519, %v1527
          %v1531 = vadd.f32 %v1520, %v1527
          %v1532 = vadd.f32 %v1521, %v1527
          %v1533 = vadd.f32 %v1522, %v1527
          %v1534 = vadd.f32 %v1523, %v1527
          %v1535 = vadd.f32 %v1524, %v1527
          %v1536 = vadd.f32 %v1525, %v1527
          %v1537 = vpack.c.bf16 %v1530, %v1529
          %v1538 = vpack.c.bf16 %v1532, %v1531
          %v1539 = vpack.c.bf16 %v1534, %v1533
          %v1540 = vpack.c.bf16 %v1536, %v1535
          %v1541 = vld [vmem:[#allocation18] sm:$0xf]
          %v1542 = vld [vmem:[#allocation18 + $0x4] sm:$0xf]
          %v1543 = vld [vmem:[#allocation18 + $0x8] sm:$0xf]
          %v1544 = vld [vmem:[#allocation18 + $0xc] sm:$0xf]
          %v1545 = vld [vmem:[#allocation18 + $0x10] sm:$0xf]
          %v1546 = vld [vmem:[#allocation18 + $0x14] sm:$0xf]
          %v1547 = vld [vmem:[#allocation18 + $0x18] sm:$0xf]
          %v1548 = vld [vmem:[#allocation18 + $0x1c] sm:$0xf]
          %v1557 = vunpack.c.l.b16 %v1541
          %v1558 = vunpack.c.l.b16 %v1542
          %v1559 = vunpack.c.l.b16 %v1543
          %v1560 = vunpack.c.l.b16 %v1544
          %v1561 = vunpack.c.l.b16 %v1545
          %v1562 = vunpack.c.l.b16 %v1546
          %v1563 = vunpack.c.l.b16 %v1547
          %v1564 = vunpack.c.l.b16 %v1548
          %v1565 = vpack.c.b16 %v1558, %v1557
          %v1566 = vpack.c.b16 %v1560, %v1559
          %v1567 = vpack.c.b16 %v1562, %v1561
          %v1568 = vpack.c.b16 %v1564, %v1563
          %v1574 = vsel %vm1280, %v1537, 0
          %v1577 = vsel %vm1280, %v1538, 0
          %v1580 = vsel %vm1280, %v1539, 0
          %v1583 = vsel %vm1280, %v1540, 0
          %1585 = vmatpush.bf16.msra.mxu0 0
          %1586 = vmatpush.bf16.msra.mxu0 0
          %1587 = vmatpush.bf16.msra.mxu0 0
          %1588 = vmatpush.bf16.msra.mxu0 0
          %1589 = vmatpush.bf16.msra.mxu0 %v1568
          %1590 = vmatpush.bf16.msra.mxu0 %v1567
          %1591 = vmatpush.bf16.msra.mxu0 %v1566
          %1592 = vmatpush.bf16.msra.mxu0 %v1565
          %1593 = vmatmul.bf16.gmra.mxu0 %v1574
          %v1594 = vpop.f32.mrf.mxu0
          %v1595 = vadd.f32 0.0, %v1594
          %v1596 = vpop.f32.mrf.mxu0
          %v1597 = vadd.f32 0.0, %v1596
          %1598 = vmatmul.bf16.gmra.mxu0 %v1577
          %v1599 = vpop.f32.mrf.mxu0
          %v1600 = vadd.f32 0.0, %v1599
          %v1601 = vpop.f32.mrf.mxu0
          %v1602 = vadd.f32 0.0, %v1601
          %1603 = vmatmul.bf16.gmra.mxu0 %v1580
          %v1604 = vpop.f32.mrf.mxu0
          %v1605 = vadd.f32 0.0, %v1604
          %v1606 = vpop.f32.mrf.mxu0
          %v1607 = vadd.f32 0.0, %v1606
          %1608 = vmatmul.bf16.gmra.mxu0 %v1583
          %v1609 = vpop.f32.mrf.mxu0
          %v1610 = vadd.f32 0.0, %v1609
          %v1611 = vpop.f32.mrf.mxu0
          %v1612 = vadd.f32 0.0, %v1611
          %1613 = vdwg.mxu0
          %v1614 = vpack.c.bf16 %v1595, %v1595
          %v1615 = vpack.c.bf16 %v1597, %v1597
          %v1616 = vpack.c.bf16 %v1600, %v1600
          %v1617 = vpack.c.bf16 %v1602, %v1602
          %v1618 = vpack.c.bf16 %v1605, %v1605
          %v1619 = vpack.c.bf16 %v1607, %v1607
          %v1620 = vpack.c.bf16 %v1610, %v1610
          %v1621 = vpack.c.bf16 %v1612, %v1612
          %vm1622 = vcmask 519168
          %1623 = vst.msk [vmem:[#allocation3] sm:$0xf] %vm1622, %v1614
          %1624 = vst.msk [vmem:[#allocation3 + $0x4] sm:$0xf] %vm1622, %v1615
          %1625 = vst.msk [vmem:[#allocation3 + $0x8] sm:$0xf] %vm1622, %v1616
          %1626 = vst.msk [vmem:[#allocation3 + $0xc] sm:$0xf] %vm1622, %v1617
          %1627 = vst.msk [vmem:[#allocation3 + $0x10] sm:$0xf] %vm1622, %v1618
          %1628 = vst.msk [vmem:[#allocation3 + $0x14] sm:$0xf] %vm1622, %v1619
          %1629 = vst.msk [vmem:[#allocation3 + $0x18] sm:$0xf] %vm1622, %v1620
          %1630 = vst.msk [vmem:[#allocation3 + $0x1c] sm:$0xf] %vm1622, %v1621
          %v1631 = vld [vmem:[#allocation19] sm:$0xf]
          %v1632 = vld [vmem:[#allocation19 + $0x4] sm:$0xf]
          %v1633 = vld [vmem:[#allocation19 + $0x8] sm:$0xf]
          %v1634 = vld [vmem:[#allocation19 + $0xc] sm:$0xf]
          %v1635 = vld [vmem:[#allocation19 + $0x10] sm:$0xf]
          %v1636 = vld [vmem:[#allocation19 + $0x14] sm:$0xf]
          %v1637 = vld [vmem:[#allocation19 + $0x18] sm:$0xf]
          %v1638 = vld [vmem:[#allocation19 + $0x1c] sm:$0xf]
          %v1647 = vunpack.c.l.b16 %v1631
          %v1648 = vunpack.c.l.b16 %v1632
          %v1649 = vunpack.c.l.b16 %v1633
          %v1650 = vunpack.c.l.b16 %v1634
          %v1651 = vunpack.c.l.b16 %v1635
          %v1652 = vunpack.c.l.b16 %v1636
          %v1653 = vunpack.c.l.b16 %v1637
          %v1654 = vunpack.c.l.b16 %v1638
          %v1655 = vpack.c.b16 %v1648, %v1647
          %v1656 = vpack.c.b16 %v1650, %v1649
          %v1657 = vpack.c.b16 %v1652, %v1651
          %v1658 = vpack.c.b16 %v1654, %v1653
          %1663 = vmatpush.bf16.msra.mxu0 0
          %1664 = vmatpush.bf16.msra.mxu0 0
          %1665 = vmatpush.bf16.msra.mxu0 0
          %1666 = vmatpush.bf16.msra.mxu0 0
          %1667 = vmatpush.bf16.msra.mxu0 %v1658
          %1668 = vmatpush.bf16.msra.mxu0 %v1657
          %1669 = vmatpush.bf16.msra.mxu0 %v1656
          %1670 = vmatpush.bf16.msra.mxu0 %v1655
          %1671 = vmatmul.bf16.gmra.mxu0 %v1574
          %v1672 = vpop.f32.mrf.mxu0
          %v1673 = vadd.f32 0.0, %v1672
          %v1674 = vpop.f32.mrf.mxu0
          %v1675 = vadd.f32 0.0, %v1674
          %1676 = vmatmul.bf16.gmra.mxu0 %v1577
          %v1677 = vpop.f32.mrf.mxu0
          %v1678 = vadd.f32 0.0, %v1677
          %v1679 = vpop.f32.mrf.mxu0
          %v1680 = vadd.f32 0.0, %v1679
          %1681 = vmatmul.bf16.gmra.mxu0 %v1580
          %v1682 = vpop.f32.mrf.mxu0
          %v1683 = vadd.f32 0.0, %v1682
          %v1684 = vpop.f32.mrf.mxu0
          %v1685 = vadd.f32 0.0, %v1684
          %1686 = vmatmul.bf16.gmra.mxu0 %v1583
          %v1687 = vpop.f32.mrf.mxu0
          %v1688 = vadd.f32 0.0, %v1687
          %v1689 = vpop.f32.mrf.mxu0
          %v1690 = vadd.f32 0.0, %v1689
          %1691 = vdwg.mxu0
          %v1692 = vpack.c.bf16 %v1673, %v1673
          %v1693 = vpack.c.bf16 %v1675, %v1675
          %v1694 = vpack.c.bf16 %v1678, %v1678
          %v1695 = vpack.c.bf16 %v1680, %v1680
          %v1696 = vpack.c.bf16 %v1683, %v1683
          %v1697 = vpack.c.bf16 %v1685, %v1685
          %v1698 = vpack.c.bf16 %v1688, %v1688
          %v1699 = vpack.c.bf16 %v1690, %v1690
          %1700 = vst.msk [vmem:[#allocation4] sm:$0xf] %vm1622, %v1692
          %1701 = vst.msk [vmem:[#allocation4 + $0x4] sm:$0xf] %vm1622, %v1693
          %1702 = vst.msk [vmem:[#allocation4 + $0x8] sm:$0xf] %vm1622, %v1694
          %1703 = vst.msk [vmem:[#allocation4 + $0xc] sm:$0xf] %vm1622, %v1695
          %1704 = vst.msk [vmem:[#allocation4 + $0x10] sm:$0xf] %vm1622, %v1696
          %1705 = vst.msk [vmem:[#allocation4 + $0x14] sm:$0xf] %vm1622, %v1697
          %1706 = vst.msk [vmem:[#allocation4 + $0x18] sm:$0xf] %vm1622, %v1698
          %1707 = vst.msk [vmem:[#allocation4 + $0x1c] sm:$0xf] %vm1622, %v1699
          %v1708 = vld [vmem:[%s1040] sm:$0xff]
          %v1709 = vld [vmem:[%s1040 + $0x8] sm:$0xff]
          %v1710 = vpack.c.bf16 %v1709, %v1708
          %v1711 = vld [vmem:[#allocation24] sm:$0xf]
          %v1712 = vld [vmem:[#allocation24 + $0x4] sm:$0xf]
          %v1713 = vld [vmem:[#allocation24 + $0x8] sm:$0xf]
          %v1714 = vld [vmem:[#allocation24 + $0xc] sm:$0xf]
          %v1715 = vld [vmem:[#allocation24 + $0x10] sm:$0xf]
          %v1716 = vld [vmem:[#allocation24 + $0x14] sm:$0xf]
          %v1717 = vld [vmem:[#allocation24 + $0x18] sm:$0xf]
          %v1718 = vld [vmem:[#allocation24 + $0x1c] sm:$0xf]
          %v1727 = vunpack.c.l.b16 %v1711
          %v1728 = vunpack.c.l.b16 %v1712
          %v1729 = vunpack.c.l.b16 %v1713
          %v1730 = vunpack.c.l.b16 %v1714
          %v1731 = vunpack.c.l.b16 %v1715
          %v1732 = vunpack.c.l.b16 %v1716
          %v1733 = vunpack.c.l.b16 %v1717
          %v1734 = vunpack.c.l.b16 %v1718
          %v1735 = vpack.c.b16 %v1728, %v1727
          %v1736 = vpack.c.b16 %v1730, %v1729
          %v1737 = vpack.c.b16 %v1732, %v1731
          %v1738 = vpack.c.b16 %v1734, %v1733
          %v1744 = vsel %vm1280, %v1710, 0
          %1746 = vmatpush.bf16.msra.mxu0 0
          %1747 = vmatpush.bf16.msra.mxu0 0
          %1748 = vmatpush.bf16.msra.mxu0 0
          %1749 = vmatpush.bf16.msra.mxu0 0
          %1750 = vmatpush.bf16.msra.mxu0 %v1738
          %1751 = vmatpush.bf16.msra.mxu0 %v1737
          %1752 = vmatpush.bf16.msra.mxu0 %v1736
          %1753 = vmatpush.bf16.msra.mxu0 %v1735
          %1754 = vmatmul.bf16.gmra.mxu0 %v1744
          %v1755 = vpop.f32.mrf.mxu0
          %v1756 = vadd.f32 0.0, %v1755
          %v1757 = vpop.f32.mrf.mxu0
          %v1758 = vadd.f32 0.0, %v1757
          %1759 = vdwg.mxu0
          %v1760 = vpack.c.bf16 %v1756, %v1756
          %v1761 = vpack.c.bf16 %v1758, %v1758
          %1762 = vst.msk [vmem:[#allocation5] sm:$0xf] %vm1622, %v1760
          %1763 = vst.msk [vmem:[#allocation5 + $0x4] sm:$0xf] %vm1622, %v1761
          %v1764 = vld [vmem:[#allocation25] sm:$0xf]
          %v1765 = vld [vmem:[#allocation25 + $0x4] sm:$0xf]
          %v1766 = vld [vmem:[#allocation25 + $0x8] sm:$0xf]
          %v1767 = vld [vmem:[#allocation25 + $0xc] sm:$0xf]
          %v1768 = vld [vmem:[#allocation25 + $0x10] sm:$0xf]
          %v1769 = vld [vmem:[#allocation25 + $0x14] sm:$0xf]
          %v1770 = vld [vmem:[#allocation25 + $0x18] sm:$0xf]
          %v1771 = vld [vmem:[#allocation25 + $0x1c] sm:$0xf]
          %v1780 = vunpack.c.l.b16 %v1764
          %v1781 = vunpack.c.l.b16 %v1765
          %v1782 = vunpack.c.l.b16 %v1766
          %v1783 = vunpack.c.l.b16 %v1767
          %v1784 = vunpack.c.l.b16 %v1768
          %v1785 = vunpack.c.l.b16 %v1769
          %v1786 = vunpack.c.l.b16 %v1770
          %v1787 = vunpack.c.l.b16 %v1771
          %v1788 = vpack.c.b16 %v1781, %v1780
          %v1789 = vpack.c.b16 %v1783, %v1782
          %v1790 = vpack.c.b16 %v1785, %v1784
          %v1791 = vpack.c.b16 %v1787, %v1786
          %1796 = vmatpush.bf16.msra.mxu0 0
          %1797 = vmatpush.bf16.msra.mxu0 0
          %1798 = vmatpush.bf16.msra.mxu0 0
          %1799 = vmatpush.bf16.msra.mxu0 0
          %1800 = vmatpush.bf16.msra.mxu0 %v1791
          %1801 = vmatpush.bf16.msra.mxu0 %v1790
          %1802 = vmatpush.bf16.msra.mxu0 %v1789
          %1803 = vmatpush.bf16.msra.mxu0 %v1788
          %1804 = vmatmul.bf16.gmra.mxu0 %v1744
          %v1805 = vpop.f32.mrf.mxu0
          %v1806 = vadd.f32 0.0, %v1805
          %v1807 = vpop.f32.mrf.mxu0
          %v1808 = vadd.f32 0.0, %v1807
          %1809 = vdwg.mxu0
          %v1810 = vpack.c.bf16 %v1806, %v1806
          %v1811 = vpack.c.bf16 %v1808, %v1808
          %1812 = vst.msk [vmem:[#allocation6] sm:$0xf] %vm1622, %v1810
          %1813 = vst.msk [vmem:[#allocation6 + $0x4] sm:$0xf] %vm1622, %v1811
        $region200: #{tpu_custom_call.1} parent=135 // pred_fallthru
          _
        %s1814 = smul.u32 %s90, 32
        %s1815 = scalar_lea.vmem [#allocation2], %s1814
        %v1816 = vld [vmem:[%s1815] sm:$0xff]
        %v1817 = vld [vmem:[%s1815 + $0x8] sm:$0xff]
        %v1818 = vld [vmem:[%s1815 + $0x10] sm:$0xff]
        %v1819 = vld [vmem:[%s1815 + $0x18] sm:$0xff]
        %s1820 = scalar_lea.vmem %s1205, %s1814
        %v1821 = vld [vmem:[%s1820] sm:$0xff]
        %v1822 = vld [vmem:[%s1820 + $0x8] sm:$0xff]
        %v1823 = vld [vmem:[%s1820 + $0x10] sm:$0xff]
        %v1824 = vld [vmem:[%s1820 + $0x18] sm:$0xff]
        %v1825 = vld [vmem:[#allocation15] sm:$0x1]
        %v1826 = vld [vmem:[%s13] sm:$0x1]
        %vm1827 = vcmask 523264
        %v1828 = vsel %vm1827, %v1816, 0.0
        %1829 = vadd.xlane.f32.xlu0 %v1828
        %v1830 = vpop.xlane.xlu0 %1829
        %v1831 = vsel %vm1827, %v1817, 0.0
        %1832 = vadd.xlane.f32.xlu0 %v1831
        %v1833 = vpop.xlane.xlu0 %1832
        %v1834 = vsel %vm1827, %v1818, 0.0
        %1835 = vadd.xlane.f32.xlu0 %v1834
        %v1836 = vpop.xlane.xlu0 %1835
        %v1837 = vsel %vm1827, %v1819, 0.0
        %1838 = vadd.xlane.f32.xlu0 %v1837
        %v1839 = vpop.xlane.xlu0 %1838
        %v1840 = vrcp.pop 64.0
        %v1841 = vmul.f32 64.0, %v1840
        %v1842 = vsub.f32 1.0, %v1841
        %v1843 = vmul.f32 %v1840, %v1842
        %v1844 = vadd.f32 %v1840, %v1843
        %vm1845 = vweird.f32 %v1840
        %v1846 = vsel %vm1845, %v1840, %v1844
        %v1847 = vmul.f32 %v1830, %v1846
        %v1848 = vmul.f32 %v1833, %v1846
        %v1849 = vmul.f32 %v1836, %v1846
        %v1850 = vmul.f32 %v1839, %v1846
        %v1851 = vsub.f32 %v1816, %v1847
        %v1852 = vsub.f32 %v1817, %v1848
        %v1853 = vsub.f32 %v1818, %v1849
        %v1854 = vsub.f32 %v1819, %v1850
        %v1855 = vmul.f32 %v1851, %v1851
        %v1856 = vmul.f32 %v1852, %v1852
        %v1857 = vmul.f32 %v1853, %v1853
        %v1858 = vmul.f32 %v1854, %v1854
        %v1859 = vsel %vm1827, %v1855, 0.0
        %1860 = vadd.xlane.f32.xlu0 %v1859
        %v1861 = vpop.xlane.xlu0 %1860
        %v1862 = vsel %vm1827, %v1856, 0.0
        %1863 = vadd.xlane.f32.xlu0 %v1862
        %v1864 = vpop.xlane.xlu0 %1863
        %v1865 = vsel %vm1827, %v1857, 0.0
        %1866 = vadd.xlane.f32.xlu0 %v1865
        %v1867 = vpop.xlane.xlu0 %1866
        %v1868 = vsel %vm1827, %v1858, 0.0
        %1869 = vadd.xlane.f32.xlu0 %v1868
        %v1870 = vpop.xlane.xlu0 %1869
        %v1871 = vmul.f32 %v1861, %v1846
        %v1872 = vmul.f32 %v1864, %v1846
        %v1873 = vmul.f32 %v1867, %v1846
        %v1874 = vmul.f32 %v1870, %v1846
        %v1875 = vadd.f32 %v1871, 1e-05
        %v1876 = vadd.f32 %v1872, 1e-05
        %v1877 = vadd.f32 %v1873, 1e-05
        %v1878 = vadd.f32 %v1874, 1e-05
        %v1879 = vrsqrt.pop %v1875
        %v1880 = vmul.f32 %v1879, %v1875
        %v1881 = vmul.f32 %v1880, %v1879
        %v1882 = vmul.f32 0.5, %v1881
        %v1883 = vsub.f32 1.5, %v1882
        %v1884 = vmul.f32 %v1879, %v1883
        %vm1885 = vweird.f32 %v1875
        %vm1886 = vweird.f32 %v1879
        %vm1887 = vmor %vm1885, %vm1886
        %v1888 = vsel %vm1887, %v1879, %v1884
        %v1889 = vrsqrt.pop %v1876
        %v1890 = vmul.f32 %v1889, %v1876
        %v1891 = vmul.f32 %v1890, %v1889
        %v1892 = vmul.f32 0.5, %v1891
        %v1893 = vsub.f32 1.5, %v1892
        %v1894 = vmul.f32 %v1889, %v1893
        %vm1895 = vweird.f32 %v1876
        %vm1896 = vweird.f32 %v1889
        %vm1897 = vmor %vm1895, %vm1896
        %v1898 = vsel %vm1897, %v1889, %v1894
        %v1899 = vrsqrt.pop %v1877
        %v1900 = vmul.f32 %v1899, %v1877
        %v1901 = vmul.f32 %v1900, %v1899
        %v1902 = vmul.f32 0.5, %v1901
        %v1903 = vsub.f32 1.5, %v1902
        %v1904 = vmul.f32 %v1899, %v1903
        %vm1905 = vweird.f32 %v1877
        %vm1906 = vweird.f32 %v1899
        %vm1907 = vmor %vm1905, %vm1906
        %v1908 = vsel %vm1907, %v1899, %v1904
        %v1909 = vrsqrt.pop %v1878
        %v1910 = vmul.f32 %v1909, %v1878
        %v1911 = vmul.f32 %v1910, %v1909
        %v1912 = vmul.f32 0.5, %v1911
        %v1913 = vsub.f32 1.5, %v1912
        %v1914 = vmul.f32 %v1909, %v1913
        %vm1915 = vweird.f32 %v1878
        %vm1916 = vweird.f32 %v1909
        %vm1917 = vmor %vm1915, %vm1916
        %v1918 = vsel %vm1917, %v1909, %v1914
        %v1920 = vperm.slane %v1825, 0
        %v1922 = vmul.f32 %v1888, %v1920
        %v1923 = vmul.f32 %v1898, %v1920
        %v1924 = vmul.f32 %v1908, %v1920
        %v1925 = vmul.f32 %v1918, %v1920
        %v1926 = vmul.f32 %v1851, %v1922
        %v1927 = vmul.f32 %v1852, %v1923
        %v1928 = vmul.f32 %v1853, %v1924
        %v1929 = vmul.f32 %v1854, %v1925
        %v1931 = vperm.slane %v1826, 0
        %v1933 = vadd.f32 %v1926, %v1931
        %v1934 = vadd.f32 %v1927, %v1931
        %v1935 = vadd.f32 %v1928, %v1931
        %v1936 = vadd.f32 %v1929, %v1931
        %v1937 = vpack.c.bf16 %v1934, %v1933
        %v1938 = vpack.c.bf16 %v1936, %v1935
        %v1939 = vld [vmem:[#allocation16] sm:$0xf]
        %v1940 = vld [vmem:[#allocation16 + $0x4] sm:$0xf]
        %v1941 = vld [vmem:[#allocation16 + $0x8] sm:$0xf]
        %v1942 = vld [vmem:[#allocation16 + $0xc] sm:$0xf]
        %v1943 = vld [vmem:[#allocation16 + $0x10] sm:$0xf]
        %v1944 = vld [vmem:[#allocation16 + $0x14] sm:$0xf]
        %v1945 = vld [vmem:[#allocation16 + $0x18] sm:$0xf]
        %v1946 = vld [vmem:[#allocation16 + $0x1c] sm:$0xf]
        %v1955 = vunpack.c.l.b16 %v1939
        %v1956 = vunpack.c.l.b16 %v1940
        %v1957 = vunpack.c.l.b16 %v1941
        %v1958 = vunpack.c.l.b16 %v1942
        %v1959 = vunpack.c.l.b16 %v1943
        %v1960 = vunpack.c.l.b16 %v1944
        %v1961 = vunpack.c.l.b16 %v1945
        %v1962 = vunpack.c.l.b16 %v1946
        %v1963 = vpack.c.b16 %v1956, %v1955
        %v1964 = vpack.c.b16 %v1958, %v1957
        %v1965 = vpack.c.b16 %v1960, %v1959
        %v1966 = vpack.c.b16 %v1962, %v1961
        %v1972 = vsel %vm1827, %v1937, 0
        %v1975 = vsel %vm1827, %v1938, 0
        %1977 = vmatpush.bf16.msra.mxu0 0
        %1978 = vmatpush.bf16.msra.mxu0 0
        %1979 = vmatpush.bf16.msra.mxu0 0
        %1980 = vmatpush.bf16.msra.mxu0 0
        %1981 = vmatpush.bf16.msra.mxu0 %v1966
        %1982 = vmatpush.bf16.msra.mxu0 %v1965
        %1983 = vmatpush.bf16.msra.mxu0 %v1964
        %1984 = vmatpush.bf16.msra.mxu0 %v1963
        %1985 = vmatmul.bf16.gmra.mxu0 %v1972
        %v1986 = vpop.f32.mrf.mxu0
        %v1987 = vadd.f32 0.0, %v1986
        %v1988 = vpop.f32.mrf.mxu0
        %v1989 = vadd.f32 0.0, %v1988
        %1990 = vmatmul.bf16.gmra.mxu0 %v1975
        %v1991 = vpop.f32.mrf.mxu0
        %v1992 = vadd.f32 0.0, %v1991
        %v1993 = vpop.f32.mrf.mxu0
        %v1994 = vadd.f32 0.0, %v1993
        %1995 = vdwg.mxu0
        %v1996 = vmul.f32 %v1987, 0.25
        %v1997 = vmul.f32 %v1989, 0.25
        %v1998 = vmul.f32 %v1992, 0.25
        %v1999 = vmul.f32 %v1994, 0.25
        %v2000 = vpack.c.bf16 %v1996, %v1996
        %v2001 = vpack.c.bf16 %v1997, %v1997
        %v2002 = vpack.c.bf16 %v1998, %v1998
        %v2003 = vpack.c.bf16 %v1999, %v1999
        loop: start=0, step=1, limit=2
        $region201: #{tpu_custom_call.1} parent=135 // loop_pre_header
          _
        $region202: #{tpu_custom_call.1} parent=135 // loop_header
          %s2005 = sphi 0, %s2009
          %p2006 = scmp.ge.s32.totalorder %s2005, 2
          %v2010 = vphi -inf, %v2102
          %v2011 = vphi -inf, %v2103
          %v2012 = vphi -inf, %v2104
          %v2013 = vphi -inf, %v2105
          %v2014 = vphi 0.0, %v2146
          %v2015 = vphi 0.0, %v2147
          %v2016 = vphi 0.0, %v2148
          %v2017 = vphi 0.0, %v2149
          %v2018 = vphi 0.0, %v2193
          %v2019 = vphi 0.0, %v2194
          %v2020 = vphi 0.0, %v2195
          %v2021 = vphi 0.0, %v2196
        $region203: #{tpu_custom_call.1} parent=135 // loop_header_branch
          %2008 = sbr.rel (%p2006) target = $region207
        $region204: #{tpu_custom_call.1} parent=135 // loop_body
          %s2022 = smul.u32 %s2005, 32
          %s2023 = sshra.s32 %s2022, 3
          %s2024 = sand.u32 %s2022, 7
          %s2025 = smul.addr %s2023, 4
          %s2026 = scalar_lea.vmem [#allocation3], %s2025
          %v2027 = vld [vmem:[%s2026] sm:$0xf]
          %v2028 = vld [vmem:[%s2026 + $0x4] sm:$0xf]
          %v2029 = vld [vmem:[%s2026 + $0x8] sm:$0xf]
          %v2030 = vld [vmem:[%s2026 + $0xc] sm:$0xf]
          %s2031 = smul.addr %s2023, 4
          %s2032 = scalar_lea.vmem [#allocation4], %s2031
          %v2033 = vld [vmem:[%s2032] sm:$0xf]
          %v2034 = vld [vmem:[%s2032 + $0x4] sm:$0xf]
          %v2035 = vld [vmem:[%s2032 + $0x8] sm:$0xf]
          %v2036 = vld [vmem:[%s2032 + $0xc] sm:$0xf]
          %v2041 = vunpack.c.l.b16 %v2000
          %v2042 = vunpack.c.l.b16 %v2001
          %v2043 = vunpack.c.l.b16 %v2002
          %v2044 = vunpack.c.l.b16 %v2003
          %v2045 = vpack.c.b16 %v2042, %v2041
          %v2046 = vpack.c.b16 %v2044, %v2043
          %v2051 = vunpack.c.l.b16 %v2027
          %v2052 = vunpack.c.l.b16 %v2028
          %v2053 = vunpack.c.l.b16 %v2029
          %v2054 = vunpack.c.l.b16 %v2030
          %v2055 = vpack.c.b16 %v2052, %v2051
          %v2056 = vpack.c.b16 %v2054, %v2053
          %vm2057 = vcmask 130048
          %v2059 = vsel %vm2057, %v2045, 0
          %v2062 = vsel %vm2057, %v2046, 0
          %v2065 = vsel %vm2057, %v2055, 0
          %v2068 = vsel %vm2057, %v2056, 0
          %2070 = vmatpush.bf16.xpose.msra.mxu0 0
          %2071 = vmatpush.bf16.xpose.msra.mxu0 0
          %2072 = vmatpush.bf16.xpose.msra.mxu0 0
          %2073 = vmatpush.bf16.xpose.msra.mxu0 0
          %2074 = vmatpush.bf16.xpose.msra.mxu0 0
          %2075 = vmatpush.bf16.xpose.msra.mxu0 0
          %2076 = vmatpush.bf16.xpose.msra.mxu0 %v2068
          %2077 = vmatpush.bf16.xpose.msra.mxu0 %v2065
          %2078 = vmatmul.bf16.gmra.mxu0 %v2059
          %v2079 = vpop.f32.mrf.mxu0
          %v2080 = vadd.f32 0.0, %v2079
          %v2081 = vpop.f32.mrf.mxu0
          %v2082 = vadd.f32 0.0, %v2081
          %2083 = vmatmul.bf16.gmra.mxu0 %v2062
          %v2084 = vpop.f32.mrf.mxu0
          %v2085 = vadd.f32 0.0, %v2084
          %v2086 = vpop.f32.mrf.mxu0
          %v2087 = vadd.f32 0.0, %v2086
          %2088 = vdwg.mxu0
          %vm2089 = vcmask 261120
          %v2090 = vsel %vm2089, %v2080, -inf
          %2091 = vmax.xlane.f32.xlu0 %v2090
          %v2092 = vpop.xlane.xlu0 %2091
          %v2093 = vsel %vm2089, %v2082, -inf
          %2094 = vmax.xlane.f32.xlu0 %v2093
          %v2095 = vpop.xlane.xlu0 %2094
          %v2096 = vsel %vm2089, %v2085, -inf
          %2097 = vmax.xlane.f32.xlu0 %v2096
          %v2098 = vpop.xlane.xlu0 %2097
          %v2099 = vsel %vm2089, %v2087, -inf
          %2100 = vmax.xlane.f32.xlu0 %v2099
          %v2101 = vpop.xlane.xlu0 %2100
          %v2102 = vmax.f32 %v2010, %v2092
          %v2103 = vmax.f32 %v2011, %v2095
          %v2104 = vmax.f32 %v2012, %v2098
          %v2105 = vmax.f32 %v2013, %v2101
          %v2106 = vsub.f32 %v2010, %v2102
          %v2107 = vsub.f32 %v2011, %v2103
          %v2108 = vsub.f32 %v2012, %v2104
          %v2109 = vsub.f32 %v2013, %v2105
          %v2110 = vmul.f32 %v2106, 1.442695
          %v2111 = vpow.pop %v2110
          %v2112 = vmul.f32 %v2107, 1.442695
          %v2113 = vpow.pop %v2112
          %v2114 = vmul.f32 %v2108, 1.442695
          %v2115 = vpow.pop %v2114
          %v2116 = vmul.f32 %v2109, 1.442695
          %v2117 = vpow.pop %v2116
          %v2118 = vsub.f32 %v2080, %v2102
          %v2119 = vsub.f32 %v2082, %v2103
          %v2120 = vsub.f32 %v2085, %v2104
          %v2121 = vsub.f32 %v2087, %v2105
          %v2122 = vmul.f32 %v2118, 1.442695
          %v2123 = vpow.pop %v2122
          %v2124 = vmul.f32 %v2119, 1.442695
          %v2125 = vpow.pop %v2124
          %v2126 = vmul.f32 %v2120, 1.442695
          %v2127 = vpow.pop %v2126
          %v2128 = vmul.f32 %v2121, 1.442695
          %v2129 = vpow.pop %v2128
          %v2130 = vmul.f32 %v2111, %v2014
          %v2131 = vmul.f32 %v2113, %v2015
          %v2132 = vmul.f32 %v2115, %v2016
          %v2133 = vmul.f32 %v2117, %v2017
          %v2134 = vsel %vm2089, %v2123, 0.0
          %2135 = vadd.xlane.f32.xlu0 %v2134
          %v2136 = vpop.xlane.xlu0 %2135
          %v2137 = vsel %vm2089, %v2125, 0.0
          %2138 = vadd.xlane.f32.xlu0 %v2137
          %v2139 = vpop.xlane.xlu0 %2138
          %v2140 = vsel %vm2089, %v2127, 0.0
          %2141 = vadd.xlane.f32.xlu0 %v2140
          %v2142 = vpop.xlane.xlu0 %2141
          %v2143 = vsel %vm2089, %v2129, 0.0
          %2144 = vadd.xlane.f32.xlu0 %v2143
          %v2145 = vpop.xlane.xlu0 %2144
          %v2146 = vadd.f32 %v2130, %v2136
          %v2147 = vadd.f32 %v2131, %v2139
          %v2148 = vadd.f32 %v2132, %v2142
          %v2149 = vadd.f32 %v2133, %v2145
          %v2150 = vmul.f32 %v2111, %v2018
          %v2151 = vmul.f32 %v2113, %v2019
          %v2152 = vmul.f32 %v2115, %v2020
          %v2153 = vmul.f32 %v2117, %v2021
          %v2154 = vpack.c.bf16 %v2125, %v2123
          %v2155 = vpack.c.bf16 %v2129, %v2127
          %v2160 = vunpack.c.l.b16 %v2033
          %v2161 = vunpack.c.l.b16 %v2034
          %v2162 = vunpack.c.l.b16 %v2035
          %v2163 = vunpack.c.l.b16 %v2036
          %v2164 = vpack.c.b16 %v2161, %v2160
          %v2165 = vpack.c.b16 %v2163, %v2162
          %v2169 = vsel %vm2089, %v2154, 0
          %v2172 = vsel %vm2089, %v2155, 0
          %2174 = vmatpush.bf16.msra.mxu0 0
          %2175 = vmatpush.bf16.msra.mxu0 0
          %2176 = vmatpush.bf16.msra.mxu0 0
          %2177 = vmatpush.bf16.msra.mxu0 0
          %2178 = vmatpush.bf16.msra.mxu0 0
          %2179 = vmatpush.bf16.msra.mxu0 0
          %2180 = vmatpush.bf16.msra.mxu0 %v2165
          %2181 = vmatpush.bf16.msra.mxu0 %v2164
          %2182 = vmatmul.bf16.gmra.mxu0 %v2169
          %v2183 = vpop.f32.mrf.mxu0
          %v2184 = vadd.f32 0.0, %v2183
          %v2185 = vpop.f32.mrf.mxu0
          %v2186 = vadd.f32 0.0, %v2185
          %2187 = vmatmul.bf16.gmra.mxu0 %v2172
          %v2188 = vpop.f32.mrf.mxu0
          %v2189 = vadd.f32 0.0, %v2188
          %v2190 = vpop.f32.mrf.mxu0
          %v2191 = vadd.f32 0.0, %v2190
          %2192 = vdwg.mxu0
          %v2193 = vadd.f32 %v2150, %v2184
          %v2194 = vadd.f32 %v2151, %v2186
          %v2195 = vadd.f32 %v2152, %v2189
          %v2196 = vadd.f32 %v2153, %v2191
        $region205: #{tpu_custom_call.1} parent=135 // loop_footer
          %s2009 = sadd.s32 1, %s2005
        $region206: #{tpu_custom_call.1} parent=135 // loop_footer_branch
          %2004 = sbr.rel target = $region202
        $region207: #{tpu_custom_call.1} parent=135 // loop_exit
          _
        %v2197 = vrcp.pop %v2014
        %v2198 = vrcp.pop %v2015
        %v2199 = vrcp.pop %v2016
        %v2200 = vrcp.pop %v2017
        %v2201 = vmul.f32 %v2018, %v2197
        %v2202 = vmul.f32 %v2019, %v2198
        %v2203 = vmul.f32 %v2020, %v2199
        %v2204 = vmul.f32 %v2021, %v2200
        %v2205 = vpack.c.bf16 %v2201, %v2201
        %v2206 = vpack.c.bf16 %v2202, %v2202
        %v2207 = vpack.c.bf16 %v2203, %v2203
        %v2208 = vpack.c.bf16 %v2204, %v2204
        loop: start=0, step=1, limit=2
        $region208: #{tpu_custom_call.1} parent=135 // loop_pre_header
          _
        $region209: #{tpu_custom_call.1} parent=135 // loop_header
          %s2210 = sphi 0, %s2214
          %p2211 = scmp.ge.s32.totalorder %s2210, 2
          %v2215 = vphi -inf, %v2315
          %v2216 = vphi -inf, %v2316
          %v2217 = vphi -inf, %v2317
          %v2218 = vphi -inf, %v2318
          %v2219 = vphi 0.0, %v2359
          %v2220 = vphi 0.0, %v2360
          %v2221 = vphi 0.0, %v2361
          %v2222 = vphi 0.0, %v2362
          %v2223 = vphi 0.0, %v2410
          %v2224 = vphi 0.0, %v2411
          %v2225 = vphi 0.0, %v2412
          %v2226 = vphi 0.0, %v2413
        $region210: #{tpu_custom_call.1} parent=135 // loop_header_branch
          %2213 = sbr.rel (%p2211) target = $region214
        $region211: #{tpu_custom_call.1} parent=135 // loop_body
          %s2227 = smul.u32 %s2210, 32
          %s2228 = sshra.s32 %s2227, 3
          %s2229 = sand.u32 %s2227, 7
          %s2230 = smul.addr %s2228, 4
          %s2231 = scalar_lea.vmem [#allocation3], %s2230
          %v2232 = vld [vmem:[%s2231] sm:$0xf]
          %v2233 = vld [vmem:[%s2231 + $0x4] sm:$0xf]
          %v2234 = vld [vmem:[%s2231 + $0x8] sm:$0xf]
          %v2235 = vld [vmem:[%s2231 + $0xc] sm:$0xf]
          %s2236 = smul.addr %s2228, 4
          %s2237 = scalar_lea.vmem [#allocation4], %s2236
          %v2238 = vld [vmem:[%s2237] sm:$0xf]
          %v2239 = vld [vmem:[%s2237 + $0x4] sm:$0xf]
          %v2240 = vld [vmem:[%s2237 + $0x8] sm:$0xf]
          %v2241 = vld [vmem:[%s2237 + $0xc] sm:$0xf]
          %v2246 = vunpack.c.l.b16 %v2000
          %v2247 = vunpack.c.l.b16 %v2001
          %v2248 = vunpack.c.l.b16 %v2002
          %v2249 = vunpack.c.l.b16 %v2003
          %v2250 = vpack.c.b16 %v2247, %v2246
          %v2251 = vpack.c.b16 %v2249, %v2248
          %2252 = vrot.lane.b32.xlu0 %v2250, 112
          %v2253 = vpop.permute.xlu0 %2252
          %2254 = vrot.lane.b32.xlu0 %v2251, 112
          %v2255 = vpop.permute.xlu0 %2254
          %v2260 = vunpack.c.l.b16 %v2232
          %v2261 = vunpack.c.l.b16 %v2233
          %v2262 = vunpack.c.l.b16 %v2234
          %v2263 = vunpack.c.l.b16 %v2235
          %v2264 = vpack.c.b16 %v2261, %v2260
          %v2265 = vpack.c.b16 %v2263, %v2262
          %2266 = vrot.lane.b32.xlu0 %v2264, 112
          %v2267 = vpop.permute.xlu0 %2266
          %2268 = vrot.lane.b32.xlu0 %v2265, 112
          %v2269 = vpop.permute.xlu0 %2268
          %vm2270 = vcmask 130048
          %v2272 = vsel %vm2270, %v2253, 0
          %v2275 = vsel %vm2270, %v2255, 0
          %v2278 = vsel %vm2270, %v2267, 0
          %v2281 = vsel %vm2270, %v2269, 0
          %2283 = vmatpush.bf16.xpose.msra.mxu0 0
          %2284 = vmatpush.bf16.xpose.msra.mxu0 0
          %2285 = vmatpush.bf16.xpose.msra.mxu0 0
          %2286 = vmatpush.bf16.xpose.msra.mxu0 0
          %2287 = vmatpush.bf16.xpose.msra.mxu0 0
          %2288 = vmatpush.bf16.xpose.msra.mxu0 0
          %2289 = vmatpush.bf16.xpose.msra.mxu0 %v2281
          %2290 = vmatpush.bf16.xpose.msra.mxu0 %v2278
          %2291 = vmatmul.bf16.gmra.mxu0 %v2272
          %v2292 = vpop.f32.mrf.mxu0
          %v2293 = vadd.f32 0.0, %v2292
          %v2294 = vpop.f32.mrf.mxu0
          %v2295 = vadd.f32 0.0, %v2294
          %2296 = vmatmul.bf16.gmra.mxu0 %v2275
          %v2297 = vpop.f32.mrf.mxu0
          %v2298 = vadd.f32 0.0, %v2297
          %v2299 = vpop.f32.mrf.mxu0
          %v2300 = vadd.f32 0.0, %v2299
          %2301 = vdwg.mxu0
          %vm2302 = vcmask 261120
          %v2303 = vsel %vm2302, %v2293, -inf
          %2304 = vmax.xlane.f32.xlu0 %v2303
          %v2305 = vpop.xlane.xlu0 %2304
          %v2306 = vsel %vm2302, %v2295, -inf
          %2307 = vmax.xlane.f32.xlu0 %v2306
          %v2308 = vpop.xlane.xlu0 %2307
          %v2309 = vsel %vm2302, %v2298, -inf
          %2310 = vmax.xlane.f32.xlu0 %v2309
          %v2311 = vpop.xlane.xlu0 %2310
          %v2312 = vsel %vm2302, %v2300, -inf
          %2313 = vmax.xlane.f32.xlu0 %v2312
          %v2314 = vpop.xlane.xlu0 %2313
          %v2315 = vmax.f32 %v2215, %v2305
          %v2316 = vmax.f32 %v2216, %v2308
          %v2317 = vmax.f32 %v2217, %v2311
          %v2318 = vmax.f32 %v2218, %v2314
          %v2319 = vsub.f32 %v2215, %v2315
          %v2320 = vsub.f32 %v2216, %v2316
          %v2321 = vsub.f32 %v2217, %v2317
          %v2322 = vsub.f32 %v2218, %v2318
          %v2323 = vmul.f32 %v2319, 1.442695
          %v2324 = vpow.pop %v2323
          %v2325 = vmul.f32 %v2320, 1.442695
          %v2326 = vpow.pop %v2325
          %v2327 = vmul.f32 %v2321, 1.442695
          %v2328 = vpow.pop %v2327
          %v2329 = vmul.f32 %v2322, 1.442695
          %v2330 = vpow.pop %v2329
          %v2331 = vsub.f32 %v2293, %v2315
          %v2332 = vsub.f32 %v2295, %v2316
          %v2333 = vsub.f32 %v2298, %v2317
          %v2334 = vsub.f32 %v2300, %v2318
          %v2335 = vmul.f32 %v2331, 1.442695
          %v2336 = vpow.pop %v2335
          %v2337 = vmul.f32 %v2332, 1.442695
          %v2338 = vpow.pop %v2337
          %v2339 = vmul.f32 %v2333, 1.442695
          %v2340 = vpow.pop %v2339
          %v2341 = vmul.f32 %v2334, 1.442695
          %v2342 = vpow.pop %v2341
          %v2343 = vmul.f32 %v2324, %v2219
          %v2344 = vmul.f32 %v2326, %v2220
          %v2345 = vmul.f32 %v2328, %v2221
          %v2346 = vmul.f32 %v2330, %v2222
          %v2347 = vsel %vm2302, %v2336, 0.0
          %2348 = vadd.xlane.f32.xlu0 %v2347
          %v2349 = vpop.xlane.xlu0 %2348
          %v2350 = vsel %vm2302, %v2338, 0.0
          %2351 = vadd.xlane.f32.xlu0 %v2350
          %v2352 = vpop.xlane.xlu0 %2351
          %v2353 = vsel %vm2302, %v2340, 0.0
          %2354 = vadd.xlane.f32.xlu0 %v2353
          %v2355 = vpop.xlane.xlu0 %2354
          %v2356 = vsel %vm2302, %v2342, 0.0
          %2357 = vadd.xlane.f32.xlu0 %v2356
          %v2358 = vpop.xlane.xlu0 %2357
          %v2359 = vadd.f32 %v2343, %v2349
          %v2360 = vadd.f32 %v2344, %v2352
          %v2361 = vadd.f32 %v2345, %v2355
          %v2362 = vadd.f32 %v2346, %v2358
          %v2363 = vmul.f32 %v2324, %v2223
          %v2364 = vmul.f32 %v2326, %v2224
          %v2365 = vmul.f32 %v2328, %v2225
          %v2366 = vmul.f32 %v2330, %v2226
          %v2367 = vpack.c.bf16 %v2338, %v2336
          %v2368 = vpack.c.bf16 %v2342, %v2340
          %v2373 = vunpack.c.l.b16 %v2238
          %v2374 = vunpack.c.l.b16 %v2239
          %v2375 = vunpack.c.l.b16 %v2240
          %v2376 = vunpack.c.l.b16 %v2241
          %v2377 = vpack.c.b16 %v2374, %v2373
          %v2378 = vpack.c.b16 %v2376, %v2375
          %2379 = vrot.lane.b32.xlu0 %v2377, 112
          %v2380 = vpop.permute.xlu0 %2379
          %2381 = vrot.lane.b32.xlu0 %v2378, 112
          %v2382 = vpop.permute.xlu0 %2381
          %v2386 = vsel %vm2302, %v2367, 0
          %v2389 = vsel %vm2302, %v2368, 0
          %2391 = vmatpush.bf16.msra.mxu0 0
          %2392 = vmatpush.bf16.msra.mxu0 0
          %2393 = vmatpush.bf16.msra.mxu0 0
          %2394 = vmatpush.bf16.msra.mxu0 0
          %2395 = vmatpush.bf16.msra.mxu0 0
          %2396 = vmatpush.bf16.msra.mxu0 0
          %2397 = vmatpush.bf16.msra.mxu0 %v2382
          %2398 = vmatpush.bf16.msra.mxu0 %v2380
          %2399 = vmatmul.bf16.gmra.mxu0 %v2386
          %v2400 = vpop.f32.mrf.mxu0
          %v2401 = vadd.f32 0.0, %v2400
          %v2402 = vpop.f32.mrf.mxu0
          %v2403 = vadd.f32 0.0, %v2402
          %2404 = vmatmul.bf16.gmra.mxu0 %v2389
          %v2405 = vpop.f32.mrf.mxu0
          %v2406 = vadd.f32 0.0, %v2405
          %v2407 = vpop.f32.mrf.mxu0
          %v2408 = vadd.f32 0.0, %v2407
          %2409 = vdwg.mxu0
          %v2410 = vadd.f32 %v2363, %v2401
          %v2411 = vadd.f32 %v2364, %v2403
          %v2412 = vadd.f32 %v2365, %v2406
          %v2413 = vadd.f32 %v2366, %v2408
        $region212: #{tpu_custom_call.1} parent=135 // loop_footer
          %s2214 = sadd.s32 1, %s2210
        $region213: #{tpu_custom_call.1} parent=135 // loop_footer_branch
          %2209 = sbr.rel target = $region209
        $region214: #{tpu_custom_call.1} parent=135 // loop_exit
          _
        %v2414 = vrcp.pop %v2219
        %v2415 = vrcp.pop %v2220
        %v2416 = vrcp.pop %v2221
        %v2417 = vrcp.pop %v2222
        %v2418 = vmul.f32 %v2223, %v2414
        %v2419 = vmul.f32 %v2224, %v2415
        %v2420 = vmul.f32 %v2225, %v2416
        %v2421 = vmul.f32 %v2226, %v2417
        %v2422 = vpack.c.bf16 %v2418, %v2418
        %v2423 = vpack.c.bf16 %v2419, %v2419
        %v2424 = vpack.c.bf16 %v2420, %v2420
        %v2425 = vpack.c.bf16 %v2421, %v2421
        loop: start=0, step=1, limit=2
        $region215: #{tpu_custom_call.1} parent=135 // loop_pre_header
          _
        $region216: #{tpu_custom_call.1} parent=135 // loop_header
          %s2427 = sphi 0, %s2431
          %p2428 = scmp.ge.s32.totalorder %s2427, 2
          %v2432 = vphi -inf, %v2532
          %v2433 = vphi -inf, %v2533
          %v2434 = vphi -inf, %v2534
          %v2435 = vphi -inf, %v2535
          %v2436 = vphi 0.0, %v2576
          %v2437 = vphi 0.0, %v2577
          %v2438 = vphi 0.0, %v2578
          %v2439 = vphi 0.0, %v2579
          %v2440 = vphi 0.0, %v2627
          %v2441 = vphi 0.0, %v2628
          %v2442 = vphi 0.0, %v2629
          %v2443 = vphi 0.0, %v2630
        $region217: #{tpu_custom_call.1} parent=135 // loop_header_branch
          %2430 = sbr.rel (%p2428) target = $region221
        $region218: #{tpu_custom_call.1} parent=135 // loop_body
          %s2444 = smul.u32 %s2427, 32
          %s2445 = sshra.s32 %s2444, 3
          %s2446 = sand.u32 %s2444, 7
          %s2447 = smul.addr %s2445, 4
          %s2448 = scalar_lea.vmem [#allocation3], %s2447
          %v2449 = vld [vmem:[%s2448] sm:$0xf]
          %v2450 = vld [vmem:[%s2448 + $0x4] sm:$0xf]
          %v2451 = vld [vmem:[%s2448 + $0x8] sm:$0xf]
          %v2452 = vld [vmem:[%s2448 + $0xc] sm:$0xf]
          %s2453 = smul.addr %s2445, 4
          %s2454 = scalar_lea.vmem [#allocation4], %s2453
          %v2455 = vld [vmem:[%s2454] sm:$0xf]
          %v2456 = vld [vmem:[%s2454 + $0x4] sm:$0xf]
          %v2457 = vld [vmem:[%s2454 + $0x8] sm:$0xf]
          %v2458 = vld [vmem:[%s2454 + $0xc] sm:$0xf]
          %v2463 = vunpack.c.l.b16 %v2000
          %v2464 = vunpack.c.l.b16 %v2001
          %v2465 = vunpack.c.l.b16 %v2002
          %v2466 = vunpack.c.l.b16 %v2003
          %v2467 = vpack.c.b16 %v2464, %v2463
          %v2468 = vpack.c.b16 %v2466, %v2465
          %2469 = vrot.lane.b32.xlu0 %v2467, 96
          %v2470 = vpop.permute.xlu0 %2469
          %2471 = vrot.lane.b32.xlu0 %v2468, 96
          %v2472 = vpop.permute.xlu0 %2471
          %v2477 = vunpack.c.l.b16 %v2449
          %v2478 = vunpack.c.l.b16 %v2450
          %v2479 = vunpack.c.l.b16 %v2451
          %v2480 = vunpack.c.l.b16 %v2452
          %v2481 = vpack.c.b16 %v2478, %v2477
          %v2482 = vpack.c.b16 %v2480, %v2479
          %2483 = vrot.lane.b32.xlu0 %v2481, 96
          %v2484 = vpop.permute.xlu0 %2483
          %2485 = vrot.lane.b32.xlu0 %v2482, 96
          %v2486 = vpop.permute.xlu0 %2485
          %vm2487 = vcmask 130048
          %v2489 = vsel %vm2487, %v2470, 0
          %v2492 = vsel %vm2487, %v2472, 0
          %v2495 = vsel %vm2487, %v2484, 0
          %v2498 = vsel %vm2487, %v2486, 0
          %2500 = vmatpush.bf16.xpose.msra.mxu0 0
          %2501 = vmatpush.bf16.xpose.msra.mxu0 0
          %2502 = vmatpush.bf16.xpose.msra.mxu0 0
          %2503 = vmatpush.bf16.xpose.msra.mxu0 0
          %2504 = vmatpush.bf16.xpose.msra.mxu0 0
          %2505 = vmatpush.bf16.xpose.msra.mxu0 0
          %2506 = vmatpush.bf16.xpose.msra.mxu0 %v2498
          %2507 = vmatpush.bf16.xpose.msra.mxu0 %v2495
          %2508 = vmatmul.bf16.gmra.mxu0 %v2489
          %v2509 = vpop.f32.mrf.mxu0
          %v2510 = vadd.f32 0.0, %v2509
          %v2511 = vpop.f32.mrf.mxu0
          %v2512 = vadd.f32 0.0, %v2511
          %2513 = vmatmul.bf16.gmra.mxu0 %v2492
          %v2514 = vpop.f32.mrf.mxu0
          %v2515 = vadd.f32 0.0, %v2514
          %v2516 = vpop.f32.mrf.mxu0
          %v2517 = vadd.f32 0.0, %v2516
          %2518 = vdwg.mxu0
          %vm2519 = vcmask 261120
          %v2520 = vsel %vm2519, %v2510, -inf
          %2521 = vmax.xlane.f32.xlu0 %v2520
          %v2522 = vpop.xlane.xlu0 %2521
          %v2523 = vsel %vm2519, %v2512, -inf
          %2524 = vmax.xlane.f32.xlu0 %v2523
          %v2525 = vpop.xlane.xlu0 %2524
          %v2526 = vsel %vm2519, %v2515, -inf
          %2527 = vmax.xlane.f32.xlu0 %v2526
          %v2528 = vpop.xlane.xlu0 %2527
          %v2529 = vsel %vm2519, %v2517, -inf
          %2530 = vmax.xlane.f32.xlu0 %v2529
          %v2531 = vpop.xlane.xlu0 %2530
          %v2532 = vmax.f32 %v2432, %v2522
          %v2533 = vmax.f32 %v2433, %v2525
          %v2534 = vmax.f32 %v2434, %v2528
          %v2535 = vmax.f32 %v2435, %v2531
          %v2536 = vsub.f32 %v2432, %v2532
          %v2537 = vsub.f32 %v2433, %v2533
          %v2538 = vsub.f32 %v2434, %v2534
          %v2539 = vsub.f32 %v2435, %v2535
          %v2540 = vmul.f32 %v2536, 1.442695
          %v2541 = vpow.pop %v2540
          %v2542 = vmul.f32 %v2537, 1.442695
          %v2543 = vpow.pop %v2542
          %v2544 = vmul.f32 %v2538, 1.442695
          %v2545 = vpow.pop %v2544
          %v2546 = vmul.f32 %v2539, 1.442695
          %v2547 = vpow.pop %v2546
          %v2548 = vsub.f32 %v2510, %v2532
          %v2549 = vsub.f32 %v2512, %v2533
          %v2550 = vsub.f32 %v2515, %v2534
          %v2551 = vsub.f32 %v2517, %v2535
          %v2552 = vmul.f32 %v2548, 1.442695
          %v2553 = vpow.pop %v2552
          %v2554 = vmul.f32 %v2549, 1.442695
          %v2555 = vpow.pop %v2554
          %v2556 = vmul.f32 %v2550, 1.442695
          %v2557 = vpow.pop %v2556
          %v2558 = vmul.f32 %v2551, 1.442695
          %v2559 = vpow.pop %v2558
          %v2560 = vmul.f32 %v2541, %v2436
          %v2561 = vmul.f32 %v2543, %v2437
          %v2562 = vmul.f32 %v2545, %v2438
          %v2563 = vmul.f32 %v2547, %v2439
          %v2564 = vsel %vm2519, %v2553, 0.0
          %2565 = vadd.xlane.f32.xlu0 %v2564
          %v2566 = vpop.xlane.xlu0 %2565
          %v2567 = vsel %vm2519, %v2555, 0.0
          %2568 = vadd.xlane.f32.xlu0 %v2567
          %v2569 = vpop.xlane.xlu0 %2568
          %v2570 = vsel %vm2519, %v2557, 0.0
          %2571 = vadd.xlane.f32.xlu0 %v2570
          %v2572 = vpop.xlane.xlu0 %2571
          %v2573 = vsel %vm2519, %v2559, 0.0
          %2574 = vadd.xlane.f32.xlu0 %v2573
          %v2575 = vpop.xlane.xlu0 %2574
          %v2576 = vadd.f32 %v2560, %v2566
          %v2577 = vadd.f32 %v2561, %v2569
          %v2578 = vadd.f32 %v2562, %v2572
          %v2579 = vadd.f32 %v2563, %v2575
          %v2580 = vmul.f32 %v2541, %v2440
          %v2581 = vmul.f32 %v2543, %v2441
          %v2582 = vmul.f32 %v2545, %v2442
          %v2583 = vmul.f32 %v2547, %v2443
          %v2584 = vpack.c.bf16 %v2555, %v2553
          %v2585 = vpack.c.bf16 %v2559, %v2557
          %v2590 = vunpack.c.l.b16 %v2455
          %v2591 = vunpack.c.l.b16 %v2456
          %v2592 = vunpack.c.l.b16 %v2457
          %v2593 = vunpack.c.l.b16 %v2458
          %v2594 = vpack.c.b16 %v2591, %v2590
          %v2595 = vpack.c.b16 %v2593, %v2592
          %2596 = vrot.lane.b32.xlu0 %v2594, 96
          %v2597 = vpop.permute.xlu0 %2596
          %2598 = vrot.lane.b32.xlu0 %v2595, 96
          %v2599 = vpop.permute.xlu0 %2598
          %v2603 = vsel %vm2519, %v2584, 0
          %v2606 = vsel %vm2519, %v2585, 0
          %2608 = vmatpush.bf16.msra.mxu0 0
          %2609 = vmatpush.bf16.msra.mxu0 0
          %2610 = vmatpush.bf16.msra.mxu0 0
          %2611 = vmatpush.bf16.msra.mxu0 0
          %2612 = vmatpush.bf16.msra.mxu0 0
          %2613 = vmatpush.bf16.msra.mxu0 0
          %2614 = vmatpush.bf16.msra.mxu0 %v2599
          %2615 = vmatpush.bf16.msra.mxu0 %v2597
          %2616 = vmatmul.bf16.gmra.mxu0 %v2603
          %v2617 = vpop.f32.mrf.mxu0
          %v2618 = vadd.f32 0.0, %v2617
          %v2619 = vpop.f32.mrf.mxu0
          %v2620 = vadd.f32 0.0, %v2619
          %2621 = vmatmul.bf16.gmra.mxu0 %v2606
          %v2622 = vpop.f32.mrf.mxu0
          %v2623 = vadd.f32 0.0, %v2622
          %v2624 = vpop.f32.mrf.mxu0
          %v2625 = vadd.f32 0.0, %v2624
          %2626 = vdwg.mxu0
          %v2627 = vadd.f32 %v2580, %v2618
          %v2628 = vadd.f32 %v2581, %v2620
          %v2629 = vadd.f32 %v2582, %v2623
          %v2630 = vadd.f32 %v2583, %v2625
        $region219: #{tpu_custom_call.1} parent=135 // loop_footer
          %s2431 = sadd.s32 1, %s2427
        $region220: #{tpu_custom_call.1} parent=135 // loop_footer_branch
          %2426 = sbr.rel target = $region216
        $region221: #{tpu_custom_call.1} parent=135 // loop_exit
          _
        %v2631 = vrcp.pop %v2436
        %v2632 = vrcp.pop %v2437
        %v2633 = vrcp.pop %v2438
        %v2634 = vrcp.pop %v2439
        %v2635 = vmul.f32 %v2440, %v2631
        %v2636 = vmul.f32 %v2441, %v2632
        %v2637 = vmul.f32 %v2442, %v2633
        %v2638 = vmul.f32 %v2443, %v2634
        %v2639 = vpack.c.bf16 %v2635, %v2635
        %v2640 = vpack.c.bf16 %v2636, %v2636
        %v2641 = vpack.c.bf16 %v2637, %v2637
        %v2642 = vpack.c.bf16 %v2638, %v2638
        loop: start=0, step=1, limit=2
        $region222: #{tpu_custom_call.1} parent=135 // loop_pre_header
          _
        $region223: #{tpu_custom_call.1} parent=135 // loop_header
          %s2644 = sphi 0, %s2648
          %p2645 = scmp.ge.s32.totalorder %s2644, 2
          %v2649 = vphi -inf, %v2749
          %v2650 = vphi -inf, %v2750
          %v2651 = vphi -inf, %v2751
          %v2652 = vphi -inf, %v2752
          %v2653 = vphi 0.0, %v2793
          %v2654 = vphi 0.0, %v2794
          %v2655 = vphi 0.0, %v2795
          %v2656 = vphi 0.0, %v2796
          %v2657 = vphi 0.0, %v2844
          %v2658 = vphi 0.0, %v2845
          %v2659 = vphi 0.0, %v2846
          %v2660 = vphi 0.0, %v2847
        $region224: #{tpu_custom_call.1} parent=135 // loop_header_branch
          %2647 = sbr.rel (%p2645) target = $region228
        $region225: #{tpu_custom_call.1} parent=135 // loop_body
          %s2661 = smul.u32 %s2644, 32
          %s2662 = sshra.s32 %s2661, 3
          %s2663 = sand.u32 %s2661, 7
          %s2664 = smul.addr %s2662, 4
          %s2665 = scalar_lea.vmem [#allocation3], %s2664
          %v2666 = vld [vmem:[%s2665] sm:$0xf]
          %v2667 = vld [vmem:[%s2665 + $0x4] sm:$0xf]
          %v2668 = vld [vmem:[%s2665 + $0x8] sm:$0xf]
          %v2669 = vld [vmem:[%s2665 + $0xc] sm:$0xf]
          %s2670 = smul.addr %s2662, 4
          %s2671 = scalar_lea.vmem [#allocation4], %s2670
          %v2672 = vld [vmem:[%s2671] sm:$0xf]
          %v2673 = vld [vmem:[%s2671 + $0x4] sm:$0xf]
          %v2674 = vld [vmem:[%s2671 + $0x8] sm:$0xf]
          %v2675 = vld [vmem:[%s2671 + $0xc] sm:$0xf]
          %v2680 = vunpack.c.l.b16 %v2000
          %v2681 = vunpack.c.l.b16 %v2001
          %v2682 = vunpack.c.l.b16 %v2002
          %v2683 = vunpack.c.l.b16 %v2003
          %v2684 = vpack.c.b16 %v2681, %v2680
          %v2685 = vpack.c.b16 %v2683, %v2682
          %2686 = vrot.lane.b32.xlu0 %v2684, 80
          %v2687 = vpop.permute.xlu0 %2686
          %2688 = vrot.lane.b32.xlu0 %v2685, 80
          %v2689 = vpop.permute.xlu0 %2688
          %v2694 = vunpack.c.l.b16 %v2666
          %v2695 = vunpack.c.l.b16 %v2667
          %v2696 = vunpack.c.l.b16 %v2668
          %v2697 = vunpack.c.l.b16 %v2669
          %v2698 = vpack.c.b16 %v2695, %v2694
          %v2699 = vpack.c.b16 %v2697, %v2696
          %2700 = vrot.lane.b32.xlu0 %v2698, 80
          %v2701 = vpop.permute.xlu0 %2700
          %2702 = vrot.lane.b32.xlu0 %v2699, 80
          %v2703 = vpop.permute.xlu0 %2702
          %vm2704 = vcmask 130048
          %v2706 = vsel %vm2704, %v2687, 0
          %v2709 = vsel %vm2704, %v2689, 0
          %v2712 = vsel %vm2704, %v2701, 0
          %v2715 = vsel %vm2704, %v2703, 0
          %2717 = vmatpush.bf16.xpose.msra.mxu0 0
          %2718 = vmatpush.bf16.xpose.msra.mxu0 0
          %2719 = vmatpush.bf16.xpose.msra.mxu0 0
          %2720 = vmatpush.bf16.xpose.msra.mxu0 0
          %2721 = vmatpush.bf16.xpose.msra.mxu0 0
          %2722 = vmatpush.bf16.xpose.msra.mxu0 0
          %2723 = vmatpush.bf16.xpose.msra.mxu0 %v2715
          %2724 = vmatpush.bf16.xpose.msra.mxu0 %v2712
          %2725 = vmatmul.bf16.gmra.mxu0 %v2706
          %v2726 = vpop.f32.mrf.mxu0
          %v2727 = vadd.f32 0.0, %v2726
          %v2728 = vpop.f32.mrf.mxu0
          %v2729 = vadd.f32 0.0, %v2728
          %2730 = vmatmul.bf16.gmra.mxu0 %v2709
          %v2731 = vpop.f32.mrf.mxu0
          %v2732 = vadd.f32 0.0, %v2731
          %v2733 = vpop.f32.mrf.mxu0
          %v2734 = vadd.f32 0.0, %v2733
          %2735 = vdwg.mxu0
          %vm2736 = vcmask 261120
          %v2737 = vsel %vm2736, %v2727, -inf
          %2738 = vmax.xlane.f32.xlu0 %v2737
          %v2739 = vpop.xlane.xlu0 %2738
          %v2740 = vsel %vm2736, %v2729, -inf
          %2741 = vmax.xlane.f32.xlu0 %v2740
          %v2742 = vpop.xlane.xlu0 %2741
          %v2743 = vsel %vm2736, %v2732, -inf
          %2744 = vmax.xlane.f32.xlu0 %v2743
          %v2745 = vpop.xlane.xlu0 %2744
          %v2746 = vsel %vm2736, %v2734, -inf
          %2747 = vmax.xlane.f32.xlu0 %v2746
          %v2748 = vpop.xlane.xlu0 %2747
          %v2749 = vmax.f32 %v2649, %v2739
          %v2750 = vmax.f32 %v2650, %v2742
          %v2751 = vmax.f32 %v2651, %v2745
          %v2752 = vmax.f32 %v2652, %v2748
          %v2753 = vsub.f32 %v2649, %v2749
          %v2754 = vsub.f32 %v2650, %v2750
          %v2755 = vsub.f32 %v2651, %v2751
          %v2756 = vsub.f32 %v2652, %v2752
          %v2757 = vmul.f32 %v2753, 1.442695
          %v2758 = vpow.pop %v2757
          %v2759 = vmul.f32 %v2754, 1.442695
          %v2760 = vpow.pop %v2759
          %v2761 = vmul.f32 %v2755, 1.442695
          %v2762 = vpow.pop %v2761
          %v2763 = vmul.f32 %v2756, 1.442695
          %v2764 = vpow.pop %v2763
          %v2765 = vsub.f32 %v2727, %v2749
          %v2766 = vsub.f32 %v2729, %v2750
          %v2767 = vsub.f32 %v2732, %v2751
          %v2768 = vsub.f32 %v2734, %v2752
          %v2769 = vmul.f32 %v2765, 1.442695
          %v2770 = vpow.pop %v2769
          %v2771 = vmul.f32 %v2766, 1.442695
          %v2772 = vpow.pop %v2771
          %v2773 = vmul.f32 %v2767, 1.442695
          %v2774 = vpow.pop %v2773
          %v2775 = vmul.f32 %v2768, 1.442695
          %v2776 = vpow.pop %v2775
          %v2777 = vmul.f32 %v2758, %v2653
          %v2778 = vmul.f32 %v2760, %v2654
          %v2779 = vmul.f32 %v2762, %v2655
          %v2780 = vmul.f32 %v2764, %v2656
          %v2781 = vsel %vm2736, %v2770, 0.0
          %2782 = vadd.xlane.f32.xlu0 %v2781
          %v2783 = vpop.xlane.xlu0 %2782
          %v2784 = vsel %vm2736, %v2772, 0.0
          %2785 = vadd.xlane.f32.xlu0 %v2784
          %v2786 = vpop.xlane.xlu0 %2785
          %v2787 = vsel %vm2736, %v2774, 0.0
          %2788 = vadd.xlane.f32.xlu0 %v2787
          %v2789 = vpop.xlane.xlu0 %2788
          %v2790 = vsel %vm2736, %v2776, 0.0
          %2791 = vadd.xlane.f32.xlu0 %v2790
          %v2792 = vpop.xlane.xlu0 %2791
          %v2793 = vadd.f32 %v2777, %v2783
          %v2794 = vadd.f32 %v2778, %v2786
          %v2795 = vadd.f32 %v2779, %v2789
          %v2796 = vadd.f32 %v2780, %v2792
          %v2797 = vmul.f32 %v2758, %v2657
          %v2798 = vmul.f32 %v2760, %v2658
          %v2799 = vmul.f32 %v2762, %v2659
          %v2800 = vmul.f32 %v2764, %v2660
          %v2801 = vpack.c.bf16 %v2772, %v2770
          %v2802 = vpack.c.bf16 %v2776, %v2774
          %v2807 = vunpack.c.l.b16 %v2672
          %v2808 = vunpack.c.l.b16 %v2673
          %v2809 = vunpack.c.l.b16 %v2674
          %v2810 = vunpack.c.l.b16 %v2675
          %v2811 = vpack.c.b16 %v2808, %v2807
          %v2812 = vpack.c.b16 %v2810, %v2809
          %2813 = vrot.lane.b32.xlu0 %v2811, 80
          %v2814 = vpop.permute.xlu0 %2813
          %2815 = vrot.lane.b32.xlu0 %v2812, 80
          %v2816 = vpop.permute.xlu0 %2815
          %v2820 = vsel %vm2736, %v2801, 0
          %v2823 = vsel %vm2736, %v2802, 0
          %2825 = vmatpush.bf16.msra.mxu0 0
          %2826 = vmatpush.bf16.msra.mxu0 0
          %2827 = vmatpush.bf16.msra.mxu0 0
          %2828 = vmatpush.bf16.msra.mxu0 0
          %2829 = vmatpush.bf16.msra.mxu0 0
          %2830 = vmatpush.bf16.msra.mxu0 0
          %2831 = vmatpush.bf16.msra.mxu0 %v2816
          %2832 = vmatpush.bf16.msra.mxu0 %v2814
          %2833 = vmatmul.bf16.gmra.mxu0 %v2820
          %v2834 = vpop.f32.mrf.mxu0
          %v2835 = vadd.f32 0.0, %v2834
          %v2836 = vpop.f32.mrf.mxu0
          %v2837 = vadd.f32 0.0, %v2836
          %2838 = vmatmul.bf16.gmra.mxu0 %v2823
          %v2839 = vpop.f32.mrf.mxu0
          %v2840 = vadd.f32 0.0, %v2839
          %v2841 = vpop.f32.mrf.mxu0
          %v2842 = vadd.f32 0.0, %v2841
          %2843 = vdwg.mxu0
          %v2844 = vadd.f32 %v2797, %v2835
          %v2845 = vadd.f32 %v2798, %v2837
          %v2846 = vadd.f32 %v2799, %v2840
          %v2847 = vadd.f32 %v2800, %v2842
        $region226: #{tpu_custom_call.1} parent=135 // loop_footer
          %s2648 = sadd.s32 1, %s2644
        $region227: #{tpu_custom_call.1} parent=135 // loop_footer_branch
          %2643 = sbr.rel target = $region223
        $region228: #{tpu_custom_call.1} parent=135 // loop_exit
          _
        %v2848 = vrcp.pop %v2653
        %v2849 = vrcp.pop %v2654
        %v2850 = vrcp.pop %v2655
        %v2851 = vrcp.pop %v2656
        %v2852 = vmul.f32 %v2657, %v2848
        %v2853 = vmul.f32 %v2658, %v2849
        %v2854 = vmul.f32 %v2659, %v2850
        %v2855 = vmul.f32 %v2660, %v2851
        %v2856 = vpack.c.bf16 %v2852, %v2852
        %v2857 = vpack.c.bf16 %v2853, %v2853
        %v2858 = vpack.c.bf16 %v2854, %v2854
        %v2859 = vpack.c.bf16 %v2855, %v2855
        %v2864 = vunpack.c.l.b16 %v2205
        %v2865 = vunpack.c.l.b16 %v2206
        %v2866 = vunpack.c.l.b16 %v2207
        %v2867 = vunpack.c.l.b16 %v2208
        %v2868 = vpack.c.b16 %v2865, %v2864
        %v2869 = vpack.c.b16 %v2867, %v2866
        %v2874 = vunpack.c.l.b16 %v2422
        %v2875 = vunpack.c.l.b16 %v2423
        %v2876 = vunpack.c.l.b16 %v2424
        %v2877 = vunpack.c.l.b16 %v2425
        %v2878 = vpack.c.b16 %v2875, %v2874
        %v2879 = vpack.c.b16 %v2877, %v2876
        %2880 = vrot.lane.b32.xlu0 %v2878, 16
        %v2881 = vpop.permute.xlu0 %2880
        %2882 = vrot.lane.b32.xlu0 %v2879, 16
        %v2883 = vpop.permute.xlu0 %2882
        %v2888 = vunpack.c.l.b16 %v2639
        %v2889 = vunpack.c.l.b16 %v2640
        %v2890 = vunpack.c.l.b16 %v2641
        %v2891 = vunpack.c.l.b16 %v2642
        %v2892 = vpack.c.b16 %v2889, %v2888
        %v2893 = vpack.c.b16 %v2891, %v2890
        %2894 = vrot.lane.b32.xlu0 %v2892, 32
        %v2895 = vpop.permute.xlu0 %2894
        %2896 = vrot.lane.b32.xlu0 %v2893, 32
        %v2897 = vpop.permute.xlu0 %2896
        %v2902 = vunpack.c.l.b16 %v2856
        %v2903 = vunpack.c.l.b16 %v2857
        %v2904 = vunpack.c.l.b16 %v2858
        %v2905 = vunpack.c.l.b16 %v2859
        %v2906 = vpack.c.b16 %v2903, %v2902
        %v2907 = vpack.c.b16 %v2905, %v2904
        %2908 = vrot.lane.b32.xlu0 %v2906, 48
        %v2909 = vpop.permute.xlu0 %2908
        %2910 = vrot.lane.b32.xlu0 %v2907, 48
        %v2911 = vpop.permute.xlu0 %2910
        %vm2912 = vcmask 130048
        %v2915 = vsel %vm2912, %v2868, %v2881
        %v2918 = vsel %vm2912, %v2869, %v2883
        %vm2919 = vcmask 261120
        %v2921 = vsel %vm2919, %v2915, %v2895
        %v2923 = vsel %vm2919, %v2918, %v2897
        %vm2924 = vcmask 392192
        %v2926 = vsel %vm2924, %v2921, %v2909
        %v2928 = vsel %vm2924, %v2923, %v2911
        %v2929 = vld [vmem:[#allocation21] sm:$0xf]
        %v2930 = vld [vmem:[#allocation21 + $0x4] sm:$0xf]
        %v2931 = vld [vmem:[#allocation21 + $0x8] sm:$0xf]
        %v2932 = vld [vmem:[#allocation21 + $0xc] sm:$0xf]
        %v2933 = vld [vmem:[#allocation21 + $0x10] sm:$0xf]
        %v2934 = vld [vmem:[#allocation21 + $0x14] sm:$0xf]
        %v2935 = vld [vmem:[#allocation21 + $0x18] sm:$0xf]
        %v2936 = vld [vmem:[#allocation21 + $0x1c] sm:$0xf]
        %v2937 = vld [vmem:[%s23] sm:$0x1]
        %v2939 = vperm.slane %v2937, 0
        %v2949 = vunpack.c.l.b16 %v2929
        %v2950 = vunpack.c.l.b16 %v2930
        %v2951 = vunpack.c.l.b16 %v2931
        %v2952 = vunpack.c.l.b16 %v2932
        %v2953 = vunpack.c.l.b16 %v2933
        %v2954 = vunpack.c.l.b16 %v2934
        %v2955 = vunpack.c.l.b16 %v2935
        %v2956 = vunpack.c.l.b16 %v2936
        %v2957 = vpack.c.b16 %v2950, %v2949
        %v2958 = vpack.c.b16 %v2952, %v2951
        %v2959 = vpack.c.b16 %v2954, %v2953
        %v2960 = vpack.c.b16 %v2956, %v2955
        %v2965 = vsel %vm1827, %v2926, 0
        %v2967 = vsel %vm1827, %v2928, 0
        %2969 = vmatpush.bf16.msra.mxu0 0
        %2970 = vmatpush.bf16.msra.mxu0 0
        %2971 = vmatpush.bf16.msra.mxu0 0
        %2972 = vmatpush.bf16.msra.mxu0 0
        %2973 = vmatpush.bf16.msra.mxu0 %v2960
        %2974 = vmatpush.bf16.msra.mxu0 %v2959
        %2975 = vmatpush.bf16.msra.mxu0 %v2958
        %2976 = vmatpush.bf16.msra.mxu0 %v2957
        %2977 = vmatmul.bf16.gmra.mxu0 %v2965
        %v2978 = vpop.f32.mrf.mxu0
        %v2979 = vadd.f32 %v2939, %v2978
        %v2980 = vpop.f32.mrf.mxu0
        %v2981 = vadd.f32 %v2939, %v2980
        %2982 = vmatmul.bf16.gmra.mxu0 %v2967
        %v2983 = vpop.f32.mrf.mxu0
        %v2984 = vadd.f32 %v2939, %v2983
        %v2985 = vpop.f32.mrf.mxu0
        %v2986 = vadd.f32 %v2939, %v2985
        %2987 = vdwg.mxu0
        %v2988 = vadd.f32 %v2979, %v1816
        %v2989 = vadd.f32 %v2981, %v1817
        %v2990 = vadd.f32 %v2984, %v1818
        %v2991 = vadd.f32 %v2986, %v1819
        %v2992 = vld [vmem:[%s25] sm:$0x1]
        %v2993 = vld [vmem:[%s27] sm:$0x1]
        %v2994 = vsel %vm1827, %v2988, 0.0
        %2995 = vadd.xlane.f32.xlu0 %v2994
        %v2996 = vpop.xlane.xlu0 %2995
        %v2997 = vsel %vm1827, %v2989, 0.0
        %2998 = vadd.xlane.f32.xlu0 %v2997
        %v2999 = vpop.xlane.xlu0 %2998
        %v3000 = vsel %vm1827, %v2990, 0.0
        %3001 = vadd.xlane.f32.xlu0 %v3000
        %v3002 = vpop.xlane.xlu0 %3001
        %v3003 = vsel %vm1827, %v2991, 0.0
        %3004 = vadd.xlane.f32.xlu0 %v3003
        %v3005 = vpop.xlane.xlu0 %3004
        %v3006 = vmul.f32 %v2996, %v1846
        %v3007 = vmul.f32 %v2999, %v1846
        %v3008 = vmul.f32 %v3002, %v1846
        %v3009 = vmul.f32 %v3005, %v1846
        %v3010 = vsub.f32 %v2988, %v3006
        %v3011 = vsub.f32 %v2989, %v3007
        %v3012 = vsub.f32 %v2990, %v3008
        %v3013 = vsub.f32 %v2991, %v3009
        %v3014 = vmul.f32 %v3010, %v3010
        %v3015 = vmul.f32 %v3011, %v3011
        %v3016 = vmul.f32 %v3012, %v3012
        %v3017 = vmul.f32 %v3013, %v3013
        %v3018 = vsel %vm1827, %v3014, 0.0
        %3019 = vadd.xlane.f32.xlu0 %v3018
        %v3020 = vpop.xlane.xlu0 %3019
        %v3021 = vsel %vm1827, %v3015, 0.0
        %3022 = vadd.xlane.f32.xlu0 %v3021
        %v3023 = vpop.xlane.xlu0 %3022
        %v3024 = vsel %vm1827, %v3016, 0.0
        %3025 = vadd.xlane.f32.xlu0 %v3024
        %v3026 = vpop.xlane.xlu0 %3025
        %v3027 = vsel %vm1827, %v3017, 0.0
        %3028 = vadd.xlane.f32.xlu0 %v3027
        %v3029 = vpop.xlane.xlu0 %3028
        %v3030 = vmul.f32 %v3020, %v1846
        %v3031 = vmul.f32 %v3023, %v1846
        %v3032 = vmul.f32 %v3026, %v1846
        %v3033 = vmul.f32 %v3029, %v1846
        %v3034 = vadd.f32 %v3030, 1e-05
        %v3035 = vadd.f32 %v3031, 1e-05
        %v3036 = vadd.f32 %v3032, 1e-05
        %v3037 = vadd.f32 %v3033, 1e-05
        %v3038 = vrsqrt.pop %v3034
        %v3039 = vmul.f32 %v3038, %v3034
        %v3040 = vmul.f32 %v3039, %v3038
        %v3041 = vmul.f32 0.5, %v3040
        %v3042 = vsub.f32 1.5, %v3041
        %v3043 = vmul.f32 %v3038, %v3042
        %vm3044 = vweird.f32 %v3034
        %vm3045 = vweird.f32 %v3038
        %vm3046 = vmor %vm3044, %vm3045
        %v3047 = vsel %vm3046, %v3038, %v3043
        %v3048 = vrsqrt.pop %v3035
        %v3049 = vmul.f32 %v3048, %v3035
        %v3050 = vmul.f32 %v3049, %v3048
        %v3051 = vmul.f32 0.5, %v3050
        %v3052 = vsub.f32 1.5, %v3051
        %v3053 = vmul.f32 %v3048, %v3052
        %vm3054 = vweird.f32 %v3035
        %vm3055 = vweird.f32 %v3048
        %vm3056 = vmor %vm3054, %vm3055
        %v3057 = vsel %vm3056, %v3048, %v3053
        %v3058 = vrsqrt.pop %v3036
        %v3059 = vmul.f32 %v3058, %v3036
        %v3060 = vmul.f32 %v3059, %v3058
        %v3061 = vmul.f32 0.5, %v3060
        %v3062 = vsub.f32 1.5, %v3061
        %v3063 = vmul.f32 %v3058, %v3062
        %vm3064 = vweird.f32 %v3036
        %vm3065 = vweird.f32 %v3058
        %vm3066 = vmor %vm3064, %vm3065
        %v3067 = vsel %vm3066, %v3058, %v3063
        %v3068 = vrsqrt.pop %v3037
        %v3069 = vmul.f32 %v3068, %v3037
        %v3070 = vmul.f32 %v3069, %v3068
        %v3071 = vmul.f32 0.5, %v3070
        %v3072 = vsub.f32 1.5, %v3071
        %v3073 = vmul.f32 %v3068, %v3072
        %vm3074 = vweird.f32 %v3037
        %vm3075 = vweird.f32 %v3068
        %vm3076 = vmor %vm3074, %vm3075
        %v3077 = vsel %vm3076, %v3068, %v3073
        %v3079 = vperm.slane %v2992, 0
        %v3081 = vmul.f32 %v3047, %v3079
        %v3082 = vmul.f32 %v3057, %v3079
        %v3083 = vmul.f32 %v3067, %v3079
        %v3084 = vmul.f32 %v3077, %v3079
        %v3085 = vmul.f32 %v3010, %v3081
        %v3086 = vmul.f32 %v3011, %v3082
        %v3087 = vmul.f32 %v3012, %v3083
        %v3088 = vmul.f32 %v3013, %v3084
        %v3090 = vperm.slane %v2993, 0
        %v3092 = vadd.f32 %v3085, %v3090
        %v3093 = vadd.f32 %v3086, %v3090
        %v3094 = vadd.f32 %v3087, %v3090
        %v3095 = vadd.f32 %v3088, %v3090
        %v3096 = vpack.c.bf16 %v3093, %v3092
        %v3097 = vpack.c.bf16 %v3095, %v3094
        %v3098 = vld [vmem:[#allocation22] sm:$0xf]
        %v3099 = vld [vmem:[#allocation22 + $0x4] sm:$0xf]
        %v3100 = vld [vmem:[#allocation22 + $0x8] sm:$0xf]
        %v3101 = vld [vmem:[#allocation22 + $0xc] sm:$0xf]
        %v3102 = vld [vmem:[#allocation22 + $0x10] sm:$0xf]
        %v3103 = vld [vmem:[#allocation22 + $0x14] sm:$0xf]
        %v3104 = vld [vmem:[#allocation22 + $0x18] sm:$0xf]
        %v3105 = vld [vmem:[#allocation22 + $0x1c] sm:$0xf]
        %v3114 = vunpack.c.l.b16 %v3098
        %v3115 = vunpack.c.l.b16 %v3099
        %v3116 = vunpack.c.l.b16 %v3100
        %v3117 = vunpack.c.l.b16 %v3101
        %v3118 = vunpack.c.l.b16 %v3102
        %v3119 = vunpack.c.l.b16 %v3103
        %v3120 = vunpack.c.l.b16 %v3104
        %v3121 = vunpack.c.l.b16 %v3105
        %v3122 = vpack.c.b16 %v3115, %v3114
        %v3123 = vpack.c.b16 %v3117, %v3116
        %v3124 = vpack.c.b16 %v3119, %v3118
        %v3125 = vpack.c.b16 %v3121, %v3120
        %v3131 = vsel %vm1827, %v3096, 0
        %v3134 = vsel %vm1827, %v3097, 0
        %3136 = vmatpush.bf16.msra.mxu0 0
        %3137 = vmatpush.bf16.msra.mxu0 0
        %3138 = vmatpush.bf16.msra.mxu0 0
        %3139 = vmatpush.bf16.msra.mxu0 0
        %3140 = vmatpush.bf16.msra.mxu0 %v3125
        %3141 = vmatpush.bf16.msra.mxu0 %v3124
        %3142 = vmatpush.bf16.msra.mxu0 %v3123
        %3143 = vmatpush.bf16.msra.mxu0 %v3122
        %3144 = vmatmul.bf16.gmra.mxu0 %v3131
        %v3145 = vpop.f32.mrf.mxu0
        %v3146 = vadd.f32 0.0, %v3145
        %v3147 = vpop.f32.mrf.mxu0
        %v3148 = vadd.f32 0.0, %v3147
        %3149 = vmatmul.bf16.gmra.mxu0 %v3134
        %v3150 = vpop.f32.mrf.mxu0
        %v3151 = vadd.f32 0.0, %v3150
        %v3152 = vpop.f32.mrf.mxu0
        %v3153 = vadd.f32 0.0, %v3152
        %3154 = vdwg.mxu0
        %v3155 = vmul.f32 %v3146, 0.25
        %v3156 = vmul.f32 %v3148, 0.25
        %v3157 = vmul.f32 %v3151, 0.25
        %v3158 = vmul.f32 %v3153, 0.25
        %v3159 = vpack.c.bf16 %v3155, %v3155
        %v3160 = vpack.c.bf16 %v3156, %v3156
        %v3161 = vpack.c.bf16 %v3157, %v3157
        %v3162 = vpack.c.bf16 %v3158, %v3158
        %v3163 = vld [vmem:[#allocation5] sm:$0xf]
        %v3164 = vld [vmem:[#allocation5 + $0x4] sm:$0xf]
        %v3169 = vunpack.c.l.b16 %v3159
        %v3170 = vunpack.c.l.b16 %v3160
        %v3171 = vunpack.c.l.b16 %v3161
        %v3172 = vunpack.c.l.b16 %v3162
        %v3173 = vpack.c.b16 %v3170, %v3169
        %v3174 = vpack.c.b16 %v3172, %v3171
        %v3177 = vunpack.c.l.b16 %v3163
        %v3178 = vunpack.c.l.b16 %v3164
        %v3179 = vpack.c.b16 %v3178, %v3177
        %v3181 = vsel %vm2912, %v3173, 0
        %v3184 = vsel %vm2912, %v3174, 0
        %v3187 = vsel %vm2912, %v3179, 0
        %3189 = vmatpush.bf16.xpose.msra.mxu0 0
        %3190 = vmatpush.bf16.xpose.msra.mxu0 0
        %3191 = vmatpush.bf16.xpose.msra.mxu0 0
        %3192 = vmatpush.bf16.xpose.msra.mxu0 0
        %3193 = vmatpush.bf16.xpose.msra.mxu0 0
        %3194 = vmatpush.bf16.xpose.msra.mxu0 0
        %3195 = vmatpush.bf16.xpose.msra.mxu0 0
        %3196 = vmatpush.bf16.xpose.msra.mxu0 %v3187
        %3197 = vmatmul.bf16.gmra.mxu0 %v3181
        %v3198 = vpop.f32.mrf.mxu0
        %v3199 = vadd.f32 0.0, %v3198
        %v3200 = vpop.f32.mrf.mxu0
        %v3201 = vadd.f32 0.0, %v3200
        %3202 = vmatmul.bf16.gmra.mxu0 %v3184
        %v3203 = vpop.f32.mrf.mxu0
        %v3204 = vadd.f32 0.0, %v3203
        %v3205 = vpop.f32.mrf.mxu0
        %v3206 = vadd.f32 0.0, %v3205
        %3207 = vdwg.mxu0
        %v3208 = vsel %vm2912, %v3199, -inf
        %3209 = vmax.xlane.f32.xlu0 %v3208
        %v3210 = vpop.xlane.xlu0 %3209
        %v3211 = vsel %vm2912, %v3201, -inf
        %3212 = vmax.xlane.f32.xlu0 %v3211
        %v3213 = vpop.xlane.xlu0 %3212
        %v3214 = vsel %vm2912, %v3204, -inf
        %3215 = vmax.xlane.f32.xlu0 %v3214
        %v3216 = vpop.xlane.xlu0 %3215
        %v3217 = vsel %vm2912, %v3206, -inf
        %3218 = vmax.xlane.f32.xlu0 %v3217
        %v3219 = vpop.xlane.xlu0 %3218
        %v3220 = vsub.f32 %v3199, %v3210
        %v3221 = vsub.f32 %v3201, %v3213
        %v3222 = vsub.f32 %v3204, %v3216
        %v3223 = vsub.f32 %v3206, %v3219
        %v3224 = vmul.f32 %v3220, 1.442695
        %v3225 = vpow.pop %v3224
        %v3226 = vmul.f32 %v3221, 1.442695
        %v3227 = vpow.pop %v3226
        %v3228 = vmul.f32 %v3222, 1.442695
        %v3229 = vpow.pop %v3228
        %v3230 = vmul.f32 %v3223, 1.442695
        %v3231 = vpow.pop %v3230
        %v3232 = vsel %vm2912, %v3225, 0.0
        %3233 = vadd.xlane.f32.xlu0 %v3232
        %v3234 = vpop.xlane.xlu0 %3233
        %v3235 = vsel %vm2912, %v3227, 0.0
        %3236 = vadd.xlane.f32.xlu0 %v3235
        %v3237 = vpop.xlane.xlu0 %3236
        %v3238 = vsel %vm2912, %v3229, 0.0
        %3239 = vadd.xlane.f32.xlu0 %v3238
        %v3240 = vpop.xlane.xlu0 %3239
        %v3241 = vsel %vm2912, %v3231, 0.0
        %3242 = vadd.xlane.f32.xlu0 %v3241
        %v3243 = vpop.xlane.xlu0 %3242
        %v3244 = vrcp.pop %v3234
        %v3245 = vrcp.pop %v3237
        %v3246 = vrcp.pop %v3240
        %v3247 = vrcp.pop %v3243
        %v3248 = vmul.f32 %v3225, %v3244
        %v3249 = vmul.f32 %v3227, %v3245
        %v3250 = vmul.f32 %v3229, %v3246
        %v3251 = vmul.f32 %v3231, %v3247
        %v3252 = vpack.c.bf16 %v3249, %v3248
        %v3253 = vpack.c.bf16 %v3251, %v3250
        %v3254 = vld [vmem:[#allocation6] sm:$0xf]
        %v3255 = vld [vmem:[#allocation6 + $0x4] sm:$0xf]
        %v3258 = vunpack.c.l.b16 %v3254
        %v3259 = vunpack.c.l.b16 %v3255
        %v3260 = vpack.c.b16 %v3259, %v3258
        %v3263 = vsel %vm2912, %v3252, 0
        %v3266 = vsel %vm2912, %v3253, 0
        %3268 = vmatpush.bf16.msra.mxu0 0
        %3269 = vmatpush.bf16.msra.mxu0 0
        %3270 = vmatpush.bf16.msra.mxu0 0
        %3271 = vmatpush.bf16.msra.mxu0 0
        %3272 = vmatpush.bf16.msra.mxu0 0
        %3273 = vmatpush.bf16.msra.mxu0 0
        %3274 = vmatpush.bf16.msra.mxu0 0
        %3275 = vmatpush.bf16.msra.mxu0 %v3260
        %3276 = vmatmul.bf16.gmra.mxu0 %v3263
        %v3277 = vpop.f32.mrf.mxu0
        %v3278 = vadd.f32 0.0, %v3277
        %v3279 = vpop.f32.mrf.mxu0
        %v3280 = vadd.f32 0.0, %v3279
        %3281 = vmatmul.bf16.gmra.mxu0 %v3266
        %v3282 = vpop.f32.mrf.mxu0
        %v3283 = vadd.f32 0.0, %v3282
        %v3284 = vpop.f32.mrf.mxu0
        %v3285 = vadd.f32 0.0, %v3284
        %3286 = vdwg.mxu0
        %v3287 = vpack.c.bf16 %v3278, %v3278
        %v3288 = vpack.c.bf16 %v3280, %v3280
        %v3289 = vpack.c.bf16 %v3283, %v3283
        %v3290 = vpack.c.bf16 %v3285, %v3285
        %3291 = vrot.lane.b32.xlu0 %v3173, 112
        %v3292 = vpop.permute.xlu0 %3291
        %3293 = vrot.lane.b32.xlu0 %v3174, 112
        %v3294 = vpop.permute.xlu0 %3293
        %3295 = vrot.lane.b32.xlu0 %v3179, 112
        %v3296 = vpop.permute.xlu0 %3295
        %v3298 = vsel %vm2912, %v3292, 0
        %v3301 = vsel %vm2912, %v3294, 0
        %v3304 = vsel %vm2912, %v3296, 0
        %3306 = vmatpush.bf16.xpose.msra.mxu0 0
        %3307 = vmatpush.bf16.xpose.msra.mxu0 0
        %3308 = vmatpush.bf16.xpose.msra.mxu0 0
        %3309 = vmatpush.bf16.xpose.msra.mxu0 0
        %3310 = vmatpush.bf16.xpose.msra.mxu0 0
        %3311 = vmatpush.bf16.xpose.msra.mxu0 0
        %3312 = vmatpush.bf16.xpose.msra.mxu0 0
        %3313 = vmatpush.bf16.xpose.msra.mxu0 %v3304
        %3314 = vmatmul.bf16.gmra.mxu0 %v3298
        %v3315 = vpop.f32.mrf.mxu0
        %v3316 = vadd.f32 0.0, %v3315
        %v3317 = vpop.f32.mrf.mxu0
        %v3318 = vadd.f32 0.0, %v3317
        %3319 = vmatmul.bf16.gmra.mxu0 %v3301
        %v3320 = vpop.f32.mrf.mxu0
        %v3321 = vadd.f32 0.0, %v3320
        %v3322 = vpop.f32.mrf.mxu0
        %v3323 = vadd.f32 0.0, %v3322
        %3324 = vdwg.mxu0
        %v3325 = vsel %vm2912, %v3316, -inf
        %3326 = vmax.xlane.f32.xlu0 %v3325
        %v3327 = vpop.xlane.xlu0 %3326
        %v3328 = vsel %vm2912, %v3318, -inf
        %3329 = vmax.xlane.f32.xlu0 %v3328
        %v3330 = vpop.xlane.xlu0 %3329
        %v3331 = vsel %vm2912, %v3321, -inf
        %3332 = vmax.xlane.f32.xlu0 %v3331
        %v3333 = vpop.xlane.xlu0 %3332
        %v3334 = vsel %vm2912, %v3323, -inf
        %3335 = vmax.xlane.f32.xlu0 %v3334
        %v3336 = vpop.xlane.xlu0 %3335
        %v3337 = vsub.f32 %v3316, %v3327
        %v3338 = vsub.f32 %v3318, %v3330
        %v3339 = vsub.f32 %v3321, %v3333
        %v3340 = vsub.f32 %v3323, %v3336
        %v3341 = vmul.f32 %v3337, 1.442695
        %v3342 = vpow.pop %v3341
        %v3343 = vmul.f32 %v3338, 1.442695
        %v3344 = vpow.pop %v3343
        %v3345 = vmul.f32 %v3339, 1.442695
        %v3346 = vpow.pop %v3345
        %v3347 = vmul.f32 %v3340, 1.442695
        %v3348 = vpow.pop %v3347
        %v3349 = vsel %vm2912, %v3342, 0.0
        %3350 = vadd.xlane.f32.xlu0 %v3349
        %v3351 = vpop.xlane.xlu0 %3350
        %v3352 = vsel %vm2912, %v3344, 0.0
        %3353 = vadd.xlane.f32.xlu0 %v3352
        %v3354 = vpop.xlane.xlu0 %3353
        %v3355 = vsel %vm2912, %v3346, 0.0
        %3356 = vadd.xlane.f32.xlu0 %v3355
        %v3357 = vpop.xlane.xlu0 %3356
        %v3358 = vsel %vm2912, %v3348, 0.0
        %3359 = vadd.xlane.f32.xlu0 %v3358
        %v3360 = vpop.xlane.xlu0 %3359
        %v3361 = vrcp.pop %v3351
        %v3362 = vrcp.pop %v3354
        %v3363 = vrcp.pop %v3357
        %v3364 = vrcp.pop %v3360
        %v3365 = vmul.f32 %v3342, %v3361
        %v3366 = vmul.f32 %v3344, %v3362
        %v3367 = vmul.f32 %v3346, %v3363
        %v3368 = vmul.f32 %v3348, %v3364
        %v3369 = vpack.c.bf16 %v3366, %v3365
        %v3370 = vpack.c.bf16 %v3368, %v3367
        %3371 = vrot.lane.b32.xlu0 %v3260, 112
        %v3372 = vpop.permute.xlu0 %3371
        %v3375 = vsel %vm2912, %v3369, 0
        %v3378 = vsel %vm2912, %v3370, 0
        %3380 = vmatpush.bf16.msra.mxu0 0
        %3381 = vmatpush.bf16.msra.mxu0 0
        %3382 = vmatpush.bf16.msra.mxu0 0
        %3383 = vmatpush.bf16.msra.mxu0 0
        %3384 = vmatpush.bf16.msra.mxu0 0
        %3385 = vmatpush.bf16.msra.mxu0 0
        %3386 = vmatpush.bf16.msra.mxu0 0
        %3387 = vmatpush.bf16.msra.mxu0 %v3372
        %3388 = vmatmul.bf16.gmra.mxu0 %v3375
        %v3389 = vpop.f32.mrf.mxu0
        %v3390 = vadd.f32 0.0, %v3389
        %v3391 = vpop.f32.mrf.mxu0
        %v3392 = vadd.f32 0.0, %v3391
        %3393 = vmatmul.bf16.gmra.mxu0 %v3378
        %v3394 = vpop.f32.mrf.mxu0
        %v3395 = vadd.f32 0.0, %v3394
        %v3396 = vpop.f32.mrf.mxu0
        %v3397 = vadd.f32 0.0, %v3396
        %3398 = vdwg.mxu0
        %v3399 = vpack.c.bf16 %v3390, %v3390
        %v3400 = vpack.c.bf16 %v3392, %v3392
        %v3401 = vpack.c.bf16 %v3395, %v3395
        %v3402 = vpack.c.bf16 %v3397, %v3397
        %3403 = vrot.lane.b32.xlu0 %v3173, 96
        %v3404 = vpop.permute.xlu0 %3403
        %3405 = vrot.lane.b32.xlu0 %v3174, 96
        %v3406 = vpop.permute.xlu0 %3405
        %3407 = vrot.lane.b32.xlu0 %v3179, 96
        %v3408 = vpop.permute.xlu0 %3407
        %v3410 = vsel %vm2912, %v3404, 0
        %v3413 = vsel %vm2912, %v3406, 0
        %v3416 = vsel %vm2912, %v3408, 0
        %3418 = vmatpush.bf16.xpose.msra.mxu0 0
        %3419 = vmatpush.bf16.xpose.msra.mxu0 0
        %3420 = vmatpush.bf16.xpose.msra.mxu0 0
        %3421 = vmatpush.bf16.xpose.msra.mxu0 0
        %3422 = vmatpush.bf16.xpose.msra.mxu0 0
        %3423 = vmatpush.bf16.xpose.msra.mxu0 0
        %3424 = vmatpush.bf16.xpose.msra.mxu0 0
        %3425 = vmatpush.bf16.xpose.msra.mxu0 %v3416
        %3426 = vmatmul.bf16.gmra.mxu0 %v3410
        %v3427 = vpop.f32.mrf.mxu0
        %v3428 = vadd.f32 0.0, %v3427
        %v3429 = vpop.f32.mrf.mxu0
        %v3430 = vadd.f32 0.0, %v3429
        %3431 = vmatmul.bf16.gmra.mxu0 %v3413
        %v3432 = vpop.f32.mrf.mxu0
        %v3433 = vadd.f32 0.0, %v3432
        %v3434 = vpop.f32.mrf.mxu0
        %v3435 = vadd.f32 0.0, %v3434
        %3436 = vdwg.mxu0
        %v3437 = vsel %vm2912, %v3428, -inf
        %3438 = vmax.xlane.f32.xlu0 %v3437
        %v3439 = vpop.xlane.xlu0 %3438
        %v3440 = vsel %vm2912, %v3430, -inf
        %3441 = vmax.xlane.f32.xlu0 %v3440
        %v3442 = vpop.xlane.xlu0 %3441
        %v3443 = vsel %vm2912, %v3433, -inf
        %3444 = vmax.xlane.f32.xlu0 %v3443
        %v3445 = vpop.xlane.xlu0 %3444
        %v3446 = vsel %vm2912, %v3435, -inf
        %3447 = vmax.xlane.f32.xlu0 %v3446
        %v3448 = vpop.xlane.xlu0 %3447
        %v3449 = vsub.f32 %v3428, %v3439
        %v3450 = vsub.f32 %v3430, %v3442
        %v3451 = vsub.f32 %v3433, %v3445
        %v3452 = vsub.f32 %v3435, %v3448
        %v3453 = vmul.f32 %v3449, 1.442695
        %v3454 = vpow.pop %v3453
        %v3455 = vmul.f32 %v3450, 1.442695
        %v3456 = vpow.pop %v3455
        %v3457 = vmul.f32 %v3451, 1.442695
        %v3458 = vpow.pop %v3457
        %v3459 = vmul.f32 %v3452, 1.442695
        %v3460 = vpow.pop %v3459
        %v3461 = vsel %vm2912, %v3454, 0.0
        %3462 = vadd.xlane.f32.xlu0 %v3461
        %v3463 = vpop.xlane.xlu0 %3462
        %v3464 = vsel %vm2912, %v3456, 0.0
        %3465 = vadd.xlane.f32.xlu0 %v3464
        %v3466 = vpop.xlane.xlu0 %3465
        %v3467 = vsel %vm2912, %v3458, 0.0
        %3468 = vadd.xlane.f32.xlu0 %v3467
        %v3469 = vpop.xlane.xlu0 %3468
        %v3470 = vsel %vm2912, %v3460, 0.0
        %3471 = vadd.xlane.f32.xlu0 %v3470
        %v3472 = vpop.xlane.xlu0 %3471
        %v3473 = vrcp.pop %v3463
        %v3474 = vrcp.pop %v3466
        %v3475 = vrcp.pop %v3469
        %v3476 = vrcp.pop %v3472
        %v3477 = vmul.f32 %v3454, %v3473
        %v3478 = vmul.f32 %v3456, %v3474
        %v3479 = vmul.f32 %v3458, %v3475
        %v3480 = vmul.f32 %v3460, %v3476
        %v3481 = vpack.c.bf16 %v3478, %v3477
        %v3482 = vpack.c.bf16 %v3480, %v3479
        %3483 = vrot.lane.b32.xlu0 %v3260, 96
        %v3484 = vpop.permute.xlu0 %3483
        %v3487 = vsel %vm2912, %v3481, 0
        %v3490 = vsel %vm2912, %v3482, 0
        %3492 = vmatpush.bf16.msra.mxu0 0
        %3493 = vmatpush.bf16.msra.mxu0 0
        %3494 = vmatpush.bf16.msra.mxu0 0
        %3495 = vmatpush.bf16.msra.mxu0 0
        %3496 = vmatpush.bf16.msra.mxu0 0
        %3497 = vmatpush.bf16.msra.mxu0 0
        %3498 = vmatpush.bf16.msra.mxu0 0
        %3499 = vmatpush.bf16.msra.mxu0 %v3484
        %3500 = vmatmul.bf16.gmra.mxu0 %v3487
        %v3501 = vpop.f32.mrf.mxu0
        %v3502 = vadd.f32 0.0, %v3501
        %v3503 = vpop.f32.mrf.mxu0
        %v3504 = vadd.f32 0.0, %v3503
        %3505 = vmatmul.bf16.gmra.mxu0 %v3490
        %v3506 = vpop.f32.mrf.mxu0
        %v3507 = vadd.f32 0.0, %v3506
        %v3508 = vpop.f32.mrf.mxu0
        %v3509 = vadd.f32 0.0, %v3508
        %3510 = vdwg.mxu0
        %v3511 = vpack.c.bf16 %v3502, %v3502
        %v3512 = vpack.c.bf16 %v3504, %v3504
        %v3513 = vpack.c.bf16 %v3507, %v3507
        %v3514 = vpack.c.bf16 %v3509, %v3509
        %3515 = vrot.lane.b32.xlu0 %v3173, 80
        %v3516 = vpop.permute.xlu0 %3515
        %3517 = vrot.lane.b32.xlu0 %v3174, 80
        %v3518 = vpop.permute.xlu0 %3517
        %3519 = vrot.lane.b32.xlu0 %v3179, 80
        %v3520 = vpop.permute.xlu0 %3519
        %v3522 = vsel %vm2912, %v3516, 0
        %v3525 = vsel %vm2912, %v3518, 0
        %v3528 = vsel %vm2912, %v3520, 0
        %3530 = vmatpush.bf16.xpose.msra.mxu0 0
        %3531 = vmatpush.bf16.xpose.msra.mxu0 0
        %3532 = vmatpush.bf16.xpose.msra.mxu0 0
        %3533 = vmatpush.bf16.xpose.msra.mxu0 0
        %3534 = vmatpush.bf16.xpose.msra.mxu0 0
        %3535 = vmatpush.bf16.xpose.msra.mxu0 0
        %3536 = vmatpush.bf16.xpose.msra.mxu0 0
        %3537 = vmatpush.bf16.xpose.msra.mxu0 %v3528
        %3538 = vmatmul.bf16.gmra.mxu0 %v3522
        %v3539 = vpop.f32.mrf.mxu0
        %v3540 = vadd.f32 0.0, %v3539
        %v3541 = vpop.f32.mrf.mxu0
        %v3542 = vadd.f32 0.0, %v3541
        %3543 = vmatmul.bf16.gmra.mxu0 %v3525
        %v3544 = vpop.f32.mrf.mxu0
        %v3545 = vadd.f32 0.0, %v3544
        %v3546 = vpop.f32.mrf.mxu0
        %v3547 = vadd.f32 0.0, %v3546
        %3548 = vdwg.mxu0
        %v3549 = vsel %vm2912, %v3540, -inf
        %3550 = vmax.xlane.f32.xlu0 %v3549
        %v3551 = vpop.xlane.xlu0 %3550
        %v3552 = vsel %vm2912, %v3542, -inf
        %3553 = vmax.xlane.f32.xlu0 %v3552
        %v3554 = vpop.xlane.xlu0 %3553
        %v3555 = vsel %vm2912, %v3545, -inf
        %3556 = vmax.xlane.f32.xlu0 %v3555
        %v3557 = vpop.xlane.xlu0 %3556
        %v3558 = vsel %vm2912, %v3547, -inf
        %3559 = vmax.xlane.f32.xlu0 %v3558
        %v3560 = vpop.xlane.xlu0 %3559
        %v3561 = vsub.f32 %v3540, %v3551
        %v3562 = vsub.f32 %v3542, %v3554
        %v3563 = vsub.f32 %v3545, %v3557
        %v3564 = vsub.f32 %v3547, %v3560
        %v3565 = vmul.f32 %v3561, 1.442695
        %v3566 = vpow.pop %v3565
        %v3567 = vmul.f32 %v3562, 1.442695
        %v3568 = vpow.pop %v3567
        %v3569 = vmul.f32 %v3563, 1.442695
        %v3570 = vpow.pop %v3569
        %v3571 = vmul.f32 %v3564, 1.442695
        %v3572 = vpow.pop %v3571
        %v3573 = vsel %vm2912, %v3566, 0.0
        %3574 = vadd.xlane.f32.xlu0 %v3573
        %v3575 = vpop.xlane.xlu0 %3574
        %v3576 = vsel %vm2912, %v3568, 0.0
        %3577 = vadd.xlane.f32.xlu0 %v3576
        %v3578 = vpop.xlane.xlu0 %3577
        %v3579 = vsel %vm2912, %v3570, 0.0
        %3580 = vadd.xlane.f32.xlu0 %v3579
        %v3581 = vpop.xlane.xlu0 %3580
        %v3582 = vsel %vm2912, %v3572, 0.0
        %3583 = vadd.xlane.f32.xlu0 %v3582
        %v3584 = vpop.xlane.xlu0 %3583
        %v3585 = vrcp.pop %v3575
        %v3586 = vrcp.pop %v3578
        %v3587 = vrcp.pop %v3581
        %v3588 = vrcp.pop %v3584
        %v3589 = vmul.f32 %v3566, %v3585
        %v3590 = vmul.f32 %v3568, %v3586
        %v3591 = vmul.f32 %v3570, %v3587
        %v3592 = vmul.f32 %v3572, %v3588
        %v3593 = vpack.c.bf16 %v3590, %v3589
        %v3594 = vpack.c.bf16 %v3592, %v3591
        %3595 = vrot.lane.b32.xlu0 %v3260, 80
        %v3596 = vpop.permute.xlu0 %3595
        %v3599 = vsel %vm2912, %v3593, 0
        %v3602 = vsel %vm2912, %v3594, 0
        %3604 = vmatpush.bf16.msra.mxu0 0
        %3605 = vmatpush.bf16.msra.mxu0 0
        %3606 = vmatpush.bf16.msra.mxu0 0
        %3607 = vmatpush.bf16.msra.mxu0 0
        %3608 = vmatpush.bf16.msra.mxu0 0
        %3609 = vmatpush.bf16.msra.mxu0 0
        %3610 = vmatpush.bf16.msra.mxu0 0
        %3611 = vmatpush.bf16.msra.mxu0 %v3596
        %3612 = vmatmul.bf16.gmra.mxu0 %v3599
        %v3613 = vpop.f32.mrf.mxu0
        %v3614 = vadd.f32 0.0, %v3613
        %v3615 = vpop.f32.mrf.mxu0
        %v3616 = vadd.f32 0.0, %v3615
        %3617 = vmatmul.bf16.gmra.mxu0 %v3602
        %v3618 = vpop.f32.mrf.mxu0
        %v3619 = vadd.f32 0.0, %v3618
        %v3620 = vpop.f32.mrf.mxu0
        %v3621 = vadd.f32 0.0, %v3620
        %3622 = vdwg.mxu0
        %v3623 = vpack.c.bf16 %v3614, %v3614
        %v3624 = vpack.c.bf16 %v3616, %v3616
        %v3625 = vpack.c.bf16 %v3619, %v3619
        %v3626 = vpack.c.bf16 %v3621, %v3621
        %v3631 = vunpack.c.l.b16 %v3287
        %v3632 = vunpack.c.l.b16 %v3288
        %v3633 = vunpack.c.l.b16 %v3289
        %v3634 = vunpack.c.l.b16 %v3290
        %v3635 = vpack.c.b16 %v3632, %v3631
        %v3636 = vpack.c.b16 %v3634, %v3633
        %v3641 = vunpack.c.l.b16 %v3399
        %v3642 = vunpack.c.l.b16 %v3400
        %v3643 = vunpack.c.l.b16 %v3401
        %v3644 = vunpack.c.l.b16 %v3402
        %v3645 = vpack.c.b16 %v3642, %v3641
        %v3646 = vpack.c.b16 %v3644, %v3643
        %3647 = vrot.lane.b32.xlu0 %v3645, 16
        %v3648 = vpop.permute.xlu0 %3647
        %3649 = vrot.lane.b32.xlu0 %v3646, 16
        %v3650 = vpop.permute.xlu0 %3649
        %v3655 = vunpack.c.l.b16 %v3511
        %v3656 = vunpack.c.l.b16 %v3512
        %v3657 = vunpack.c.l.b16 %v3513
        %v3658 = vunpack.c.l.b16 %v3514
        %v3659 = vpack.c.b16 %v3656, %v3655
        %v3660 = vpack.c.b16 %v3658, %v3657
        %3661 = vrot.lane.b32.xlu0 %v3659, 32
        %v3662 = vpop.permute.xlu0 %3661
        %3663 = vrot.lane.b32.xlu0 %v3660, 32
        %v3664 = vpop.permute.xlu0 %3663
        %v3669 = vunpack.c.l.b16 %v3623
        %v3670 = vunpack.c.l.b16 %v3624
        %v3671 = vunpack.c.l.b16 %v3625
        %v3672 = vunpack.c.l.b16 %v3626
        %v3673 = vpack.c.b16 %v3670, %v3669
        %v3674 = vpack.c.b16 %v3672, %v3671
        %3675 = vrot.lane.b32.xlu0 %v3673, 48
        %v3676 = vpop.permute.xlu0 %3675
        %3677 = vrot.lane.b32.xlu0 %v3674, 48
        %v3678 = vpop.permute.xlu0 %3677
        %v3681 = vsel %vm2912, %v3635, %v3648
        %v3684 = vsel %vm2912, %v3636, %v3650
        %v3686 = vsel %vm2919, %v3681, %v3662
        %v3688 = vsel %vm2919, %v3684, %v3664
        %v3690 = vsel %vm2924, %v3686, %v3676
        %v3692 = vsel %vm2924, %v3688, %v3678
        %v3693 = vld [vmem:[#allocation27] sm:$0xf]
        %v3694 = vld [vmem:[#allocation27 + $0x4] sm:$0xf]
        %v3695 = vld [vmem:[#allocation27 + $0x8] sm:$0xf]
        %v3696 = vld [vmem:[#allocation27 + $0xc] sm:$0xf]
        %v3697 = vld [vmem:[#allocation27 + $0x10] sm:$0xf]
        %v3698 = vld [vmem:[#allocation27 + $0x14] sm:$0xf]
        %v3699 = vld [vmem:[#allocation27 + $0x18] sm:$0xf]
        %v3700 = vld [vmem:[#allocation27 + $0x1c] sm:$0xf]
        %v3701 = vld [vmem:[%s37] sm:$0x1]
        %v3703 = vperm.slane %v3701, 0
        %v3713 = vunpack.c.l.b16 %v3693
        %v3714 = vunpack.c.l.b16 %v3694
        %v3715 = vunpack.c.l.b16 %v3695
        %v3716 = vunpack.c.l.b16 %v3696
        %v3717 = vunpack.c.l.b16 %v3697
        %v3718 = vunpack.c.l.b16 %v3698
        %v3719 = vunpack.c.l.b16 %v3699
        %v3720 = vunpack.c.l.b16 %v3700
        %v3721 = vpack.c.b16 %v3714, %v3713
        %v3722 = vpack.c.b16 %v3716, %v3715
        %v3723 = vpack.c.b16 %v3718, %v3717
        %v3724 = vpack.c.b16 %v3720, %v3719
        %v3729 = vsel %vm1827, %v3690, 0
        %v3731 = vsel %vm1827, %v3692, 0
        %3733 = vmatpush.bf16.msra.mxu0 0
        %3734 = vmatpush.bf16.msra.mxu0 0
        %3735 = vmatpush.bf16.msra.mxu0 0
        %3736 = vmatpush.bf16.msra.mxu0 0
        %3737 = vmatpush.bf16.msra.mxu0 %v3724
        %3738 = vmatpush.bf16.msra.mxu0 %v3723
        %3739 = vmatpush.bf16.msra.mxu0 %v3722
        %3740 = vmatpush.bf16.msra.mxu0 %v3721
        %3741 = vmatmul.bf16.gmra.mxu0 %v3729
        %v3742 = vpop.f32.mrf.mxu0
        %v3743 = vadd.f32 %v3703, %v3742
        %v3744 = vpop.f32.mrf.mxu0
        %v3745 = vadd.f32 %v3703, %v3744
        %3746 = vmatmul.bf16.gmra.mxu0 %v3731
        %v3747 = vpop.f32.mrf.mxu0
        %v3748 = vadd.f32 %v3703, %v3747
        %v3749 = vpop.f32.mrf.mxu0
        %v3750 = vadd.f32 %v3703, %v3749
        %3751 = vdwg.mxu0
        %v3752 = vadd.f32 %v3743, %v2988
        %v3753 = vadd.f32 %v3745, %v2989
        %v3754 = vadd.f32 %v3748, %v2990
        %v3755 = vadd.f32 %v3750, %v2991
        %v3756 = vld [vmem:[%s39] sm:$0x1]
        %v3757 = vld [vmem:[%s41] sm:$0x1]
        %v3758 = vsel %vm1827, %v3752, 0.0
        %3759 = vadd.xlane.f32.xlu0 %v3758
        %v3760 = vpop.xlane.xlu0 %3759
        %v3761 = vsel %vm1827, %v3753, 0.0
        %3762 = vadd.xlane.f32.xlu0 %v3761
        %v3763 = vpop.xlane.xlu0 %3762
        %v3764 = vsel %vm1827, %v3754, 0.0
        %3765 = vadd.xlane.f32.xlu0 %v3764
        %v3766 = vpop.xlane.xlu0 %3765
        %v3767 = vsel %vm1827, %v3755, 0.0
        %3768 = vadd.xlane.f32.xlu0 %v3767
        %v3769 = vpop.xlane.xlu0 %3768
        %v3770 = vmul.f32 %v3760, %v1846
        %v3771 = vmul.f32 %v3763, %v1846
        %v3772 = vmul.f32 %v3766, %v1846
        %v3773 = vmul.f32 %v3769, %v1846
        %v3774 = vsub.f32 %v3752, %v3770
        %v3775 = vsub.f32 %v3753, %v3771
        %v3776 = vsub.f32 %v3754, %v3772
        %v3777 = vsub.f32 %v3755, %v3773
        %v3778 = vmul.f32 %v3774, %v3774
        %v3779 = vmul.f32 %v3775, %v3775
        %v3780 = vmul.f32 %v3776, %v3776
        %v3781 = vmul.f32 %v3777, %v3777
        %v3782 = vsel %vm1827, %v3778, 0.0
        %3783 = vadd.xlane.f32.xlu0 %v3782
        %v3784 = vpop.xlane.xlu0 %3783
        %v3785 = vsel %vm1827, %v3779, 0.0
        %3786 = vadd.xlane.f32.xlu0 %v3785
        %v3787 = vpop.xlane.xlu0 %3786
        %v3788 = vsel %vm1827, %v3780, 0.0
        %3789 = vadd.xlane.f32.xlu0 %v3788
        %v3790 = vpop.xlane.xlu0 %3789
        %v3791 = vsel %vm1827, %v3781, 0.0
        %3792 = vadd.xlane.f32.xlu0 %v3791
        %v3793 = vpop.xlane.xlu0 %3792
        %v3794 = vmul.f32 %v3784, %v1846
        %v3795 = vmul.f32 %v3787, %v1846
        %v3796 = vmul.f32 %v3790, %v1846
        %v3797 = vmul.f32 %v3793, %v1846
        %v3798 = vadd.f32 %v3794, 1e-05
        %v3799 = vadd.f32 %v3795, 1e-05
        %v3800 = vadd.f32 %v3796, 1e-05
        %v3801 = vadd.f32 %v3797, 1e-05
        %v3802 = vrsqrt.pop %v3798
        %v3803 = vmul.f32 %v3802, %v3798
        %v3804 = vmul.f32 %v3803, %v3802
        %v3805 = vmul.f32 0.5, %v3804
        %v3806 = vsub.f32 1.5, %v3805
        %v3807 = vmul.f32 %v3802, %v3806
        %vm3808 = vweird.f32 %v3798
        %vm3809 = vweird.f32 %v3802
        %vm3810 = vmor %vm3808, %vm3809
        %v3811 = vsel %vm3810, %v3802, %v3807
        %v3812 = vrsqrt.pop %v3799
        %v3813 = vmul.f32 %v3812, %v3799
        %v3814 = vmul.f32 %v3813, %v3812
        %v3815 = vmul.f32 0.5, %v3814
        %v3816 = vsub.f32 1.5, %v3815
        %v3817 = vmul.f32 %v3812, %v3816
        %vm3818 = vweird.f32 %v3799
        %vm3819 = vweird.f32 %v3812
        %vm3820 = vmor %vm3818, %vm3819
        %v3821 = vsel %vm3820, %v3812, %v3817
        %v3822 = vrsqrt.pop %v3800
        %v3823 = vmul.f32 %v3822, %v3800
        %v3824 = vmul.f32 %v3823, %v3822
        %v3825 = vmul.f32 0.5, %v3824
        %v3826 = vsub.f32 1.5, %v3825
        %v3827 = vmul.f32 %v3822, %v3826
        %vm3828 = vweird.f32 %v3800
        %vm3829 = vweird.f32 %v3822
        %vm3830 = vmor %vm3828, %vm3829
        %v3831 = vsel %vm3830, %v3822, %v3827
        %v3832 = vrsqrt.pop %v3801
        %v3833 = vmul.f32 %v3832, %v3801
        %v3834 = vmul.f32 %v3833, %v3832
        %v3835 = vmul.f32 0.5, %v3834
        %v3836 = vsub.f32 1.5, %v3835
        %v3837 = vmul.f32 %v3832, %v3836
        %vm3838 = vweird.f32 %v3801
        %vm3839 = vweird.f32 %v3832
        %vm3840 = vmor %vm3838, %vm3839
        %v3841 = vsel %vm3840, %v3832, %v3837
        %v3843 = vperm.slane %v3756, 0
        %v3845 = vmul.f32 %v3811, %v3843
        %v3846 = vmul.f32 %v3821, %v3843
        %v3847 = vmul.f32 %v3831, %v3843
        %v3848 = vmul.f32 %v3841, %v3843
        %v3849 = vmul.f32 %v3774, %v3845
        %v3850 = vmul.f32 %v3775, %v3846
        %v3851 = vmul.f32 %v3776, %v3847
        %v3852 = vmul.f32 %v3777, %v3848
        %v3854 = vperm.slane %v3757, 0
        %v3856 = vadd.f32 %v3849, %v3854
        %v3857 = vadd.f32 %v3850, %v3854
        %v3858 = vadd.f32 %v3851, %v3854
        %v3859 = vadd.f32 %v3852, %v3854
        %v3860 = vpack.c.bf16 %v3857, %v3856
        %v3861 = vpack.c.bf16 %v3859, %v3858
        %v3862 = vld [vmem:[%s43] sm:$0xff]
        %v3863 = vld [vmem:[%s43 + $0x8] sm:$0xff]
        %v3864 = vld [vmem:[%s43 + $0x10] sm:$0xff]
        %v3865 = vld [vmem:[%s43 + $0x18] sm:$0xff]
        %v3866 = vld [vmem:[%s43 + $0x20] sm:$0xff]
        %v3867 = vld [vmem:[%s43 + $0x28] sm:$0xff]
        %v3868 = vld [vmem:[%s43 + $0x30] sm:$0xff]
        %v3869 = vld [vmem:[%s43 + $0x38] sm:$0xff]
        %v3870 = vld [vmem:[%s45] sm:$0x3]
        %v3872 = vperm.slane %v3870, 0
        %v3873 = vperm.slane %v3870, 1
        %v3884 = vunpack.c.l.b16 %v3862
        %v3885 = vunpack.c.h.b16 %v3862
        %v3886 = vunpack.c.l.b16 %v3863
        %v3887 = vunpack.c.h.b16 %v3863
        %v3888 = vunpack.c.l.b16 %v3864
        %v3889 = vunpack.c.h.b16 %v3864
        %v3890 = vunpack.c.l.b16 %v3865
        %v3891 = vunpack.c.h.b16 %v3865
        %v3892 = vunpack.c.l.b16 %v3866
        %v3893 = vunpack.c.h.b16 %v3866
        %v3894 = vunpack.c.l.b16 %v3867
        %v3895 = vunpack.c.h.b16 %v3867
        %v3896 = vunpack.c.l.b16 %v3868
        %v3897 = vunpack.c.h.b16 %v3868
        %v3898 = vunpack.c.l.b16 %v3869
        %v3899 = vunpack.c.h.b16 %v3869
        %v3900 = vpack.c.b16 %v3886, %v3884
        %v3901 = vpack.c.b16 %v3887, %v3885
        %v3902 = vpack.c.b16 %v3890, %v3888
        %v3903 = vpack.c.b16 %v3891, %v3889
        %v3904 = vpack.c.b16 %v3894, %v3892
        %v3905 = vpack.c.b16 %v3895, %v3893
        %v3906 = vpack.c.b16 %v3898, %v3896
        %v3907 = vpack.c.b16 %v3899, %v3897
        %v3917 = vsel %vm1827, %v3860, 0
        %v3920 = vsel %vm1827, %v3861, 0
        %3922 = vmatpush.bf16.msra.mxu0 0
        %3923 = vmatpush.bf16.msra.mxu0 0
        %3924 = vmatpush.bf16.msra.mxu0 0
        %3925 = vmatpush.bf16.msra.mxu0 0
        %3926 = vmatpush.bf16.msra.mxu0 %v3906
        %3927 = vmatpush.bf16.msra.mxu0 %v3904
        %3928 = vmatpush.bf16.msra.mxu0 %v3902
        %3929 = vmatpush.bf16.msra.mxu0 %v3900
        %3930 = vmatmul.bf16.gmra.mxu0 %v3917
        %v3931 = vpop.f32.mrf.mxu0
        %v3932 = vadd.f32 %v3872, %v3931
        %v3933 = vpop.f32.mrf.mxu0
        %v3934 = vadd.f32 %v3872, %v3933
        %3935 = vmatmul.bf16.gmra.mxu0 %v3920
        %v3936 = vpop.f32.mrf.mxu0
        %v3937 = vadd.f32 %v3872, %v3936
        %v3938 = vpop.f32.mrf.mxu0
        %v3939 = vadd.f32 %v3872, %v3938
        %3940 = vdwg.mxu0
        %3941 = vmatpush.bf16.msra.mxu0 0
        %3942 = vmatpush.bf16.msra.mxu0 0
        %3943 = vmatpush.bf16.msra.mxu0 0
        %3944 = vmatpush.bf16.msra.mxu0 0
        %3945 = vmatpush.bf16.msra.mxu0 %v3907
        %3946 = vmatpush.bf16.msra.mxu0 %v3905
        %3947 = vmatpush.bf16.msra.mxu0 %v3903
        %3948 = vmatpush.bf16.msra.mxu0 %v3901
        %3949 = vmatmul.bf16.gmra.mxu0 %v3917
        %v3950 = vpop.f32.mrf.mxu0
        %v3951 = vadd.f32 %v3873, %v3950
        %v3952 = vpop.f32.mrf.mxu0
        %v3953 = vadd.f32 %v3873, %v3952
        %3954 = vmatmul.bf16.gmra.mxu0 %v3920
        %v3955 = vpop.f32.mrf.mxu0
        %v3956 = vadd.f32 %v3873, %v3955
        %v3957 = vpop.f32.mrf.mxu0
        %v3958 = vadd.f32 %v3873, %v3957
        %3959 = vdwg.mxu0
        %v3960 = vld [vmem:[#allocation28] sm:$0xff]
        %v3961 = vld [vmem:[#allocation28 + $0x8] sm:$0xff]
        %v3962 = vld [vmem:[#allocation28 + $0x10] sm:$0xff]
        %v3963 = vld [vmem:[#allocation28 + $0x18] sm:$0xff]
        %v3964 = vld [vmem:[#allocation28 + $0x20] sm:$0xff]
        %v3965 = vld [vmem:[#allocation28 + $0x28] sm:$0xff]
        %v3966 = vld [vmem:[#allocation28 + $0x30] sm:$0xff]
        %v3967 = vld [vmem:[#allocation28 + $0x38] sm:$0xff]
        %v3968 = vld [vmem:[%s49] sm:$0x3]
        %v3970 = vperm.slane %v3968, 0
        %v3971 = vperm.slane %v3968, 1
        %v3982 = vunpack.c.l.b16 %v3960
        %v3983 = vunpack.c.h.b16 %v3960
        %v3984 = vunpack.c.l.b16 %v3961
        %v3985 = vunpack.c.h.b16 %v3961
        %v3986 = vunpack.c.l.b16 %v3962
        %v3987 = vunpack.c.h.b16 %v3962
        %v3988 = vunpack.c.l.b16 %v3963
        %v3989 = vunpack.c.h.b16 %v3963
        %v3990 = vunpack.c.l.b16 %v3964
        %v3991 = vunpack.c.h.b16 %v3964
        %v3992 = vunpack.c.l.b16 %v3965
        %v3993 = vunpack.c.h.b16 %v3965
        %v3994 = vunpack.c.l.b16 %v3966
        %v3995 = vunpack.c.h.b16 %v3966
        %v3996 = vunpack.c.l.b16 %v3967
        %v3997 = vunpack.c.h.b16 %v3967
        %v3998 = vpack.c.b16 %v3984, %v3982
        %v3999 = vpack.c.b16 %v3985, %v3983
        %v4000 = vpack.c.b16 %v3988, %v3986
        %v4001 = vpack.c.b16 %v3989, %v3987
        %v4002 = vpack.c.b16 %v3992, %v3990
        %v4003 = vpack.c.b16 %v3993, %v3991
        %v4004 = vpack.c.b16 %v3996, %v3994
        %v4005 = vpack.c.b16 %v3997, %v3995
        %4014 = vmatpush.bf16.msra.mxu0 0
        %4015 = vmatpush.bf16.msra.mxu0 0
        %4016 = vmatpush.bf16.msra.mxu0 0
        %4017 = vmatpush.bf16.msra.mxu0 0
        %4018 = vmatpush.bf16.msra.mxu0 %v4004
        %4019 = vmatpush.bf16.msra.mxu0 %v4002
        %4020 = vmatpush.bf16.msra.mxu0 %v4000
        %4021 = vmatpush.bf16.msra.mxu0 %v3998
        %4022 = vmatmul.bf16.gmra.mxu0 %v3917
        %v4023 = vpop.f32.mrf.mxu0
        %v4024 = vadd.f32 %v3970, %v4023
        %v4025 = vpop.f32.mrf.mxu0
        %v4026 = vadd.f32 %v3970, %v4025
        %4027 = vmatmul.bf16.gmra.mxu0 %v3920
        %v4028 = vpop.f32.mrf.mxu0
        %v4029 = vadd.f32 %v3970, %v4028
        %v4030 = vpop.f32.mrf.mxu0
        %v4031 = vadd.f32 %v3970, %v4030
        %4032 = vdwg.mxu0
        %4033 = vmatpush.bf16.msra.mxu0 0
        %4034 = vmatpush.bf16.msra.mxu0 0
        %4035 = vmatpush.bf16.msra.mxu0 0
        %4036 = vmatpush.bf16.msra.mxu0 0
        %4037 = vmatpush.bf16.msra.mxu0 %v4005
        %4038 = vmatpush.bf16.msra.mxu0 %v4003
        %4039 = vmatpush.bf16.msra.mxu0 %v4001
        %4040 = vmatpush.bf16.msra.mxu0 %v3999
        %4041 = vmatmul.bf16.gmra.mxu0 %v3917
        %v4042 = vpop.f32.mrf.mxu0
        %v4043 = vadd.f32 %v3971, %v4042
        %v4044 = vpop.f32.mrf.mxu0
        %v4045 = vadd.f32 %v3971, %v4044
        %4046 = vmatmul.bf16.gmra.mxu0 %v3920
        %v4047 = vpop.f32.mrf.mxu0
        %v4048 = vadd.f32 %v3971, %v4047
        %v4049 = vpop.f32.mrf.mxu0
        %v4050 = vadd.f32 %v3971, %v4049
        %4051 = vdwg.mxu0
        %v4052 = vmul.f32 %v4024, 0.5
        %v4053 = vmul.f32 %v4043, 0.5
        %v4054 = vmul.f32 %v4026, 0.5
        %v4055 = vmul.f32 %v4045, 0.5
        %v4056 = vmul.f32 %v4029, 0.5
        %v4057 = vmul.f32 %v4048, 0.5
        %v4058 = vmul.f32 %v4031, 0.5
        %v4059 = vmul.f32 %v4050, 0.5
        %v4060 = vmul.f32 %v4024, %v4024
        %v4061 = vmul.f32 %v4043, %v4043
        %v4062 = vmul.f32 %v4026, %v4026
        %v4063 = vmul.f32 %v4045, %v4045
        %v4064 = vmul.f32 %v4029, %v4029
        %v4065 = vmul.f32 %v4048, %v4048
        %v4066 = vmul.f32 %v4031, %v4031
        %v4067 = vmul.f32 %v4050, %v4050
        %v4068 = vmul.f32 %v4060, %v4024
        %v4069 = vmul.f32 %v4061, %v4043
        %v4070 = vmul.f32 %v4062, %v4026
        %v4071 = vmul.f32 %v4063, %v4045
        %v4072 = vmul.f32 %v4064, %v4029
        %v4073 = vmul.f32 %v4065, %v4048
        %v4074 = vmul.f32 %v4066, %v4031
        %v4075 = vmul.f32 %v4067, %v4050
        %v4076 = vmul.f32 %v4068, 0.044715
        %v4077 = vmul.f32 %v4069, 0.044715
        %v4078 = vmul.f32 %v4070, 0.044715
        %v4079 = vmul.f32 %v4071, 0.044715
        %v4080 = vmul.f32 %v4072, 0.044715
        %v4081 = vmul.f32 %v4073, 0.044715
        %v4082 = vmul.f32 %v4074, 0.044715
        %v4083 = vmul.f32 %v4075, 0.044715
        %v4084 = vadd.f32 %v4024, %v4076
        %v4085 = vadd.f32 %v4043, %v4077
        %v4086 = vadd.f32 %v4026, %v4078
        %v4087 = vadd.f32 %v4045, %v4079
        %v4088 = vadd.f32 %v4029, %v4080
        %v4089 = vadd.f32 %v4048, %v4081
        %v4090 = vadd.f32 %v4031, %v4082
        %v4091 = vadd.f32 %v4050, %v4083
        %v4092 = vmul.f32 %v4084, 0.7978846
        %v4093 = vmul.f32 %v4085, 0.7978846
        %v4094 = vmul.f32 %v4086, 0.7978846
        %v4095 = vmul.f32 %v4087, 0.7978846
        %v4096 = vmul.f32 %v4088, 0.7978846
        %v4097 = vmul.f32 %v4089, 0.7978846
        %v4098 = vmul.f32 %v4090, 0.7978846
        %v4099 = vmul.f32 %v4091, 0.7978846
        %v4100 = vtanh.pop %v4092
        %v4101 = vtanh.pop %v4093
        %v4102 = vtanh.pop %v4094
        %v4103 = vtanh.pop %v4095
        %v4104 = vtanh.pop %v4096
        %v4105 = vtanh.pop %v4097
        %v4106 = vtanh.pop %v4098
        %v4107 = vtanh.pop %v4099
        %v4108 = vadd.f32 %v4100, 1.0
        %v4109 = vadd.f32 %v4101, 1.0
        %v4110 = vadd.f32 %v4102, 1.0
        %v4111 = vadd.f32 %v4103, 1.0
        %v4112 = vadd.f32 %v4104, 1.0
        %v4113 = vadd.f32 %v4105, 1.0
        %v4114 = vadd.f32 %v4106, 1.0
        %v4115 = vadd.f32 %v4107, 1.0
        %v4116 = vmul.f32 %v4052, %v4108
        %v4117 = vmul.f32 %v4053, %v4109
        %v4118 = vmul.f32 %v4054, %v4110
        %v4119 = vmul.f32 %v4055, %v4111
        %v4120 = vmul.f32 %v4056, %v4112
        %v4121 = vmul.f32 %v4057, %v4113
        %v4122 = vmul.f32 %v4058, %v4114
        %v4123 = vmul.f32 %v4059, %v4115
        %v4124 = vmul.f32 %v3932, %v4116
        %v4125 = vmul.f32 %v3951, %v4117
        %v4126 = vmul.f32 %v3934, %v4118
        %v4127 = vmul.f32 %v3953, %v4119
        %v4128 = vmul.f32 %v3937, %v4120
        %v4129 = vmul.f32 %v3956, %v4121
        %v4130 = vmul.f32 %v3939, %v4122
        %v4131 = vmul.f32 %v3958, %v4123
        %v4132 = vpack.c.bf16 %v4126, %v4124
        %v4133 = vpack.c.bf16 %v4127, %v4125
        %v4134 = vpack.c.bf16 %v4130, %v4128
        %v4135 = vpack.c.bf16 %v4131, %v4129
        %v4136 = vld [vmem:[%s51] sm:$0xf]
        %v4137 = vld [vmem:[%s51 + $0x4] sm:$0xf]
        %v4138 = vld [vmem:[%s51 + $0x8] sm:$0xf]
        %v4139 = vld [vmem:[%s51 + $0xc] sm:$0xf]
        %v4140 = vld [vmem:[%s51 + $0x10] sm:$0xf]
        %v4141 = vld [vmem:[%s51 + $0x14] sm:$0xf]
        %v4142 = vld [vmem:[%s51 + $0x18] sm:$0xf]
        %v4143 = vld [vmem:[%s51 + $0x1c] sm:$0xf]
        %v4144 = vld [vmem:[%s51 + $0x20] sm:$0xf]
        %v4145 = vld [vmem:[%s51 + $0x24] sm:$0xf]
        %v4146 = vld [vmem:[%s51 + $0x28] sm:$0xf]
        %v4147 = vld [vmem:[%s51 + $0x2c] sm:$0xf]
        %v4148 = vld [vmem:[%s51 + $0x30] sm:$0xf]
        %v4149 = vld [vmem:[%s51 + $0x34] sm:$0xf]
        %v4150 = vld [vmem:[%s51 + $0x38] sm:$0xf]
        %v4151 = vld [vmem:[%s51 + $0x3c] sm:$0xf]
        %v4152 = vld [vmem:[%s51 + $0x40] sm:$0xf]
        %v4153 = vld [vmem:[%s51 + $0x44] sm:$0xf]
        %v4154 = vld [vmem:[%s51 + $0x48] sm:$0xf]
        %v4155 = vld [vmem:[%s51 + $0x4c] sm:$0xf]
        %v4156 = vld [vmem:[%s51 + $0x50] sm:$0xf]
        %v4157 = vld [vmem:[%s51 + $0x54] sm:$0xf]
        %v4158 = vld [vmem:[%s51 + $0x58] sm:$0xf]
        %v4159 = vld [vmem:[%s51 + $0x5c] sm:$0xf]
        %v4160 = vld [vmem:[%s51 + $0x60] sm:$0xf]
        %v4161 = vld [vmem:[%s51 + $0x64] sm:$0xf]
        %v4162 = vld [vmem:[%s51 + $0x68] sm:$0xf]
        %v4163 = vld [vmem:[%s51 + $0x6c] sm:$0xf]
        %v4164 = vld [vmem:[%s51 + $0x70] sm:$0xf]
        %v4165 = vld [vmem:[%s51 + $0x74] sm:$0xf]
        %v4166 = vld [vmem:[%s51 + $0x78] sm:$0xf]
        %v4167 = vld [vmem:[%s51 + $0x7c] sm:$0xf]
        %v4168 = vld [vmem:[%s53] sm:$0x1]
        %v4170 = vperm.slane %v4168, 0
        %v4204 = vunpack.c.l.b16 %v4136
        %v4205 = vunpack.c.l.b16 %v4137
        %v4206 = vunpack.c.l.b16 %v4138
        %v4207 = vunpack.c.l.b16 %v4139
        %v4208 = vunpack.c.l.b16 %v4140
        %v4209 = vunpack.c.l.b16 %v4141
        %v4210 = vunpack.c.l.b16 %v4142
        %v4211 = vunpack.c.l.b16 %v4143
        %v4212 = vunpack.c.l.b16 %v4144
        %v4213 = vunpack.c.l.b16 %v4145
        %v4214 = vunpack.c.l.b16 %v4146
        %v4215 = vunpack.c.l.b16 %v4147
        %v4216 = vunpack.c.l.b16 %v4148
        %v4217 = vunpack.c.l.b16 %v4149
        %v4218 = vunpack.c.l.b16 %v4150
        %v4219 = vunpack.c.l.b16 %v4151
        %v4220 = vunpack.c.l.b16 %v4152
        %v4221 = vunpack.c.l.b16 %v4153
        %v4222 = vunpack.c.l.b16 %v4154
        %v4223 = vunpack.c.l.b16 %v4155
        %v4224 = vunpack.c.l.b16 %v4156
        %v4225 = vunpack.c.l.b16 %v4157
        %v4226 = vunpack.c.l.b16 %v4158
        %v4227 = vunpack.c.l.b16 %v4159
        %v4228 = vunpack.c.l.b16 %v4160
        %v4229 = vunpack.c.l.b16 %v4161
        %v4230 = vunpack.c.l.b16 %v4162
        %v4231 = vunpack.c.l.b16 %v4163
        %v4232 = vunpack.c.l.b16 %v4164
        %v4233 = vunpack.c.l.b16 %v4165
        %v4234 = vunpack.c.l.b16 %v4166
        %v4235 = vunpack.c.l.b16 %v4167
        %v4236 = vpack.c.b16 %v4205, %v4204
        %v4237 = vpack.c.b16 %v4207, %v4206
        %v4238 = vpack.c.b16 %v4209, %v4208
        %v4239 = vpack.c.b16 %v4211, %v4210
        %v4240 = vpack.c.b16 %v4213, %v4212
        %v4241 = vpack.c.b16 %v4215, %v4214
        %v4242 = vpack.c.b16 %v4217, %v4216
        %v4243 = vpack.c.b16 %v4219, %v4218
        %v4244 = vpack.c.b16 %v4221, %v4220
        %v4245 = vpack.c.b16 %v4223, %v4222
        %v4246 = vpack.c.b16 %v4225, %v4224
        %v4247 = vpack.c.b16 %v4227, %v4226
        %v4248 = vpack.c.b16 %v4229, %v4228
        %v4249 = vpack.c.b16 %v4231, %v4230
        %v4250 = vpack.c.b16 %v4233, %v4232
        %v4251 = vpack.c.b16 %v4235, %v4234
        %4268 = vmatpush.bf16.msra.mxu0 %v4243
        %4269 = vmatpush.bf16.msra.mxu0 %v4242
        %4270 = vmatpush.bf16.msra.mxu0 %v4241
        %4271 = vmatpush.bf16.msra.mxu0 %v4240
        %4272 = vmatpush.bf16.msra.mxu0 %v4239
        %4273 = vmatpush.bf16.msra.mxu0 %v4238
        %4274 = vmatpush.bf16.msra.mxu0 %v4237
        %4275 = vmatpush.bf16.msra.mxu0 %v4236
        %4276 = vmatmul.bf16.gmra.mxu0 %v4132
        %v4277 = vpop.f32.mrf.mxu0
        %v4278 = vadd.f32 %v4170, %v4277
        %v4279 = vpop.f32.mrf.mxu0
        %v4280 = vadd.f32 %v4170, %v4279
        %4281 = vmatmul.bf16.gmra.mxu0 %v4134
        %v4282 = vpop.f32.mrf.mxu0
        %v4283 = vadd.f32 %v4170, %v4282
        %v4284 = vpop.f32.mrf.mxu0
        %v4285 = vadd.f32 %v4170, %v4284
        %4286 = vdwg.mxu0
        %4287 = vmatpush.bf16.msra.mxu0 %v4251
        %4288 = vmatpush.bf16.msra.mxu0 %v4250
        %4289 = vmatpush.bf16.msra.mxu0 %v4249
        %4290 = vmatpush.bf16.msra.mxu0 %v4248
        %4291 = vmatpush.bf16.msra.mxu0 %v4247
        %4292 = vmatpush.bf16.msra.mxu0 %v4246
        %4293 = vmatpush.bf16.msra.mxu0 %v4245
        %4294 = vmatpush.bf16.msra.mxu0 %v4244
        %4295 = vmatmul.bf16.gmra.mxu0 %v4133
        %v4296 = vpop.f32.mrf.mxu0
        %v4297 = vadd.f32 %v4278, %v4296
        %v4298 = vpop.f32.mrf.mxu0
        %v4299 = vadd.f32 %v4280, %v4298
        %4300 = vmatmul.bf16.gmra.mxu0 %v4135
        %v4301 = vpop.f32.mrf.mxu0
        %v4302 = vadd.f32 %v4283, %v4301
        %v4303 = vpop.f32.mrf.mxu0
        %v4304 = vadd.f32 %v4285, %v4303
        %4305 = vdwg.mxu0
        %v4306 = vadd.f32 %v4297, %v3752
        %v4307 = vadd.f32 %v4299, %v3753
        %v4308 = vadd.f32 %v4302, %v3754
        %v4309 = vadd.f32 %v4304, %v3755
        %v4310 = vpack.c.bf16 %v4307, %v4306
        %v4311 = vpack.c.bf16 %v4309, %v4308
        %v4312 = vld [vmem:[#allocation30] sm:$0xf]
        %v4313 = vld [vmem:[#allocation30 + $0x4] sm:$0xf]
        %v4314 = vld [vmem:[#allocation30 + $0x8] sm:$0xf]
        %v4315 = vld [vmem:[#allocation30 + $0xc] sm:$0xf]
        %v4316 = vld [vmem:[#allocation30 + $0x10] sm:$0xf]
        %v4317 = vld [vmem:[#allocation30 + $0x14] sm:$0xf]
        %v4318 = vld [vmem:[#allocation30 + $0x18] sm:$0xf]
        %v4319 = vld [vmem:[#allocation30 + $0x1c] sm:$0xf]
        %v4320 = vld [vmem:[%s57] sm:$0x1]
        %v4322 = vperm.slane %v4320, 0
        %v4332 = vunpack.c.l.b16 %v4312
        %v4333 = vunpack.c.l.b16 %v4313
        %v4334 = vunpack.c.l.b16 %v4314
        %v4335 = vunpack.c.l.b16 %v4315
        %v4336 = vunpack.c.l.b16 %v4316
        %v4337 = vunpack.c.l.b16 %v4317
        %v4338 = vunpack.c.l.b16 %v4318
        %v4339 = vunpack.c.l.b16 %v4319
        %v4340 = vpack.c.b16 %v4333, %v4332
        %v4341 = vpack.c.b16 %v4335, %v4334
        %v4342 = vpack.c.b16 %v4337, %v4336
        %v4343 = vpack.c.b16 %v4339, %v4338
        %v4349 = vsel %vm1827, %v4310, 0
        %v4352 = vsel %vm1827, %v4311, 0
        %4354 = vmatpush.bf16.msra.mxu0 0
        %4355 = vmatpush.bf16.msra.mxu0 0
        %4356 = vmatpush.bf16.msra.mxu0 0
        %4357 = vmatpush.bf16.msra.mxu0 0
        %4358 = vmatpush.bf16.msra.mxu0 %v4343
        %4359 = vmatpush.bf16.msra.mxu0 %v4342
        %4360 = vmatpush.bf16.msra.mxu0 %v4341
        %4361 = vmatpush.bf16.msra.mxu0 %v4340
        %4362 = vmatmul.bf16.gmra.mxu0 %v4349
        %v4363 = vpop.f32.mrf.mxu0
        %v4364 = vadd.f32 %v4322, %v4363
        %v4365 = vpop.f32.mrf.mxu0
        %v4366 = vadd.f32 %v4322, %v4365
        %4367 = vmatmul.bf16.gmra.mxu0 %v4352
        %v4368 = vpop.f32.mrf.mxu0
        %v4369 = vadd.f32 %v4322, %v4368
        %v4370 = vpop.f32.mrf.mxu0
        %v4371 = vadd.f32 %v4322, %v4370
        %4372 = vdwg.mxu0
        %v4373 = vadd.f32 %v4364, %v1821
        %v4374 = vadd.f32 %v4366, %v1822
        %v4375 = vadd.f32 %v4369, %v1823
        %v4376 = vadd.f32 %v4371, %v1824
        %4377 = vst.msk [vmem:[%s1200] sm:$0xff] %vm1827, %v4373
        %4378 = vst.msk [vmem:[%s1200 + $0x8] sm:$0xff] %vm1827, %v4374
        %4379 = vst.msk [vmem:[%s1200 + $0x10] sm:$0xff] %vm1827, %v4375
        %4380 = vst.msk [vmem:[%s1200 + $0x18] sm:$0xff] %vm1827, %v4376
        %s4381 = sand.u32 %s731, 1
        %s4382 = scalar_lea.sflag [#allocation9], %s4381
        %s4383 = sand.u32 %s731, 1
        %s4384 = smul.addr %s4383, 32
        %s4385 = scalar_lea.vmem [#allocation31], %s4384
        // Predicated region
        $region229: #{tpu_custom_call.1} parent=135 // pred_check
          %p4386 = pneg %p741
        $region230: #{tpu_custom_call.1} parent=135 // pred_check_branch
          %4388 = sbr.rel (%p4386) target = $region232
        $region231: #{tpu_custom_call.1} parent=135 // pred_region
          %s4389 = smul.u32 4, %s90
          %4391 = vsyncadd %s4382, 0
          %s4392 = smul.addr %s89, 8
          %s4393 = sadd.s32 %s4389, %s4392
          %s4394 = smul.addr %s4393, 8
          %s4395 = scalar_lea.hbm %s59, %s4394
          %s4396 = sshll.u32 %s4385, 4
          %s4397 = int_to_ptr.vmem [resolvable:$true] %s4396
          %s4398 = sshll.u32 %s4395, 4
          %s4399 = int_to_ptr.hbm [resolvable:$true] %s4398
          %4404 = dma.vmem_to_hbm [thread:$0]  %s4397, 512, %s4399, %s4382, 128, 128, 8
        $region232: #{tpu_custom_call.1} parent=135 // pred_fallthru
          _
      $region136: #{tpu_custom_call.1} parent=5 // pred_fallthru
        _
      %p4405 = scmp.le.s32.totalorder 2, %s80
      // Predicated region
      $region233: #{tpu_custom_call.1} parent=5 // pred_check
        %p4406 = pneg %p4405
      $region234: #{tpu_custom_call.1} parent=5 // pred_check_branch
        %4408 = sbr.rel (%p4406) target = $region236
      $region235: #{tpu_custom_call.1} parent=5 // pred_region
        %s4409 = ssub.s32 %s80, 2
        // Predicated region
        $region237: #{tpu_custom_call.1} parent=235 // pred_check
          %p4410 = pneg %p747
        $region238: #{tpu_custom_call.1} parent=235 // pred_check_branch
          %4412 = sbr.rel (%p4410) target = $region240
        $region239: #{tpu_custom_call.1} parent=235 // pred_region
          %s4413 = sand.u32 %s732, 1
          %s4414 = scalar_lea.sflag [#allocation9], %s4413
          %s4415 = sand.u32 %s732, 1
          %s4416 = smul.addr %s4415, 32
          %s4417 = scalar_lea.vmem [#allocation31], %s4416
          %4419 = dma.done %s4414, 512
        $region240: #{tpu_custom_call.1} parent=235 // pred_fallthru
          _
      $region236: #{tpu_custom_call.1} parent=5 // pred_fallthru
        _
    $region6: #{tpu_custom_call.1} parent=1 // loop_footer
      %s84 = sadd.s32 1, %s80
    $region7: #{tpu_custom_call.1} parent=1 // loop_footer_branch
      %79 = sbr.rel target = $region3
    $region8: #{tpu_custom_call.1} parent=1 // loop_exit
      _
    %4420 = vsyncpa [#allocation8], 1
    %s4421 = scalar_lea.sflag [#allocation8], 1
    %4422 = vsyncpa %s4421, 1
    %4423 = vsyncpa [#allocation11], 1
    %s4424 = scalar_lea.sflag [#allocation11], 1
    %4425 = vsyncpa %s4424, 1
    %4426 = vsyncpa [#allocation14], 1
    %4427 = vsyncpa [#allocation17], 1
    %4428 = vsyncpa [#allocation20], 1
    %4429 = vsyncpa [#allocation23], 1
    %4430 = vsyncpa [#allocation26], 1
    %4431 = vsyncpa [#allocation29], 1
    %4432 = vsyncpa [#allocation9], 1
    %s4433 = scalar_lea.sflag [#allocation9], 1
    %4434 = vsyncpa %s4433, 1

</llo_original>
